<compile_context>
chip_gen: v5e
topology: v5e:2x2
jax: 0.10.0
libtpu: 0.0.40
codegen_flags: <defaults>
</compile_context>

<pallas_src>
import jax
import jax.numpy as jnp
import numpy as np
from jax.experimental import pallas as pl
from jax.experimental.pallas import tpu as pltpu


# ----------------------------- Pallas kernel ------------------------------


def _conv3x3_im2col(act_hwc, w_ref, pad_ref, H, W, C):
    """3x3 'same' conv (padding=1, no bias) as ONE deep-K matmul.

    act_hwc: (H, W, C) f32 value (NHWC)
    w_ref:   (9*C, Cout) weight ref, K ordered as (kh*3 + kw)*C + cin
    pad_ref: (H+2, W+2, C) VMEM scratch; border already zero, interior is
             overwritten here.
    """
    pad_ref[1:H + 1, 1:W + 1, :] = act_hwc
    cols = []
    for kh in range(3):
        for kw in range(3):
            cols.append(pad_ref[kh:kh + H, kw:kw + W, :].reshape(H * W, C))
    slab = jnp.concatenate(cols, axis=-1)                 # (H*W, 9*C) im2col
    return jnp.dot(slab, w_ref[...], preferred_element_type=jnp.float32)


def crop_type_final_kernel(x_ref, cts_ref,
                           w1_ref, b1_ref,
                           w2_ref, b2_ref,
                           w3_ref, b3_ref,
                           wf_ref, bf_ref,
                           o_ref,
                           pad_ref):
    # One image per grid step ("parallel" axis -> one per TensorCore on v7x).
    _, H, W, Cin = x_ref.shape
    Cmid = w1_ref.shape[1]
    M = H * W

    # Zero the padded scratch once per step (only the interior is ever written
    # afterwards, so the border stays zero for both 3x3 convs).
    pad_ref[...] = jnp.zeros(pad_ref.shape, jnp.float32)

    x2d = x_ref[0].reshape(M, Cin)                        # (H*W, Cin)

    # conv1: 1x1 conv (BN scale folded into weights) + shift + ReLU
    out1 = jnp.maximum(
        jnp.dot(x2d, w1_ref[...], preferred_element_type=jnp.float32)
        + b1_ref[...], 0.0)                               # (H*W, Cmid)

    # seq[0]: 3x3 conv (+ folded BN) + ReLU
    h = _conv3x3_im2col(out1.reshape(H, W, Cmid), w2_ref, pad_ref, H, W, Cmid)
    h = jnp.maximum(h + b2_ref[...], 0.0)

    # seq[1:]: 3x3 conv (+ folded BN), no activation
    h = _conv3x3_im2col(h.reshape(H, W, Cmid), w3_ref, pad_ref, H, W, Cmid)
    h = h + b3_ref[...]

    # residual with out1, then final ReLU
    res = jnp.maximum(h + out1, 0.0)                      # (H*W, Cmid)

    # final 1x1 conv, computed transposed so the output store is lane-dense:
    # (Ccls, Cmid) . (H*W, Cmid)^T -> (Ccls, H*W)
    out_t = jax.lax.dot_general(
        wf_ref[...], res,
        dimension_numbers=(((1,), (1,)), ((), ())),
        preferred_element_type=jnp.float32)

    # + conv bias + crop_type_star (already channel-major, lane-dense)
    o_ref[0] = out_t + bf_ref[...] + cts_ref[0]


# ------------------------------ JAX wrapper -------------------------------


@jax.jit
def crop_type_final(x_nchw, crop_type_star_nchw, params):
    """NCHW in / NCHW out. NHWC activations inside; channel-major output slab."""
    N, Cin, H, W = x_nchw.shape
    Cmid = params["w1"].shape[1]
    Ccls = params["wf"].shape[0]

    x = jnp.transpose(x_nchw, (0, 2, 3, 1)).astype(jnp.float32)        # NHWC
    cts = crop_type_star_nchw.reshape(N, Ccls, H * W).astype(jnp.float32)

    def wspec(shape):
        return pl.BlockSpec(shape, lambda n: (0,) * len(shape))

    out = pl.pallas_call(
        crop_type_final_kernel,
        out_shape=jax.ShapeDtypeStruct((N, Ccls, H * W), jnp.float32),
        grid=(N,),
        in_specs=[
            pl.BlockSpec((1, H, W, Cin), lambda n: (n, 0, 0, 0)),
            pl.BlockSpec((1, Ccls, H * W), lambda n: (n, 0, 0)),
            wspec((Cin, Cmid)), wspec((1, Cmid)),
            wspec((9 * Cmid, Cmid)), wspec((1, Cmid)),
            wspec((9 * Cmid, Cmid)), wspec((1, Cmid)),
            wspec((Ccls, Cmid)), wspec((Ccls, 1)),
        ],
        out_specs=pl.BlockSpec((1, Ccls, H * W), lambda n: (n, 0, 0)),
        scratch_shapes=[pltpu.VMEM((H + 2, W + 2, Cmid), jnp.float32)],
        compiler_params=pltpu.CompilerParams(
            dimension_semantics=("parallel",)),
    )(x, cts,
      params["w1"], params["b1"],
      params["w2"], params["b2"],
      params["w3"], params["b3"],
      params["wf"], params["bf"])

    # (N, Ccls, H*W) -> (N, Ccls, H, W): pure reshape, no transpose needed.
    return out.reshape(N, Ccls, H, W)


# --------------------- deterministic parameter setup ----------------------


def make_params(key, in_channels, out_channels, out_classes, eps=1e-5):
    """Synthetic, deterministic parameters (no checkpoint loading)."""
    ks = jax.random.split(key, 8)

    def bn_params(k, c):
        k0, k1, k2, k3 = jax.random.split(k, 4)
        gamma = jax.random.uniform(k0, (c,), minval=0.5, maxval=1.5)
        beta = 0.1 * jax.random.normal(k1, (c,))
        mean = 0.1 * jax.random.normal(k2, (c,))
        var = jax.random.uniform(k3, (c,), minval=0.5, maxval=1.5)
        return gamma, beta, mean, var

    # PyTorch-layout weights (OIHW)
    conv1_w = 0.2 * jax.random.normal(ks[0], (out_channels, in_channels, 1, 1))
    conv2_w = 0.1 * jax.random.normal(ks[1], (out_channels, out_channels, 3, 3))
    conv3_w = 0.1 * jax.random.normal(ks[2], (out_channels, out_channels, 3, 3))
    convf_w = 0.2 * jax.random.normal(ks[3], (out_classes, out_channels, 1, 1))
    convf_b = 0.1 * jax.random.normal(ks[4], (out_classes,))
    bn1 = bn_params(ks[5], out_channels)
    bn2 = bn_params(ks[6], out_channels)
    bn3 = bn_params(ks[7], out_channels)

    def fold_bn(gamma, beta, mean, var):
        scale = gamma / jnp.sqrt(var + eps)
        shift = beta - mean * scale
        return scale, shift

    s1, b1 = fold_bn(*bn1)
    s2, b2 = fold_bn(*bn2)
    s3, b3 = fold_bn(*bn3)

    # Fold BN scales into conv weights (free at runtime); keep shifts as biases.
    w1 = conv1_w[:, :, 0, 0].T * s1[None, :]                          # (Cin, Cmid)
    w2 = (jnp.transpose(conv2_w, (2, 3, 1, 0)) * s2).reshape(
        9 * out_channels, out_channels)                               # (9*Cmid, Cmid)
    w3 = (jnp.transpose(conv3_w, (2, 3, 1, 0)) * s3).reshape(
        9 * out_channels, out_channels)
    wf = convf_w[:, :, 0, 0]                                          # (Ccls, Cmid)

    kernel_params = {
        "w1": jnp.asarray(w1, jnp.float32),
        "b1": jnp.asarray(b1[None, :], jnp.float32),
        "w2": jnp.asarray(w2, jnp.float32),
        "b2": jnp.asarray(b2[None, :], jnp.float32),
        "w3": jnp.asarray(w3, jnp.float32),
        "b3": jnp.asarray(b3[None, :], jnp.float32),
        "wf": jnp.asarray(wf, jnp.float32),
        "bf": jnp.asarray(convf_b[:, None], jnp.float32),
    }
    torch_params = {
        "conv1_w": conv1_w, "conv2_w": conv2_w, "conv3_w": conv3_w,
        "convf_w": convf_w, "convf_b": convf_b,
        "bn1": bn1, "bn2": bn2, "bn3": bn3,
    }
    return kernel_params, torch_params


def torch_style_reference(x, cts, tp, eps=1e-5):
    """Independent NCHW reference using lax.conv (PyTorch semantics)."""
    def conv(h, w, padding):
        return jax.lax.conv_general_dilated(
            h, w, window_strides=(1, 1),
            padding=[(padding, padding), (padding, padding)],
            dimension_numbers=("NCHW", "OIHW", "NCHW"))

    def bn(h, stats):
        g, b, m, v = stats
        inv = g / jnp.sqrt(v + eps)
        return (h - m[None, :, None, None]) * inv[None, :, None, None] \
            + b[None, :, None, None]

    out1 = jax.nn.relu(bn(conv(x, tp["conv1_w"], 0), tp["bn1"]))
    h = jax.nn.relu(bn(conv(out1, tp["conv2_w"], 1), tp["bn2"]))
    h = bn(conv(h, tp["conv3_w"], 1), tp["bn3"])
    h = h + out1
    h = jax.nn.relu(h)
    h = conv(h, tp["convf_w"], 0) + tp["convf_b"][None, :, None, None]
    return h + cts


# ---------------------------------- main -----------------------------------

if __name__ == "__main__":
    N, Cin, H, W = 2, 4, 16, 16
    Cmid = 32          # out_channels
    Ccls = 4           # out_classes

    key = jax.random.PRNGKey(0)
    kx, kc, kp = jax.random.split(key, 3)

    x = jax.random.normal(kx, (N, Cin, H, W), dtype=jnp.float32)
    crop_type_star = jax.random.normal(kc, (N, Ccls, H, W), dtype=jnp.float32)

    kernel_params, torch_params = make_params(kp, Cin, Cmid, Ccls)

    out = crop_type_final(x, crop_type_star, kernel_params)
    out = jax.block_until_ready(out)

    ref = torch_style_reference(x, crop_type_star, torch_params)
    np.testing.assert_allclose(np.asarray(out), np.asarray(ref),
                               rtol=1e-3, atol=1e-3)

    print("KERNEL_OK")
</pallas_src>

<mosaic_0001>
module attributes {stable_mosaic.version = 11 : i64} {
  func.func @crop_type_final_kernel(%arg0: i32, %arg1: memref<1x16x16x4xf32, #tpu.memory_space<vmem>>, %arg2: memref<1x4x256xf32, #tpu.memory_space<vmem>>, %arg3: memref<4x32xf32, #tpu.memory_space<vmem>>, %arg4: memref<1x32xf32, #tpu.memory_space<vmem>>, %arg5: memref<288x32xf32, #tpu.memory_space<vmem>>, %arg6: memref<1x32xf32, #tpu.memory_space<vmem>>, %arg7: memref<288x32xf32, #tpu.memory_space<vmem>>, %arg8: memref<1x32xf32, #tpu.memory_space<vmem>>, %arg9: memref<4x32xf32, #tpu.memory_space<vmem>>, %arg10: memref<4x1xf32, #tpu.memory_space<vmem>>, %arg11: memref<1x4x256xf32, #tpu.memory_space<vmem>>, %arg12: memref<18x18x32xf32, #tpu.memory_space<vmem>>) attributes {dimension_semantics = [#tpu.dimension_semantics<parallel>], iteration_bounds = array<i64: 2>, scalar_prefetch = 0 : i64, scratch_operands = 1 : i64, tpu.core_type = #tpu.core_type<tc>, window_params = [{transform_indices = @transform_0, window_bounds = array<i64: 1, 16, 16, 4>}, {transform_indices = @transform_1, window_bounds = array<i64: 1, 4, 256>}, {pipeline_mode = #tpu.pipeline_mode<synchronous>, transform_indices = @transform_2, window_bounds = array<i64: 4, 32>}, {pipeline_mode = #tpu.pipeline_mode<synchronous>, transform_indices = @transform_3, window_bounds = array<i64: 1, 32>}, {pipeline_mode = #tpu.pipeline_mode<synchronous>, transform_indices = @transform_4, window_bounds = array<i64: 288, 32>}, {pipeline_mode = #tpu.pipeline_mode<synchronous>, transform_indices = @transform_5, window_bounds = array<i64: 1, 32>}, {pipeline_mode = #tpu.pipeline_mode<synchronous>, transform_indices = @transform_6, window_bounds = array<i64: 288, 32>}, {pipeline_mode = #tpu.pipeline_mode<synchronous>, transform_indices = @transform_7, window_bounds = array<i64: 1, 32>}, {pipeline_mode = #tpu.pipeline_mode<synchronous>, transform_indices = @transform_8, window_bounds = array<i64: 4, 32>}, {pipeline_mode = #tpu.pipeline_mode<synchronous>, transform_indices = @transform_9, window_bounds = array<i64: 4, 1>}, {transform_indices = @transform_10, window_bounds = array<i64: 1, 4, 256>}]} {
    %cst = arith.constant 0.000000e+00 : f32
    %0 = vector.broadcast %cst : f32 to vector<18x18x32xf32>
    %c0 = arith.constant 0 : index
    %c0_0 = arith.constant 0 : index
    %c0_1 = arith.constant 0 : index
    %1 = vector.load %arg12[%c0, %c0_0, %c0_1] : memref<18x18x32xf32, #tpu.memory_space<vmem>>, vector<18x18x32xf32>
    tpu.vector_store %arg12[%c0, %c0_0, %c0_1], %0 {strides = array<i32>} : memref<18x18x32xf32, #tpu.memory_space<vmem>>, vector<18x18x32xf32>,
    %c0_2 = arith.constant 0 : index
    %c0_3 = arith.constant 0 : index
    %c0_4 = arith.constant 0 : index
    %c0_5 = arith.constant 0 : index
    %2 = vector.load %arg1[%c0_2, %c0_3, %c0_4, %c0_5] : memref<1x16x16x4xf32, #tpu.memory_space<vmem>>, vector<1x16x16x4xf32>
    %3 = vector.shape_cast %2 : vector<1x16x16x4xf32> to vector<16x16x4xf32>
    %4 = vector.shape_cast %3 : vector<16x16x4xf32> to vector<256x4xf32>
    %c0_6 = arith.constant 0 : index
    %c0_7 = arith.constant 0 : index
    %5 = vector.load %arg3[%c0_6, %c0_7] : memref<4x32xf32, #tpu.memory_space<vmem>>, vector<4x32xf32>
    %cst_8 = arith.constant dense<0.000000e+00> : vector<256x32xf32>
    %6 = tpu.matmul %4, %5, %cst_8 {dimension_numbers = #tpu.dot_dimension_numbers<[1], [0], [0], [1], [0, 0, 1, 1], [], []>} : vector<256x4xf32>, vector<4x32xf32>, vector<256x32xf32> -> vector<256x32xf32>
    %c0_9 = arith.constant 0 : index
    %c0_10 = arith.constant 0 : index
    %7 = vector.load %arg4[%c0_9, %c0_10] : memref<1x32xf32, #tpu.memory_space<vmem>>, vector<1x32xf32>
    %8 = vector.broadcast %7 : vector<1x32xf32> to vector<256x32xf32>
    %9 = arith.addf %6, %8 : vector<256x32xf32>
    %cst_11 = arith.constant 0.000000e+00 : f32
    %10 = vector.broadcast %cst_11 : f32 to vector<256x32xf32>
    %11 = arith.maximumf %9, %10 : vector<256x32xf32>
    %12 = vector.shape_cast %11 : vector<256x32xf32> to vector<16x16x32xf32>
    %c1 = arith.constant 1 : index
    %c1_12 = arith.constant 1 : index
    %c0_13 = arith.constant 0 : index
    %13 = vector.load %arg12[%c1, %c1_12, %c0_13] : memref<18x18x32xf32, #tpu.memory_space<vmem>>, vector<16x16x32xf32>
    tpu.vector_store %arg12[%c1, %c1_12, %c0_13], %12 {strides = array<i32>} : memref<18x18x32xf32, #tpu.memory_space<vmem>>, vector<16x16x32xf32>,
    %c0_14 = arith.constant 0 : index
    %c0_15 = arith.constant 0 : index
    %c0_16 = arith.constant 0 : index
    %14 = vector.load %arg12[%c0_14, %c0_15, %c0_16] : memref<18x18x32xf32, #tpu.memory_space<vmem>>, vector<16x16x32xf32>
    %15 = vector.shape_cast %14 : vector<16x16x32xf32> to vector<256x32xf32>
    %c0_17 = arith.constant 0 : index
    %c1_18 = arith.constant 1 : index
    %c0_19 = arith.constant 0 : index
    %16 = vector.load %arg12[%c0_17, %c1_18, %c0_19] : memref<18x18x32xf32, #tpu.memory_space<vmem>>, vector<16x16x32xf32>
    %17 = vector.shape_cast %16 : vector<16x16x32xf32> to vector<256x32xf32>
    %c0_20 = arith.constant 0 : index
    %c2 = arith.constant 2 : index
    %c0_21 = arith.constant 0 : index
    %18 = vector.load %arg12[%c0_20, %c2, %c0_21] : memref<18x18x32xf32, #tpu.memory_space<vmem>>, vector<16x16x32xf32>
    %19 = vector.shape_cast %18 : vector<16x16x32xf32> to vector<256x32xf32>
    %c1_22 = arith.constant 1 : index
    %c0_23 = arith.constant 0 : index
    %c0_24 = arith.constant 0 : index
    %20 = vector.load %arg12[%c1_22, %c0_23, %c0_24] : memref<18x18x32xf32, #tpu.memory_space<vmem>>, vector<16x16x32xf32>
    %21 = vector.shape_cast %20 : vector<16x16x32xf32> to vector<256x32xf32>
    %c1_25 = arith.constant 1 : index
    %c1_26 = arith.constant 1 : index
    %c0_27 = arith.constant 0 : index
    %22 = vector.load %arg12[%c1_25, %c1_26, %c0_27] : memref<18x18x32xf32, #tpu.memory_space<vmem>>, vector<16x16x32xf32>
    %23 = vector.shape_cast %22 : vector<16x16x32xf32> to vector<256x32xf32>
    %c1_28 = arith.constant 1 : index
    %c2_29 = arith.constant 2 : index
    %c0_30 = arith.constant 0 : index
    %24 = vector.load %arg12[%c1_28, %c2_29, %c0_30] : memref<18x18x32xf32, #tpu.memory_space<vmem>>, vector<16x16x32xf32>
    %25 = vector.shape_cast %24 : vector<16x16x32xf32> to vector<256x32xf32>
    %c2_31 = arith.constant 2 : index
    %c0_32 = arith.constant 0 : index
    %c0_33 = arith.constant 0 : index
    %26 = vector.load %arg12[%c2_31, %c0_32, %c0_33] : memref<18x18x32xf32, #tpu.memory_space<vmem>>, vector<16x16x32xf32>
    %27 = vector.shape_cast %26 : vector<16x16x32xf32> to vector<256x32xf32>
    %c2_34 = arith.constant 2 : index
    %c1_35 = arith.constant 1 : index
    %c0_36 = arith.constant 0 : index
    %28 = vector.load %arg12[%c2_34, %c1_35, %c0_36] : memref<18x18x32xf32, #tpu.memory_space<vmem>>, vector<16x16x32xf32>
    %29 = vector.shape_cast %28 : vector<16x16x32xf32> to vector<256x32xf32>
    %c2_37 = arith.constant 2 : index
    %c2_38 = arith.constant 2 : index
    %c0_39 = arith.constant 0 : index
    %30 = vector.load %arg12[%c2_37, %c2_38, %c0_39] : memref<18x18x32xf32, #tpu.memory_space<vmem>>, vector<16x16x32xf32>
    %31 = vector.shape_cast %30 : vector<16x16x32xf32> to vector<256x32xf32>
    %32 = tpu.concatenate %15, %17, %19, %21, %23, %25, %27, %29, %31 in 1 : vector<256x32xf32>, vector<256x32xf32>, vector<256x32xf32>, vector<256x32xf32>, vector<256x32xf32>, vector<256x32xf32>, vector<256x32xf32>, vector<256x32xf32>, vector<256x32xf32> -> vector<256x288xf32>
    %c0_40 = arith.constant 0 : index
    %c0_41 = arith.constant 0 : index
    %33 = vector.load %arg5[%c0_40, %c0_41] : memref<288x32xf32, #tpu.memory_space<vmem>>, vector<288x32xf32>
    %cst_42 = arith.constant dense<0.000000e+00> : vector<256x32xf32>
    %34 = tpu.matmul %32, %33, %cst_42 {dimension_numbers = #tpu.dot_dimension_numbers<[1], [0], [0], [1], [0, 0, 1, 1], [], []>} : vector<256x288xf32>, vector<288x32xf32>, vector<256x32xf32> -> vector<256x32xf32>
    %c0_43 = arith.constant 0 : index
    %c0_44 = arith.constant 0 : index
    %35 = vector.load %arg6[%c0_43, %c0_44] : memref<1x32xf32, #tpu.memory_space<vmem>>, vector<1x32xf32>
    %36 = vector.broadcast %35 : vector<1x32xf32> to vector<256x32xf32>
    %37 = arith.addf %34, %36 : vector<256x32xf32>
    %cst_45 = arith.constant 0.000000e+00 : f32
    %38 = vector.broadcast %cst_45 : f32 to vector<256x32xf32>
    %39 = arith.maximumf %37, %38 : vector<256x32xf32>
    %40 = vector.shape_cast %39 : vector<256x32xf32> to vector<16x16x32xf32>
    %c1_46 = arith.constant 1 : index
    %c1_47 = arith.constant 1 : index
    %c0_48 = arith.constant 0 : index
    %41 = vector.load %arg12[%c1_46, %c1_47, %c0_48] : memref<18x18x32xf32, #tpu.memory_space<vmem>>, vector<16x16x32xf32>
    tpu.vector_store %arg12[%c1_46, %c1_47, %c0_48], %40 {strides = array<i32>} : memref<18x18x32xf32, #tpu.memory_space<vmem>>, vector<16x16x32xf32>,
    %c0_49 = arith.constant 0 : index
    %c0_50 = arith.constant 0 : index
    %c0_51 = arith.constant 0 : index
    %42 = vector.load %arg12[%c0_49, %c0_50, %c0_51] : memref<18x18x32xf32, #tpu.memory_space<vmem>>, vector<16x16x32xf32>
    %43 = vector.shape_cast %42 : vector<16x16x32xf32> to vector<256x32xf32>
    %c0_52 = arith.constant 0 : index
    %c1_53 = arith.constant 1 : index
    %c0_54 = arith.constant 0 : index
    %44 = vector.load %arg12[%c0_52, %c1_53, %c0_54] : memref<18x18x32xf32, #tpu.memory_space<vmem>>, vector<16x16x32xf32>
    %45 = vector.shape_cast %44 : vector<16x16x32xf32> to vector<256x32xf32>
    %c0_55 = arith.constant 0 : index
    %c2_56 = arith.constant 2 : index
    %c0_57 = arith.constant 0 : index
    %46 = vector.load %arg12[%c0_55, %c2_56, %c0_57] : memref<18x18x32xf32, #tpu.memory_space<vmem>>, vector<16x16x32xf32>
    %47 = vector.shape_cast %46 : vector<16x16x32xf32> to vector<256x32xf32>
    %c1_58 = arith.constant 1 : index
    %c0_59 = arith.constant 0 : index
    %c0_60 = arith.constant 0 : index
    %48 = vector.load %arg12[%c1_58, %c0_59, %c0_60] : memref<18x18x32xf32, #tpu.memory_space<vmem>>, vector<16x16x32xf32>
    %49 = vector.shape_cast %48 : vector<16x16x32xf32> to vector<256x32xf32>
    %c1_61 = arith.constant 1 : index
    %c1_62 = arith.constant 1 : index
    %c0_63 = arith.constant 0 : index
    %50 = vector.load %arg12[%c1_61, %c1_62, %c0_63] : memref<18x18x32xf32, #tpu.memory_space<vmem>>, vector<16x16x32xf32>
    %51 = vector.shape_cast %50 : vector<16x16x32xf32> to vector<256x32xf32>
    %c1_64 = arith.constant 1 : index
    %c2_65 = arith.constant 2 : index
    %c0_66 = arith.constant 0 : index
    %52 = vector.load %arg12[%c1_64, %c2_65, %c0_66] : memref<18x18x32xf32, #tpu.memory_space<vmem>>, vector<16x16x32xf32>
    %53 = vector.shape_cast %52 : vector<16x16x32xf32> to vector<256x32xf32>
    %c2_67 = arith.constant 2 : index
    %c0_68 = arith.constant 0 : index
    %c0_69 = arith.constant 0 : index
    %54 = vector.load %arg12[%c2_67, %c0_68, %c0_69] : memref<18x18x32xf32, #tpu.memory_space<vmem>>, vector<16x16x32xf32>
    %55 = vector.shape_cast %54 : vector<16x16x32xf32> to vector<256x32xf32>
    %c2_70 = arith.constant 2 : index
    %c1_71 = arith.constant 1 : index
    %c0_72 = arith.constant 0 : index
    %56 = vector.load %arg12[%c2_70, %c1_71, %c0_72] : memref<18x18x32xf32, #tpu.memory_space<vmem>>, vector<16x16x32xf32>
    %57 = vector.shape_cast %56 : vector<16x16x32xf32> to vector<256x32xf32>
    %c2_73 = arith.constant 2 : index
    %c2_74 = arith.constant 2 : index
    %c0_75 = arith.constant 0 : index
    %58 = vector.load %arg12[%c2_73, %c2_74, %c0_75] : memref<18x18x32xf32, #tpu.memory_space<vmem>>, vector<16x16x32xf32>
    %59 = vector.shape_cast %58 : vector<16x16x32xf32> to vector<256x32xf32>
    %60 = tpu.concatenate %43, %45, %47, %49, %51, %53, %55, %57, %59 in 1 : vector<256x32xf32>, vector<256x32xf32>, vector<256x32xf32>, vector<256x32xf32>, vector<256x32xf32>, vector<256x32xf32>, vector<256x32xf32>, vector<256x32xf32>, vector<256x32xf32> -> vector<256x288xf32>
    %c0_76 = arith.constant 0 : index
    %c0_77 = arith.constant 0 : index
    %61 = vector.load %arg7[%c0_76, %c0_77] : memref<288x32xf32, #tpu.memory_space<vmem>>, vector<288x32xf32>
    %cst_78 = arith.constant dense<0.000000e+00> : vector<256x32xf32>
    %62 = tpu.matmul %60, %61, %cst_78 {dimension_numbers = #tpu.dot_dimension_numbers<[1], [0], [0], [1], [0, 0, 1, 1], [], []>} : vector<256x288xf32>, vector<288x32xf32>, vector<256x32xf32> -> vector<256x32xf32>
    %c0_79 = arith.constant 0 : index
    %c0_80 = arith.constant 0 : index
    %63 = vector.load %arg8[%c0_79, %c0_80] : memref<1x32xf32, #tpu.memory_space<vmem>>, vector<1x32xf32>
    %64 = vector.broadcast %63 : vector<1x32xf32> to vector<256x32xf32>
    %65 = arith.addf %62, %64 : vector<256x32xf32>
    %66 = arith.addf %65, %11 : vector<256x32xf32>
    %cst_81 = arith.constant 0.000000e+00 : f32
    %67 = vector.broadcast %cst_81 : f32 to vector<256x32xf32>
    %68 = arith.maximumf %66, %67 : vector<256x32xf32>
    %c0_82 = arith.constant 0 : index
    %c0_83 = arith.constant 0 : index
    %69 = vector.load %arg9[%c0_82, %c0_83] : memref<4x32xf32, #tpu.memory_space<vmem>>, vector<4x32xf32>
    %cst_84 = arith.constant dense<0.000000e+00> : vector<4x256xf32>
    %70 = tpu.matmul %69, %68, %cst_84 {dimension_numbers = #tpu.dot_dimension_numbers<[1], [1], [0], [0], [0, 0, 1, 0], [], []>} : vector<4x32xf32>, vector<256x32xf32>, vector<4x256xf32> -> vector<4x256xf32>
    %c0_85 = arith.constant 0 : index
    %c0_86 = arith.constant 0 : index
    %71 = vector.load %arg10[%c0_85, %c0_86] : memref<4x1xf32, #tpu.memory_space<vmem>>, vector<4x1xf32>
    %72 = vector.broadcast %71 : vector<4x1xf32> to vector<4x256xf32>
    %73 = arith.addf %70, %72 : vector<4x256xf32>
    %c0_87 = arith.constant 0 : index
    %c0_88 = arith.constant 0 : index
    %c0_89 = arith.constant 0 : index
    %74 = vector.load %arg2[%c0_87, %c0_88, %c0_89] : memref<1x4x256xf32, #tpu.memory_space<vmem>>, vector<1x4x256xf32>
    %75 = vector.shape_cast %74 : vector<1x4x256xf32> to vector<4x256xf32>
    %76 = arith.addf %73, %75 : vector<4x256xf32>
    %c0_90 = arith.constant 0 : index
    %c0_91 = arith.constant 0 : index
    %c0_92 = arith.constant 0 : index
    %77 = vector.load %arg11[%c0_90, %c0_91, %c0_92] : memref<1x4x256xf32, #tpu.memory_space<vmem>>, vector<1x4x256xf32>
    %78 = vector.shape_cast %77 : vector<1x4x256xf32> to vector<4x256xf32>
    %79 = vector.shape_cast %76 : vector<4x256xf32> to vector<1x4x256xf32>
    tpu.vector_store %arg11[%c0_90, %c0_91, %c0_92], %79 {strides = array<i32>} : memref<1x4x256xf32, #tpu.memory_space<vmem>>, vector<1x4x256xf32>,
    return
  }
  func.func @transform_0(%arg0: i32) -> (i32, i32, i32, i32) {
    %c0_i32 = arith.constant 0 : i32
    %c0_i32_0 = arith.constant 0 : i32
    %c0_i32_1 = arith.constant 0 : i32
    %c0_i32_2 = arith.constant 0 : i32
    return %arg0, %c0_i32, %c0_i32_0, %c0_i32_1 : i32, i32, i32, i32
  }
  func.func @transform_1(%arg0: i32) -> (i32, i32, i32) {
    %c0_i32 = arith.constant 0 : i32
    %c0_i32_0 = arith.constant 0 : i32
    %c0_i32_1 = arith.constant 0 : i32
    return %arg0, %c0_i32, %c0_i32_0 : i32, i32, i32
  }
  func.func @transform_2(%arg0: i32) -> (i32, i32) {
    %c0_i32 = arith.constant 0 : i32
    %c0_i32_0 = arith.constant 0 : i32
    %c0_i32_1 = arith.constant 0 : i32
    return %c0_i32, %c0_i32_0 : i32, i32
  }
  func.func @transform_3(%arg0: i32) -> (i32, i32) {
    %c0_i32 = arith.constant 0 : i32
    %c0_i32_0 = arith.constant 0 : i32
    %c0_i32_1 = arith.constant 0 : i32
    return %c0_i32, %c0_i32_0 : i32, i32
  }
  func.func @transform_4(%arg0: i32) -> (i32, i32) {
    %c0_i32 = arith.constant 0 : i32
    %c0_i32_0 = arith.constant 0 : i32
    %c0_i32_1 = arith.constant 0 : i32
    return %c0_i32, %c0_i32_0 : i32, i32
  }
  func.func @transform_5(%arg0: i32) -> (i32, i32) {
    %c0_i32 = arith.constant 0 : i32
    %c0_i32_0 = arith.constant 0 : i32
    %c0_i32_1 = arith.constant 0 : i32
    return %c0_i32, %c0_i32_0 : i32, i32
  }
  func.func @transform_6(%arg0: i32) -> (i32, i32) {
    %c0_i32 = arith.constant 0 : i32
    %c0_i32_0 = arith.constant 0 : i32
    %c0_i32_1 = arith.constant 0 : i32
    return %c0_i32, %c0_i32_0 : i32, i32
  }
  func.func @transform_7(%arg0: i32) -> (i32, i32) {
    %c0_i32 = arith.constant 0 : i32
    %c0_i32_0 = arith.constant 0 : i32
    %c0_i32_1 = arith.constant 0 : i32
    return %c0_i32, %c0_i32_0 : i32, i32
  }
  func.func @transform_8(%arg0: i32) -> (i32, i32) {
    %c0_i32 = arith.constant 0 : i32
    %c0_i32_0 = arith.constant 0 : i32
    %c0_i32_1 = arith.constant 0 : i32
    return %c0_i32, %c0_i32_0 : i32, i32
  }
  func.func @transform_9(%arg0: i32) -> (i32, i32) {
    %c0_i32 = arith.constant 0 : i32
    %c0_i32_0 = arith.constant 0 : i32
    %c0_i32_1 = arith.constant 0 : i32
    return %c0_i32, %c0_i32_0 : i32, i32
  }
  func.func @transform_10(%arg0: i32) -> (i32, i32, i32) {
    %c0_i32 = arith.constant 0 : i32
    %c0_i32_0 = arith.constant 0 : i32
    %c0_i32_1 = arith.constant 0 : i32
    return %arg0, %c0_i32, %c0_i32_0 : i32, i32, i32
  }
}

</mosaic_0001>

<llo_original>
// kernel: crop_type_final.1
$region0: #{crop_type_final.1}
  #allocation0 [shape = 'u32[]', space=smem, size = 0x4, offset = 0x4, fixed_abs, tag = 'smem constant byte address 0x4 - core index']
  #allocation1 [shape = 'u32[72,128]{1,0:T(1,128)}', space=vmem, size = 0x9000, scoped, tag = 'internal scratch']
  #allocation2 [shape = 'f32[18,18,32]{2,1,0:T(8,128)}', space=vmem, size = 0x36000, scoped, tag = 'scratch operand']
  %s0 = inlined_call_operand.vmem [shape: f32[2,16,16,4], index: 0, kind: input, shape index: {}]
  %s1 = inlined_call_operand.vmem [shape: f32[2,4,256], index: 1, kind: input, shape index: {}]
  %s2 = inlined_call_operand.vmem [shape: f32[4,32], index: 2, kind: input, shape index: {}]
  %s3 = inlined_call_operand.vmem [shape: f32[1,32], index: 3, kind: input, shape index: {}]
  %s4 = inlined_call_operand.vmem [shape: f32[288,32], index: 4, kind: input, shape index: {}]
  %s5 = inlined_call_operand.vmem [shape: f32[1,32], index: 5, kind: input, shape index: {}]
  %s6 = inlined_call_operand.vmem [shape: f32[288,32], index: 6, kind: input, shape index: {}]
  %s7 = inlined_call_operand.vmem [shape: f32[1,32], index: 7, kind: input, shape index: {}]
  %s8 = inlined_call_operand.vmem [shape: f32[4,32], index: 8, kind: input, shape index: {}]
  %s9 = inlined_call_operand.vmem [shape: f32[4,1], index: 9, kind: input, shape index: {}]
  %s10 = inlined_call_operand.vmem [shape: f32[2,4,256], index: 10, kind: output, shape index: {}]
  %s11 = sld [smem:[#allocation0]]
  $region73: #{crop_type_final.1} parent=0
    _
  %s13 = ssub.s32 1, %s11
  %s14 = scalar_select 0, %s13, %s11
  loop: start=0, step=1, limit=4
  $region2: #{crop_type_final.1} parent=0 // loop_pre_header
    _
  $region3: #{crop_type_final.1} parent=0 // loop_header
    %s16 = sphi 0, %s20
    %p17 = scmp.ge.s32.totalorder %s16, 4
    %s26 = sphi 0, %s28
    %s29 = sphi 0, %s26
    %s30 = sphi 0, %s29
    %s46 = sphi 0, %s30
    %s52 = sphi 0, %s54
    %s55 = sphi 0, %s52
    %s56 = sphi 0, %s55
    %s72 = sphi 0, %s56
    %s76 = sphi 0, %s76
    %s78 = sphi 0, %s76
    %s79 = sphi 0, %s78
    %s93 = sphi 0, %s79
    %s97 = sphi 0, %s97
    %s99 = sphi 0, %s97
    %s100 = sphi 0, %s99
    %s114 = sphi 0, %s100
    %s118 = sphi 0, %s118
    %s120 = sphi 0, %s118
    %s121 = sphi 0, %s120
    %s135 = sphi 0, %s121
    %s139 = sphi 0, %s139
    %s141 = sphi 0, %s139
    %s142 = sphi 0, %s141
    %s156 = sphi 0, %s142
    %s160 = sphi 0, %s160
    %s162 = sphi 0, %s160
    %s163 = sphi 0, %s162
    %s177 = sphi 0, %s163
    %s181 = sphi 0, %s181
    %s183 = sphi 0, %s181
    %s184 = sphi 0, %s183
    %s198 = sphi 0, %s184
    %s202 = sphi 0, %s202
    %s204 = sphi 0, %s202
    %s205 = sphi 0, %s204
    %s219 = sphi 0, %s205
    %s223 = sphi 0, %s223
    %s225 = sphi 0, %s223
    %s226 = sphi 0, %s225
    %s240 = sphi 0, %s226
    %s246 = sphi 0, %s248
    %s249 = sphi 0, %s246
    %s250 = sphi 0, %s249
    %s266 = sphi 0, %s250
  $region4: #{crop_type_final.1} parent=0 // loop_header_branch
    %19 = sbr.rel (%p17) target = $region8
  $region5: #{crop_type_final.1} parent=0 // loop_body
    %s21 = ssub.s32 %s16, 1
    %s22 = ssub.s32 %s16, 2
    %s23 = sadd.s32 %s16, 1
    %s24 = ssub.s32 %s16, %s23
    %p25 = scmp.eq.s32.totalorder %s24, 0
    %s27 = sadd.s32 %s26, 1
    %s28 = scalar_select %p25, %s26, %s27
    %p31 = pneg %p25
    %p32 = scmp.eq.s32.totalorder %s16, 1
    %p33 = por %p31, %p32
    %p34 = scmp.ne.s32.totalorder %s26, %s29
    %p35 = scmp.eq.s32.totalorder %s16, 0
    %p36 = por %p34, %p35
    %p37 = scmp.ne.s32.totalorder %s26, %s29
    %p38 = scmp.eq.s32.totalorder %s21, 1
    %p39 = por %p37, %p38
    %p40 = scmp.ne.s32.totalorder %s29, %s30
    %p41 = scmp.eq.s32.totalorder %s21, 0
    %p42 = por %p40, %p41
    %p43 = scmp.ne.s32.totalorder %s29, %s30
    %p44 = scmp.eq.s32.totalorder %s22, 1
    %p45 = por %p43, %p44
    %p47 = scmp.ne.s32.totalorder %s30, %s46
    %p48 = scmp.eq.s32.totalorder %s22, 0
    %p49 = por %p47, %p48
    %s50 = ssub.s32 %s16, %s23
    %p51 = scmp.eq.s32.totalorder %s50, 0
    %s53 = sadd.s32 %s52, 1
    %s54 = scalar_select %p51, %s52, %s53
    %p57 = pneg %p51
    %p58 = scmp.eq.s32.totalorder %s16, 1
    %p59 = por %p57, %p58
    %p60 = scmp.ne.s32.totalorder %s52, %s55
    %p61 = scmp.eq.s32.totalorder %s16, 0
    %p62 = por %p60, %p61
    %p63 = scmp.ne.s32.totalorder %s52, %s55
    %p64 = scmp.eq.s32.totalorder %s21, 1
    %p65 = por %p63, %p64
    %p66 = scmp.ne.s32.totalorder %s55, %s56
    %p67 = scmp.eq.s32.totalorder %s21, 0
    %p68 = por %p66, %p67
    %p69 = scmp.ne.s32.totalorder %s55, %s56
    %p70 = scmp.eq.s32.totalorder %s22, 1
    %p71 = por %p69, %p70
    %p73 = scmp.ne.s32.totalorder %s56, %s72
    %p74 = scmp.eq.s32.totalorder %s22, 0
    %p75 = por %p73, %p74
    %s77 = sadd.s32 %s76, 1
    %p80 = scmp.eq.s32.totalorder %s16, 1
    %p81 = scmp.ne.s32.totalorder %s76, %s78
    %p82 = scmp.eq.s32.totalorder %s16, 0
    %p83 = por %p81, %p82
    %p84 = scmp.ne.s32.totalorder %s76, %s78
    %p85 = scmp.eq.s32.totalorder %s21, 1
    %p86 = por %p84, %p85
    %p87 = scmp.ne.s32.totalorder %s78, %s79
    %p88 = scmp.eq.s32.totalorder %s21, 0
    %p89 = por %p87, %p88
    %p90 = scmp.ne.s32.totalorder %s78, %s79
    %p91 = scmp.eq.s32.totalorder %s22, 1
    %p92 = por %p90, %p91
    %p94 = scmp.ne.s32.totalorder %s79, %s93
    %p95 = scmp.eq.s32.totalorder %s22, 0
    %p96 = por %p94, %p95
    %s98 = sadd.s32 %s97, 1
    %p101 = scmp.eq.s32.totalorder %s16, 1
    %p102 = scmp.ne.s32.totalorder %s97, %s99
    %p103 = scmp.eq.s32.totalorder %s16, 0
    %p104 = por %p102, %p103
    %p105 = scmp.ne.s32.totalorder %s97, %s99
    %p106 = scmp.eq.s32.totalorder %s21, 1
    %p107 = por %p105, %p106
    %p108 = scmp.ne.s32.totalorder %s99, %s100
    %p109 = scmp.eq.s32.totalorder %s21, 0
    %p110 = por %p108, %p109
    %p111 = scmp.ne.s32.totalorder %s99, %s100
    %p112 = scmp.eq.s32.totalorder %s22, 1
    %p113 = por %p111, %p112
    %p115 = scmp.ne.s32.totalorder %s100, %s114
    %p116 = scmp.eq.s32.totalorder %s22, 0
    %p117 = por %p115, %p116
    %s119 = sadd.s32 %s118, 1
    %p122 = scmp.eq.s32.totalorder %s16, 1
    %p123 = scmp.ne.s32.totalorder %s118, %s120
    %p124 = scmp.eq.s32.totalorder %s16, 0
    %p125 = por %p123, %p124
    %p126 = scmp.ne.s32.totalorder %s118, %s120
    %p127 = scmp.eq.s32.totalorder %s21, 1
    %p128 = por %p126, %p127
    %p129 = scmp.ne.s32.totalorder %s120, %s121
    %p130 = scmp.eq.s32.totalorder %s21, 0
    %p131 = por %p129, %p130
    %p132 = scmp.ne.s32.totalorder %s120, %s121
    %p133 = scmp.eq.s32.totalorder %s22, 1
    %p134 = por %p132, %p133
    %p136 = scmp.ne.s32.totalorder %s121, %s135
    %p137 = scmp.eq.s32.totalorder %s22, 0
    %p138 = por %p136, %p137
    %s140 = sadd.s32 %s139, 1
    %p143 = scmp.eq.s32.totalorder %s16, 1
    %p144 = scmp.ne.s32.totalorder %s139, %s141
    %p145 = scmp.eq.s32.totalorder %s16, 0
    %p146 = por %p144, %p145
    %p147 = scmp.ne.s32.totalorder %s139, %s141
    %p148 = scmp.eq.s32.totalorder %s21, 1
    %p149 = por %p147, %p148
    %p150 = scmp.ne.s32.totalorder %s141, %s142
    %p151 = scmp.eq.s32.totalorder %s21, 0
    %p152 = por %p150, %p151
    %p153 = scmp.ne.s32.totalorder %s141, %s142
    %p154 = scmp.eq.s32.totalorder %s22, 1
    %p155 = por %p153, %p154
    %p157 = scmp.ne.s32.totalorder %s142, %s156
    %p158 = scmp.eq.s32.totalorder %s22, 0
    %p159 = por %p157, %p158
    %s161 = sadd.s32 %s160, 1
    %p164 = scmp.eq.s32.totalorder %s16, 1
    %p165 = scmp.ne.s32.totalorder %s160, %s162
    %p166 = scmp.eq.s32.totalorder %s16, 0
    %p167 = por %p165, %p166
    %p168 = scmp.ne.s32.totalorder %s160, %s162
    %p169 = scmp.eq.s32.totalorder %s21, 1
    %p170 = por %p168, %p169
    %p171 = scmp.ne.s32.totalorder %s162, %s163
    %p172 = scmp.eq.s32.totalorder %s21, 0
    %p173 = por %p171, %p172
    %p174 = scmp.ne.s32.totalorder %s162, %s163
    %p175 = scmp.eq.s32.totalorder %s22, 1
    %p176 = por %p174, %p175
    %p178 = scmp.ne.s32.totalorder %s163, %s177
    %p179 = scmp.eq.s32.totalorder %s22, 0
    %p180 = por %p178, %p179
    %s182 = sadd.s32 %s181, 1
    %p185 = scmp.eq.s32.totalorder %s16, 1
    %p186 = scmp.ne.s32.totalorder %s181, %s183
    %p187 = scmp.eq.s32.totalorder %s16, 0
    %p188 = por %p186, %p187
    %p189 = scmp.ne.s32.totalorder %s181, %s183
    %p190 = scmp.eq.s32.totalorder %s21, 1
    %p191 = por %p189, %p190
    %p192 = scmp.ne.s32.totalorder %s183, %s184
    %p193 = scmp.eq.s32.totalorder %s21, 0
    %p194 = por %p192, %p193
    %p195 = scmp.ne.s32.totalorder %s183, %s184
    %p196 = scmp.eq.s32.totalorder %s22, 1
    %p197 = por %p195, %p196
    %p199 = scmp.ne.s32.totalorder %s184, %s198
    %p200 = scmp.eq.s32.totalorder %s22, 0
    %p201 = por %p199, %p200
    %s203 = sadd.s32 %s202, 1
    %p206 = scmp.eq.s32.totalorder %s16, 1
    %p207 = scmp.ne.s32.totalorder %s202, %s204
    %p208 = scmp.eq.s32.totalorder %s16, 0
    %p209 = por %p207, %p208
    %p210 = scmp.ne.s32.totalorder %s202, %s204
    %p211 = scmp.eq.s32.totalorder %s21, 1
    %p212 = por %p210, %p211
    %p213 = scmp.ne.s32.totalorder %s204, %s205
    %p214 = scmp.eq.s32.totalorder %s21, 0
    %p215 = por %p213, %p214
    %p216 = scmp.ne.s32.totalorder %s204, %s205
    %p217 = scmp.eq.s32.totalorder %s22, 1
    %p218 = por %p216, %p217
    %p220 = scmp.ne.s32.totalorder %s205, %s219
    %p221 = scmp.eq.s32.totalorder %s22, 0
    %p222 = por %p220, %p221
    %s224 = sadd.s32 %s223, 1
    %p227 = scmp.eq.s32.totalorder %s16, 1
    %p228 = scmp.ne.s32.totalorder %s223, %s225
    %p229 = scmp.eq.s32.totalorder %s16, 0
    %p230 = por %p228, %p229
    %p231 = scmp.ne.s32.totalorder %s223, %s225
    %p232 = scmp.eq.s32.totalorder %s21, 1
    %p233 = por %p231, %p232
    %p234 = scmp.ne.s32.totalorder %s225, %s226
    %p235 = scmp.eq.s32.totalorder %s21, 0
    %p236 = por %p234, %p235
    %p237 = scmp.ne.s32.totalorder %s225, %s226
    %p238 = scmp.eq.s32.totalorder %s22, 1
    %p239 = por %p237, %p238
    %p241 = scmp.ne.s32.totalorder %s226, %s240
    %p242 = scmp.eq.s32.totalorder %s22, 0
    %p243 = por %p241, %p242
    %s244 = ssub.s32 %s16, %s23
    %p245 = scmp.eq.s32.totalorder %s244, 0
    %s247 = sadd.s32 %s246, 1
    %s248 = scalar_select %p245, %s246, %s247
    %p251 = pneg %p245
    %p252 = scmp.eq.s32.totalorder %s16, 1
    %p253 = por %p251, %p252
    %p254 = scmp.ne.s32.totalorder %s246, %s249
    %p255 = scmp.eq.s32.totalorder %s16, 0
    %p256 = por %p254, %p255
    %p257 = scmp.ne.s32.totalorder %s246, %s249
    %p258 = scmp.eq.s32.totalorder %s21, 1
    %p259 = por %p257, %p258
    %p260 = scmp.ne.s32.totalorder %s249, %s250
    %p261 = scmp.eq.s32.totalorder %s21, 0
    %p262 = por %p260, %p261
    %p263 = scmp.ne.s32.totalorder %s249, %s250
    %p264 = scmp.eq.s32.totalorder %s22, 1
    %p265 = por %p263, %p264
    %p267 = scmp.ne.s32.totalorder %s250, %s266
    %p268 = scmp.eq.s32.totalorder %s22, 0
    %p269 = por %p267, %p268
    %p270 = scmp.le.s32.totalorder 1, %s16
    %p271 = scmp.lt.s32.totalorder %s16, 3
    %p272 = pnand %p270, %p271
    %p273 = pneg %p272
    // Predicated region
    $region9: #{crop_type_final.1} parent=5 // pred_check
      _
    $region10: #{crop_type_final.1} parent=5 // pred_check_branch
      %275 = sbr.rel (%p272) target = $region12
    $region11: #{crop_type_final.1} parent=5 // pred_region
      %s276 = ssub.s32 %s16, 1
      // Predicated region
      $region13: #{crop_type_final.1} parent=11 // pred_check
        %p277 = pneg %p89
      $region14: #{crop_type_final.1} parent=11 // pred_check_branch
        %279 = sbr.rel (%p277) target = $region16
      $region15: #{crop_type_final.1} parent=11 // pred_region
        _
      $region16: #{crop_type_final.1} parent=11 // pred_fallthru
        _
      // Predicated region
      $region17: #{crop_type_final.1} parent=11 // pred_check
        %p280 = pneg %p110
      $region18: #{crop_type_final.1} parent=11 // pred_check_branch
        %282 = sbr.rel (%p280) target = $region20
      $region19: #{crop_type_final.1} parent=11 // pred_region
        _
      $region20: #{crop_type_final.1} parent=11 // pred_fallthru
        _
      // Predicated region
      $region21: #{crop_type_final.1} parent=11 // pred_check
        %p283 = pneg %p131
      $region22: #{crop_type_final.1} parent=11 // pred_check_branch
        %285 = sbr.rel (%p283) target = $region24
      $region23: #{crop_type_final.1} parent=11 // pred_region
        _
      $region24: #{crop_type_final.1} parent=11 // pred_fallthru
        _
      // Predicated region
      $region25: #{crop_type_final.1} parent=11 // pred_check
        %p286 = pneg %p152
      $region26: #{crop_type_final.1} parent=11 // pred_check_branch
        %288 = sbr.rel (%p286) target = $region28
      $region27: #{crop_type_final.1} parent=11 // pred_region
        _
      $region28: #{crop_type_final.1} parent=11 // pred_fallthru
        _
      // Predicated region
      $region29: #{crop_type_final.1} parent=11 // pred_check
        %p289 = pneg %p173
      $region30: #{crop_type_final.1} parent=11 // pred_check_branch
        %291 = sbr.rel (%p289) target = $region32
      $region31: #{crop_type_final.1} parent=11 // pred_region
        _
      $region32: #{crop_type_final.1} parent=11 // pred_fallthru
        _
      // Predicated region
      $region33: #{crop_type_final.1} parent=11 // pred_check
        %p292 = pneg %p194
      $region34: #{crop_type_final.1} parent=11 // pred_check_branch
        %294 = sbr.rel (%p292) target = $region36
      $region35: #{crop_type_final.1} parent=11 // pred_region
        _
      $region36: #{crop_type_final.1} parent=11 // pred_fallthru
        _
      // Predicated region
      $region37: #{crop_type_final.1} parent=11 // pred_check
        %p295 = pneg %p215
      $region38: #{crop_type_final.1} parent=11 // pred_check_branch
        %297 = sbr.rel (%p295) target = $region40
      $region39: #{crop_type_final.1} parent=11 // pred_region
        _
      $region40: #{crop_type_final.1} parent=11 // pred_fallthru
        _
      // Predicated region
      $region41: #{crop_type_final.1} parent=11 // pred_check
        %p298 = pneg %p236
      $region42: #{crop_type_final.1} parent=11 // pred_check_branch
        %300 = sbr.rel (%p298) target = $region44
      $region43: #{crop_type_final.1} parent=11 // pred_region
        _
      $region44: #{crop_type_final.1} parent=11 // pred_fallthru
        _
    $region12: #{crop_type_final.1} parent=5 // pred_fallthru
      _
    %p301 = scmp.lt.s32.totalorder %s16, 2
    // Predicated region
    $region45: #{crop_type_final.1} parent=5 // pred_check
      %p302 = pneg %p301
    $region46: #{crop_type_final.1} parent=5 // pred_check_branch
      %304 = sbr.rel (%p302) target = $region48
    $region47: #{crop_type_final.1} parent=5 // pred_region
      // Predicated region
      $region49: #{crop_type_final.1} parent=47 // pred_check
        %p305 = pneg %p36
      $region50: #{crop_type_final.1} parent=47 // pred_check_branch
        %307 = sbr.rel (%p305) target = $region52
      $region51: #{crop_type_final.1} parent=47 // pred_region
        %p308 = scmp.lt.s32.totalorder %s16, 1
        %s309 = scalar_select %p308, %s16, 1
        %s310 = smul.addr %s309, 32
        %s311 = smul.addr %s310, 8
        %s312 = scalar_lea.vmem %s0, %s311
      $region52: #{crop_type_final.1} parent=47 // pred_fallthru
        _
      // Predicated region
      $region53: #{crop_type_final.1} parent=47 // pred_check
        %p313 = pneg %p62
      $region54: #{crop_type_final.1} parent=47 // pred_check_branch
        %315 = sbr.rel (%p313) target = $region56
      $region55: #{crop_type_final.1} parent=47 // pred_region
        %p316 = scmp.lt.s32.totalorder %s16, 1
        %s317 = scalar_select %p316, %s16, 1
        %s318 = smul.addr %s317, 2
        %s319 = smul.addr %s318, 4
        %s320 = scalar_lea.vmem %s1, %s319
      $region56: #{crop_type_final.1} parent=47 // pred_fallthru
        _
    $region48: #{crop_type_final.1} parent=5 // pred_fallthru
      _
    %p321 = scmp.le.s32.totalorder 1, %s16
    %p322 = scmp.lt.s32.totalorder %s16, 3
    %p323 = pnand %p321, %p322
    %p324 = pneg %p323
    // Predicated region
    $region57: #{crop_type_final.1} parent=5 // pred_check
      _
    $region58: #{crop_type_final.1} parent=5 // pred_check_branch
      %326 = sbr.rel (%p323) target = $region60
    $region59: #{crop_type_final.1} parent=5 // pred_region
      %s327 = ssub.s32 %s16, 1
      %p328 = scmp.lt.s32.totalorder %s21, 1
      %s329 = scalar_select %p328, %s21, 1
      %s330 = smul.addr %s329, 32
      %s331 = smul.addr %s330, 8
      %s332 = scalar_lea.vmem %s0, %s331
      %p333 = pneg %p42
      %p334 = pneg %p39
      %p335 = scmp.lt.s32.totalorder %s21, 1
      %s336 = scalar_select %p335, %s21, 1
      %s337 = smul.addr %s336, 2
      %s338 = smul.addr %s337, 4
      %s339 = scalar_lea.vmem %s1, %s338
      %p340 = pneg %p68
      %p341 = pneg %p65
      %p342 = pneg %p89
      %p343 = pneg %p86
      %p344 = pneg %p110
      %p345 = pneg %p107
      %p346 = pneg %p131
      %p347 = pneg %p128
      %p348 = pneg %p152
      %p349 = pneg %p149
      %p350 = pneg %p173
      %p351 = pneg %p170
      %p352 = pneg %p194
      %p353 = pneg %p191
      %p354 = pneg %p215
      %p355 = pneg %p212
      %p356 = pneg %p236
      %p357 = pneg %p233
      %p358 = pneg %p262
      %p359 = pneg %p259
      %p360 = scmp.lt.s32.totalorder %s21, 1
      %s361 = scalar_select %p360, %s21, 1
      %s362 = smul.addr %s361, 2
      %s363 = smul.addr %s362, 4
      %s364 = scalar_lea.vmem %s10, %s363
      %p365 = scmp.lt.s32.totalorder %s21, 1
      %s366 = scalar_select %p365, %s21, 1
      %s367 = smul.addr %s366, 32
      %s368 = smul.addr %s367, 8
      %s369 = scalar_lea.vmem %s0, %s368
      %p370 = scmp.lt.s32.totalorder %s21, 1
      %s371 = scalar_select %p370, %s21, 1
      %s372 = smul.addr %s371, 2
      %s373 = smul.addr %s372, 4
      %s374 = scalar_lea.vmem %s1, %s373
      %p375 = scmp.lt.s32.totalorder %s21, 1
      %s376 = scalar_select %p375, %s21, 1
      %s377 = smul.addr %s376, 2
      %s378 = smul.addr %s377, 4
      %s379 = scalar_lea.vmem %s10, %s378
      %vm380 = vcmask 261120
      %381 = vst.msk [vmem:[#allocation2] sm:$0xff] %vm380, 0.0
      %382 = vst.msk [vmem:[#allocation2 + $0x8] sm:$0xff] %vm380, 0.0
      %vm383 = vcmask 254976
      %384 = vst.msk [vmem:[#allocation2 + $0x10] sm:$0x3] %vm383, 0.0
      %385 = vst.msk [vmem:[#allocation2 + $0x18] sm:$0xff] %vm380, 0.0
      %386 = vst.msk [vmem:[#allocation2 + $0x20] sm:$0xff] %vm380, 0.0
      %387 = vst.msk [vmem:[#allocation2 + $0x28] sm:$0x3] %vm383, 0.0
      %388 = vst.msk [vmem:[#allocation2 + $0x30] sm:$0xff] %vm380, 0.0
      %389 = vst.msk [vmem:[#allocation2 + $0x38] sm:$0xff] %vm380, 0.0
      %390 = vst.msk [vmem:[#allocation2 + $0x40] sm:$0x3] %vm383, 0.0
      %391 = vst.msk [vmem:[#allocation2 + $0x48] sm:$0xff] %vm380, 0.0
      %392 = vst.msk [vmem:[#allocation2 + $0x50] sm:$0xff] %vm380, 0.0
      %393 = vst.msk [vmem:[#allocation2 + $0x58] sm:$0x3] %vm383, 0.0
      %394 = vst.msk [vmem:[#allocation2 + $0x60] sm:$0xff] %vm380, 0.0
      %395 = vst.msk [vmem:[#allocation2 + $0x68] sm:$0xff] %vm380, 0.0
      %396 = vst.msk [vmem:[#allocation2 + $0x70] sm:$0x3] %vm383, 0.0
      %397 = vst.msk [vmem:[#allocation2 + $0x78] sm:$0xff] %vm380, 0.0
      %398 = vst.msk [vmem:[#allocation2 + $0x80] sm:$0xff] %vm380, 0.0
      %399 = vst.msk [vmem:[#allocation2 + $0x88] sm:$0x3] %vm383, 0.0
      %400 = vst.msk [vmem:[#allocation2 + $0x90] sm:$0xff] %vm380, 0.0
      %401 = vst.msk [vmem:[#allocation2 + $0x98] sm:$0xff] %vm380, 0.0
      %402 = vst.msk [vmem:[#allocation2 + $0xa0] sm:$0x3] %vm383, 0.0
      %403 = vst.msk [vmem:[#allocation2 + $0xa8] sm:$0xff] %vm380, 0.0
      %404 = vst.msk [vmem:[#allocation2 + $0xb0] sm:$0xff] %vm380, 0.0
      %405 = vst.msk [vmem:[#allocation2 + $0xb8] sm:$0x3] %vm383, 0.0
      %406 = vst.msk [vmem:[#allocation2 + $0xc0] sm:$0xff] %vm380, 0.0
      %407 = vst.msk [vmem:[#allocation2 + $0xc8] sm:$0xff] %vm380, 0.0
      %408 = vst.msk [vmem:[#allocation2 + $0xd0] sm:$0x3] %vm383, 0.0
      %409 = vst.msk [vmem:[#allocation2 + $0xd8] sm:$0xff] %vm380, 0.0
      %410 = vst.msk [vmem:[#allocation2 + $0xe0] sm:$0xff] %vm380, 0.0
      %411 = vst.msk [vmem:[#allocation2 + $0xe8] sm:$0x3] %vm383, 0.0
      %412 = vst.msk [vmem:[#allocation2 + $0xf0] sm:$0xff] %vm380, 0.0
      %413 = vst.msk [vmem:[#allocation2 + $0xf8] sm:$0xff] %vm380, 0.0
      %414 = vst.msk [vmem:[#allocation2 + $0x100] sm:$0x3] %vm383, 0.0
      %415 = vst.msk [vmem:[#allocation2 + $0x108] sm:$0xff] %vm380, 0.0
      %416 = vst.msk [vmem:[#allocation2 + $0x110] sm:$0xff] %vm380, 0.0
      %417 = vst.msk [vmem:[#allocation2 + $0x118] sm:$0x3] %vm383, 0.0
      %418 = vst.msk [vmem:[#allocation2 + $0x120] sm:$0xff] %vm380, 0.0
      %419 = vst.msk [vmem:[#allocation2 + $0x128] sm:$0xff] %vm380, 0.0
      %420 = vst.msk [vmem:[#allocation2 + $0x130] sm:$0x3] %vm383, 0.0
      %421 = vst.msk [vmem:[#allocation2 + $0x138] sm:$0xff] %vm380, 0.0
      %422 = vst.msk [vmem:[#allocation2 + $0x140] sm:$0xff] %vm380, 0.0
      %423 = vst.msk [vmem:[#allocation2 + $0x148] sm:$0x3] %vm383, 0.0
      %424 = vst.msk [vmem:[#allocation2 + $0x150] sm:$0xff] %vm380, 0.0
      %425 = vst.msk [vmem:[#allocation2 + $0x158] sm:$0xff] %vm380, 0.0
      %426 = vst.msk [vmem:[#allocation2 + $0x160] sm:$0x3] %vm383, 0.0
      %427 = vst.msk [vmem:[#allocation2 + $0x168] sm:$0xff] %vm380, 0.0
      %428 = vst.msk [vmem:[#allocation2 + $0x170] sm:$0xff] %vm380, 0.0
      %429 = vst.msk [vmem:[#allocation2 + $0x178] sm:$0x3] %vm383, 0.0
      %430 = vst.msk [vmem:[#allocation2 + $0x180] sm:$0xff] %vm380, 0.0
      %431 = vst.msk [vmem:[#allocation2 + $0x188] sm:$0xff] %vm380, 0.0
      %432 = vst.msk [vmem:[#allocation2 + $0x190] sm:$0x3] %vm383, 0.0
      %433 = vst.msk [vmem:[#allocation2 + $0x198] sm:$0xff] %vm380, 0.0
      %434 = vst.msk [vmem:[#allocation2 + $0x1a0] sm:$0xff] %vm380, 0.0
      %435 = vst.msk [vmem:[#allocation2 + $0x1a8] sm:$0x3] %vm383, 0.0
      %v436 = vld [vmem:[%s369] sm:$0xff]
      %v437 = vld [vmem:[%s369 + $0x8] sm:$0xff]
      %v438 = vld [vmem:[%s369 + $0x10] sm:$0xff]
      %v439 = vld [vmem:[%s369 + $0x18] sm:$0xff]
      %v440 = vld [vmem:[%s369 + $0x20] sm:$0xff]
      %v441 = vld [vmem:[%s369 + $0x28] sm:$0xff]
      %v442 = vld [vmem:[%s369 + $0x30] sm:$0xff]
      %v443 = vld [vmem:[%s369 + $0x38] sm:$0xff]
      %v444 = vld [vmem:[%s369 + $0x40] sm:$0xff]
      %v445 = vld [vmem:[%s369 + $0x48] sm:$0xff]
      %v446 = vld [vmem:[%s369 + $0x50] sm:$0xff]
      %v447 = vld [vmem:[%s369 + $0x58] sm:$0xff]
      %v448 = vld [vmem:[%s369 + $0x60] sm:$0xff]
      %v449 = vld [vmem:[%s369 + $0x68] sm:$0xff]
      %v450 = vld [vmem:[%s369 + $0x70] sm:$0xff]
      %v451 = vld [vmem:[%s369 + $0x78] sm:$0xff]
      %v452 = vld [vmem:[%s369 + $0x80] sm:$0xff]
      %v453 = vld [vmem:[%s369 + $0x88] sm:$0xff]
      %v454 = vld [vmem:[%s369 + $0x90] sm:$0xff]
      %v455 = vld [vmem:[%s369 + $0x98] sm:$0xff]
      %v456 = vld [vmem:[%s369 + $0xa0] sm:$0xff]
      %v457 = vld [vmem:[%s369 + $0xa8] sm:$0xff]
      %v458 = vld [vmem:[%s369 + $0xb0] sm:$0xff]
      %v459 = vld [vmem:[%s369 + $0xb8] sm:$0xff]
      %v460 = vld [vmem:[%s369 + $0xc0] sm:$0xff]
      %v461 = vld [vmem:[%s369 + $0xc8] sm:$0xff]
      %v462 = vld [vmem:[%s369 + $0xd0] sm:$0xff]
      %v463 = vld [vmem:[%s369 + $0xd8] sm:$0xff]
      %v464 = vld [vmem:[%s369 + $0xe0] sm:$0xff]
      %v465 = vld [vmem:[%s369 + $0xe8] sm:$0xff]
      %v466 = vld [vmem:[%s369 + $0xf0] sm:$0xff]
      %v467 = vld [vmem:[%s369 + $0xf8] sm:$0xff]
      %v468 = vld [vmem:[%s2] sm:$0xf]
      %v469 = vld [vmem:[%s3] sm:$0x1]
      %v471 = vperm.slane %v469, 0
      %vm473 = vcmask 31744
      %v475 = vsel %vm473, %v436, 0
      %v478 = vsel %vm473, %v437, 0
      %v481 = vsel %vm473, %v438, 0
      %v484 = vsel %vm473, %v439, 0
      %v487 = vsel %vm473, %v440, 0
      %v490 = vsel %vm473, %v441, 0
      %v493 = vsel %vm473, %v442, 0
      %v496 = vsel %vm473, %v443, 0
      %v499 = vsel %vm473, %v444, 0
      %v502 = vsel %vm473, %v445, 0
      %v505 = vsel %vm473, %v446, 0
      %v508 = vsel %vm473, %v447, 0
      %v511 = vsel %vm473, %v448, 0
      %v514 = vsel %vm473, %v449, 0
      %v517 = vsel %vm473, %v450, 0
      %v520 = vsel %vm473, %v451, 0
      %v523 = vsel %vm473, %v452, 0
      %v526 = vsel %vm473, %v453, 0
      %v529 = vsel %vm473, %v454, 0
      %v532 = vsel %vm473, %v455, 0
      %v535 = vsel %vm473, %v456, 0
      %v538 = vsel %vm473, %v457, 0
      %v541 = vsel %vm473, %v458, 0
      %v544 = vsel %vm473, %v459, 0
      %v547 = vsel %vm473, %v460, 0
      %v550 = vsel %vm473, %v461, 0
      %v553 = vsel %vm473, %v462, 0
      %v556 = vsel %vm473, %v463, 0
      %v559 = vsel %vm473, %v464, 0
      %v562 = vsel %vm473, %v465, 0
      %v565 = vsel %vm473, %v466, 0
      %v568 = vsel %vm473, %v467, 0
      %vm570 = vcmask 1043456
      %v572 = vsel %vm570, %v468, 0
      %574 = vmatpush.msra.mxu0 0.0
      %575 = vmatpush.msra.mxu0 0.0
      %576 = vmatpush.msra.mxu0 0.0
      %577 = vmatpush.msra.mxu0 0.0
      %578 = vmatpush.msra.mxu0 0.0
      %579 = vmatpush.msra.mxu0 0.0
      %580 = vmatpush.msra.mxu0 0.0
      %581 = vmatpush.msra.mxu0 0.0
      %582 = vmatpush.msra.mxu0 0.0
      %583 = vmatpush.msra.mxu0 0.0
      %584 = vmatpush.msra.mxu0 0.0
      %585 = vmatpush.msra.mxu0 0.0
      %586 = vmatpush.msra.mxu0 0.0
      %587 = vmatpush.msra.mxu0 0.0
      %588 = vmatpush.msra.mxu0 0.0
      %589 = vmatpush.msra.mxu0 %v572
      %590 = vmatmul.f32.gmra.mxu0 %v475
      %v591 = vpop.f32.mrf.mxu0
      %v592 = vadd.f32 %v471, %v591
      %593 = vmatmul.f32.gmra.mxu0 %v478
      %v594 = vpop.f32.mrf.mxu0
      %v595 = vadd.f32 %v471, %v594
      %596 = vmatmul.f32.gmra.mxu0 %v481
      %v597 = vpop.f32.mrf.mxu0
      %v598 = vadd.f32 %v471, %v597
      %599 = vmatmul.f32.gmra.mxu0 %v484
      %v600 = vpop.f32.mrf.mxu0
      %v601 = vadd.f32 %v471, %v600
      %602 = vmatmul.f32.gmra.mxu0 %v487
      %v603 = vpop.f32.mrf.mxu0
      %v604 = vadd.f32 %v471, %v603
      %605 = vmatmul.f32.gmra.mxu0 %v490
      %v606 = vpop.f32.mrf.mxu0
      %v607 = vadd.f32 %v471, %v606
      %608 = vmatmul.f32.gmra.mxu0 %v493
      %v609 = vpop.f32.mrf.mxu0
      %v610 = vadd.f32 %v471, %v609
      %611 = vmatmul.f32.gmra.mxu0 %v496
      %v612 = vpop.f32.mrf.mxu0
      %v613 = vadd.f32 %v471, %v612
      %614 = vmatmul.f32.gmra.mxu0 %v499
      %v615 = vpop.f32.mrf.mxu0
      %v616 = vadd.f32 %v471, %v615
      %617 = vmatmul.f32.gmra.mxu0 %v502
      %v618 = vpop.f32.mrf.mxu0
      %v619 = vadd.f32 %v471, %v618
      %620 = vmatmul.f32.gmra.mxu0 %v505
      %v621 = vpop.f32.mrf.mxu0
      %v622 = vadd.f32 %v471, %v621
      %623 = vmatmul.f32.gmra.mxu0 %v508
      %v624 = vpop.f32.mrf.mxu0
      %v625 = vadd.f32 %v471, %v624
      %626 = vmatmul.f32.gmra.mxu0 %v511
      %v627 = vpop.f32.mrf.mxu0
      %v628 = vadd.f32 %v471, %v627
      %629 = vmatmul.f32.gmra.mxu0 %v514
      %v630 = vpop.f32.mrf.mxu0
      %v631 = vadd.f32 %v471, %v630
      %632 = vmatmul.f32.gmra.mxu0 %v517
      %v633 = vpop.f32.mrf.mxu0
      %v634 = vadd.f32 %v471, %v633
      %635 = vmatmul.f32.gmra.mxu0 %v520
      %v636 = vpop.f32.mrf.mxu0
      %v637 = vadd.f32 %v471, %v636
      %638 = vmatmul.f32.gmra.mxu0 %v523
      %v639 = vpop.f32.mrf.mxu0
      %v640 = vadd.f32 %v471, %v639
      %641 = vmatmul.f32.gmra.mxu0 %v526
      %v642 = vpop.f32.mrf.mxu0
      %v643 = vadd.f32 %v471, %v642
      %644 = vmatmul.f32.gmra.mxu0 %v529
      %v645 = vpop.f32.mrf.mxu0
      %v646 = vadd.f32 %v471, %v645
      %647 = vmatmul.f32.gmra.mxu0 %v532
      %v648 = vpop.f32.mrf.mxu0
      %v649 = vadd.f32 %v471, %v648
      %650 = vmatmul.f32.gmra.mxu0 %v535
      %v651 = vpop.f32.mrf.mxu0
      %v652 = vadd.f32 %v471, %v651
      %653 = vmatmul.f32.gmra.mxu0 %v538
      %v654 = vpop.f32.mrf.mxu0
      %v655 = vadd.f32 %v471, %v654
      %656 = vmatmul.f32.gmra.mxu0 %v541
      %v657 = vpop.f32.mrf.mxu0
      %v658 = vadd.f32 %v471, %v657
      %659 = vmatmul.f32.gmra.mxu0 %v544
      %v660 = vpop.f32.mrf.mxu0
      %v661 = vadd.f32 %v471, %v660
      %662 = vmatmul.f32.gmra.mxu0 %v547
      %v663 = vpop.f32.mrf.mxu0
      %v664 = vadd.f32 %v471, %v663
      %665 = vmatmul.f32.gmra.mxu0 %v550
      %v666 = vpop.f32.mrf.mxu0
      %v667 = vadd.f32 %v471, %v666
      %668 = vmatmul.f32.gmra.mxu0 %v553
      %v669 = vpop.f32.mrf.mxu0
      %v670 = vadd.f32 %v471, %v669
      %671 = vmatmul.f32.gmra.mxu0 %v556
      %v672 = vpop.f32.mrf.mxu0
      %v673 = vadd.f32 %v471, %v672
      %674 = vmatmul.f32.gmra.mxu0 %v559
      %v675 = vpop.f32.mrf.mxu0
      %v676 = vadd.f32 %v471, %v675
      %677 = vmatmul.f32.gmra.mxu0 %v562
      %v678 = vpop.f32.mrf.mxu0
      %v679 = vadd.f32 %v471, %v678
      %680 = vmatmul.f32.gmra.mxu0 %v565
      %v681 = vpop.f32.mrf.mxu0
      %v682 = vadd.f32 %v471, %v681
      %683 = vmatmul.f32.gmra.mxu0 %v568
      %v684 = vpop.f32.mrf.mxu0
      %v685 = vadd.f32 %v471, %v684
      %686 = vdwg.mxu0
      %v687 = vmax.f32 %v592, 0.0
      %v688 = vmax.f32 %v595, 0.0
      %v689 = vmax.f32 %v598, 0.0
      %v690 = vmax.f32 %v601, 0.0
      %v691 = vmax.f32 %v604, 0.0
      %v692 = vmax.f32 %v607, 0.0
      %v693 = vmax.f32 %v610, 0.0
      %v694 = vmax.f32 %v613, 0.0
      %v695 = vmax.f32 %v616, 0.0
      %v696 = vmax.f32 %v619, 0.0
      %v697 = vmax.f32 %v622, 0.0
      %v698 = vmax.f32 %v625, 0.0
      %v699 = vmax.f32 %v628, 0.0
      %v700 = vmax.f32 %v631, 0.0
      %v701 = vmax.f32 %v634, 0.0
      %v702 = vmax.f32 %v637, 0.0
      %v703 = vmax.f32 %v640, 0.0
      %v704 = vmax.f32 %v643, 0.0
      %v705 = vmax.f32 %v646, 0.0
      %v706 = vmax.f32 %v649, 0.0
      %v707 = vmax.f32 %v652, 0.0
      %v708 = vmax.f32 %v655, 0.0
      %v709 = vmax.f32 %v658, 0.0
      %v710 = vmax.f32 %v661, 0.0
      %v711 = vmax.f32 %v664, 0.0
      %v712 = vmax.f32 %v667, 0.0
      %v713 = vmax.f32 %v670, 0.0
      %v714 = vmax.f32 %v673, 0.0
      %v715 = vmax.f32 %v676, 0.0
      %v716 = vmax.f32 %v679, 0.0
      %v717 = vmax.f32 %v682, 0.0
      %v718 = vmax.f32 %v685, 0.0
      %s719 = scalar_lea.vmem [#allocation2], 24
      %720 = vst.msk [vmem:[%s719 + $0x1] sm:$0xff] %vm380, %v687
      %721 = vst.msk [vmem:[%s719 + $0x9] sm:$0xff] %vm380, %v688
      %722 = vst.msk [vmem:[%s719 + $0x19] sm:$0xff] %vm380, %v689
      %723 = vst.msk [vmem:[%s719 + $0x21] sm:$0xff] %vm380, %v690
      %724 = vst.msk [vmem:[%s719 + $0x31] sm:$0xff] %vm380, %v691
      %725 = vst.msk [vmem:[%s719 + $0x39] sm:$0xff] %vm380, %v692
      %726 = vst.msk [vmem:[%s719 + $0x49] sm:$0xff] %vm380, %v693
      %727 = vst.msk [vmem:[%s719 + $0x51] sm:$0xff] %vm380, %v694
      %728 = vst.msk [vmem:[%s719 + $0x61] sm:$0xff] %vm380, %v695
      %729 = vst.msk [vmem:[%s719 + $0x69] sm:$0xff] %vm380, %v696
      %730 = vst.msk [vmem:[%s719 + $0x79] sm:$0xff] %vm380, %v697
      %731 = vst.msk [vmem:[%s719 + $0x81] sm:$0xff] %vm380, %v698
      %732 = vst.msk [vmem:[%s719 + $0x91] sm:$0xff] %vm380, %v699
      %733 = vst.msk [vmem:[%s719 + $0x99] sm:$0xff] %vm380, %v700
      %734 = vst.msk [vmem:[%s719 + $0xa9] sm:$0xff] %vm380, %v701
      %735 = vst.msk [vmem:[%s719 + $0xb1] sm:$0xff] %vm380, %v702
      %736 = vst.msk [vmem:[%s719 + $0xc1] sm:$0xff] %vm380, %v703
      %737 = vst.msk [vmem:[%s719 + $0xc9] sm:$0xff] %vm380, %v704
      %738 = vst.msk [vmem:[%s719 + $0xd9] sm:$0xff] %vm380, %v705
      %739 = vst.msk [vmem:[%s719 + $0xe1] sm:$0xff] %vm380, %v706
      %740 = vst.msk [vmem:[%s719 + $0xf1] sm:$0xff] %vm380, %v707
      %741 = vst.msk [vmem:[%s719 + $0xf9] sm:$0xff] %vm380, %v708
      %742 = vst.msk [vmem:[%s719 + $0x109] sm:$0xff] %vm380, %v709
      %743 = vst.msk [vmem:[%s719 + $0x111] sm:$0xff] %vm380, %v710
      %744 = vst.msk [vmem:[%s719 + $0x121] sm:$0xff] %vm380, %v711
      %745 = vst.msk [vmem:[%s719 + $0x129] sm:$0xff] %vm380, %v712
      %746 = vst.msk [vmem:[%s719 + $0x139] sm:$0xff] %vm380, %v713
      %747 = vst.msk [vmem:[%s719 + $0x141] sm:$0xff] %vm380, %v714
      %748 = vst.msk [vmem:[%s719 + $0x151] sm:$0xff] %vm380, %v715
      %749 = vst.msk [vmem:[%s719 + $0x159] sm:$0xff] %vm380, %v716
      %750 = vst.msk [vmem:[%s719 + $0x169] sm:$0xff] %vm380, %v717
      %751 = vst.msk [vmem:[%s719 + $0x171] sm:$0xff] %vm380, %v718
      %v752 = vld [vmem:[#allocation2] sm:$0xff]
      %v753 = vld [vmem:[#allocation2 + $0x8] sm:$0xff]
      %v754 = vld [vmem:[#allocation2 + $0x18] sm:$0xff]
      %v755 = vld [vmem:[#allocation2 + $0x20] sm:$0xff]
      %v756 = vld [vmem:[#allocation2 + $0x30] sm:$0xff]
      %v757 = vld [vmem:[#allocation2 + $0x38] sm:$0xff]
      %v758 = vld [vmem:[#allocation2 + $0x48] sm:$0xff]
      %v759 = vld [vmem:[#allocation2 + $0x50] sm:$0xff]
      %v760 = vld [vmem:[#allocation2 + $0x60] sm:$0xff]
      %v761 = vld [vmem:[#allocation2 + $0x68] sm:$0xff]
      %v762 = vld [vmem:[#allocation2 + $0x78] sm:$0xff]
      %v763 = vld [vmem:[#allocation2 + $0x80] sm:$0xff]
      %v764 = vld [vmem:[#allocation2 + $0x90] sm:$0xff]
      %v765 = vld [vmem:[#allocation2 + $0x98] sm:$0xff]
      %v766 = vld [vmem:[#allocation2 + $0xa8] sm:$0xff]
      %v767 = vld [vmem:[#allocation2 + $0xb0] sm:$0xff]
      %v768 = vld [vmem:[#allocation2 + $0xc0] sm:$0xff]
      %v769 = vld [vmem:[#allocation2 + $0xc8] sm:$0xff]
      %v770 = vld [vmem:[#allocation2 + $0xd8] sm:$0xff]
      %v771 = vld [vmem:[#allocation2 + $0xe0] sm:$0xff]
      %v772 = vld [vmem:[#allocation2 + $0xf0] sm:$0xff]
      %v773 = vld [vmem:[#allocation2 + $0xf8] sm:$0xff]
      %v774 = vld [vmem:[#allocation2 + $0x108] sm:$0xff]
      %v775 = vld [vmem:[#allocation2 + $0x110] sm:$0xff]
      %v776 = vld [vmem:[#allocation2 + $0x120] sm:$0xff]
      %v777 = vld [vmem:[#allocation2 + $0x128] sm:$0xff]
      %v778 = vld [vmem:[#allocation2 + $0x138] sm:$0xff]
      %v779 = vld [vmem:[#allocation2 + $0x140] sm:$0xff]
      %v780 = vld [vmem:[#allocation2 + $0x150] sm:$0xff]
      %v781 = vld [vmem:[#allocation2 + $0x158] sm:$0xff]
      %v782 = vld [vmem:[#allocation2 + $0x168] sm:$0xff]
      %v783 = vld [vmem:[#allocation2 + $0x170] sm:$0xff]
      %v784 = vld [vmem:[#allocation2 + $0x1] sm:$0xff]
      %v785 = vld [vmem:[#allocation2 + $0x9] sm:$0xff]
      %v786 = vld [vmem:[#allocation2 + $0x19] sm:$0xff]
      %v787 = vld [vmem:[#allocation2 + $0x21] sm:$0xff]
      %v788 = vld [vmem:[#allocation2 + $0x31] sm:$0xff]
      %v789 = vld [vmem:[#allocation2 + $0x39] sm:$0xff]
      %v790 = vld [vmem:[#allocation2 + $0x49] sm:$0xff]
      %v791 = vld [vmem:[#allocation2 + $0x51] sm:$0xff]
      %v792 = vld [vmem:[#allocation2 + $0x61] sm:$0xff]
      %v793 = vld [vmem:[#allocation2 + $0x69] sm:$0xff]
      %v794 = vld [vmem:[#allocation2 + $0x79] sm:$0xff]
      %v795 = vld [vmem:[#allocation2 + $0x81] sm:$0xff]
      %v796 = vld [vmem:[#allocation2 + $0x91] sm:$0xff]
      %v797 = vld [vmem:[#allocation2 + $0x99] sm:$0xff]
      %v798 = vld [vmem:[#allocation2 + $0xa9] sm:$0xff]
      %v799 = vld [vmem:[#allocation2 + $0xb1] sm:$0xff]
      %v800 = vld [vmem:[#allocation2 + $0xc1] sm:$0xff]
      %v801 = vld [vmem:[#allocation2 + $0xc9] sm:$0xff]
      %v802 = vld [vmem:[#allocation2 + $0xd9] sm:$0xff]
      %v803 = vld [vmem:[#allocation2 + $0xe1] sm:$0xff]
      %v804 = vld [vmem:[#allocation2 + $0xf1] sm:$0xff]
      %v805 = vld [vmem:[#allocation2 + $0xf9] sm:$0xff]
      %v806 = vld [vmem:[#allocation2 + $0x109] sm:$0xff]
      %v807 = vld [vmem:[#allocation2 + $0x111] sm:$0xff]
      %v808 = vld [vmem:[#allocation2 + $0x121] sm:$0xff]
      %v809 = vld [vmem:[#allocation2 + $0x129] sm:$0xff]
      %v810 = vld [vmem:[#allocation2 + $0x139] sm:$0xff]
      %v811 = vld [vmem:[#allocation2 + $0x141] sm:$0xff]
      %v812 = vld [vmem:[#allocation2 + $0x151] sm:$0xff]
      %v813 = vld [vmem:[#allocation2 + $0x159] sm:$0xff]
      %v814 = vld [vmem:[#allocation2 + $0x169] sm:$0xff]
      %v815 = vld [vmem:[#allocation2 + $0x171] sm:$0xff]
      %v816 = vld [vmem:[#allocation2 + $0x2] sm:$0xff]
      %v817 = vld [vmem:[#allocation2 + $0xa] sm:$0xff]
      %v818 = vld [vmem:[#allocation2 + $0x1a] sm:$0xff]
      %v819 = vld [vmem:[#allocation2 + $0x22] sm:$0xff]
      %v820 = vld [vmem:[#allocation2 + $0x32] sm:$0xff]
      %v821 = vld [vmem:[#allocation2 + $0x3a] sm:$0xff]
      %v822 = vld [vmem:[#allocation2 + $0x4a] sm:$0xff]
      %v823 = vld [vmem:[#allocation2 + $0x52] sm:$0xff]
      %v824 = vld [vmem:[#allocation2 + $0x62] sm:$0xff]
      %v825 = vld [vmem:[#allocation2 + $0x6a] sm:$0xff]
      %v826 = vld [vmem:[#allocation2 + $0x7a] sm:$0xff]
      %v827 = vld [vmem:[#allocation2 + $0x82] sm:$0xff]
      %v828 = vld [vmem:[#allocation2 + $0x92] sm:$0xff]
      %v829 = vld [vmem:[#allocation2 + $0x9a] sm:$0xff]
      %v830 = vld [vmem:[#allocation2 + $0xaa] sm:$0xff]
      %v831 = vld [vmem:[#allocation2 + $0xb2] sm:$0xff]
      %v832 = vld [vmem:[#allocation2 + $0xc2] sm:$0xff]
      %v833 = vld [vmem:[#allocation2 + $0xca] sm:$0xff]
      %v834 = vld [vmem:[#allocation2 + $0xda] sm:$0xff]
      %v835 = vld [vmem:[#allocation2 + $0xe2] sm:$0xff]
      %v836 = vld [vmem:[#allocation2 + $0xf2] sm:$0xff]
      %v837 = vld [vmem:[#allocation2 + $0xfa] sm:$0xff]
      %v838 = vld [vmem:[#allocation2 + $0x10a] sm:$0xff]
      %v839 = vld [vmem:[#allocation2 + $0x112] sm:$0xff]
      %v840 = vld [vmem:[#allocation2 + $0x122] sm:$0xff]
      %v841 = vld [vmem:[#allocation2 + $0x12a] sm:$0xff]
      %v842 = vld [vmem:[#allocation2 + $0x13a] sm:$0xff]
      %v843 = vld [vmem:[#allocation2 + $0x142] sm:$0xff]
      %v844 = vld [vmem:[#allocation2 + $0x152] sm:$0xff]
      %v845 = vld [vmem:[#allocation2 + $0x15a] sm:$0xff]
      %v846 = vld [vmem:[#allocation2 + $0x16a] sm:$0xff]
      %v847 = vld [vmem:[#allocation2 + $0x172] sm:$0xff]
      %v848 = vld [vmem:[%s719] sm:$0xff]
      %v849 = vld [vmem:[%s719 + $0x8] sm:$0xff]
      %v850 = vld [vmem:[%s719 + $0x18] sm:$0xff]
      %v851 = vld [vmem:[%s719 + $0x20] sm:$0xff]
      %v852 = vld [vmem:[%s719 + $0x30] sm:$0xff]
      %v853 = vld [vmem:[%s719 + $0x38] sm:$0xff]
      %v854 = vld [vmem:[%s719 + $0x48] sm:$0xff]
      %v855 = vld [vmem:[%s719 + $0x50] sm:$0xff]
      %v856 = vld [vmem:[%s719 + $0x60] sm:$0xff]
      %v857 = vld [vmem:[%s719 + $0x68] sm:$0xff]
      %v858 = vld [vmem:[%s719 + $0x78] sm:$0xff]
      %v859 = vld [vmem:[%s719 + $0x80] sm:$0xff]
      %v860 = vld [vmem:[%s719 + $0x90] sm:$0xff]
      %v861 = vld [vmem:[%s719 + $0x98] sm:$0xff]
      %v862 = vld [vmem:[%s719 + $0xa8] sm:$0xff]
      %v863 = vld [vmem:[%s719 + $0xb0] sm:$0xff]
      %v864 = vld [vmem:[%s719 + $0xc0] sm:$0xff]
      %v865 = vld [vmem:[%s719 + $0xc8] sm:$0xff]
      %v866 = vld [vmem:[%s719 + $0xd8] sm:$0xff]
      %v867 = vld [vmem:[%s719 + $0xe0] sm:$0xff]
      %v868 = vld [vmem:[%s719 + $0xf0] sm:$0xff]
      %v869 = vld [vmem:[%s719 + $0xf8] sm:$0xff]
      %v870 = vld [vmem:[%s719 + $0x108] sm:$0xff]
      %v871 = vld [vmem:[%s719 + $0x110] sm:$0xff]
      %v872 = vld [vmem:[%s719 + $0x120] sm:$0xff]
      %v873 = vld [vmem:[%s719 + $0x128] sm:$0xff]
      %v874 = vld [vmem:[%s719 + $0x138] sm:$0xff]
      %v875 = vld [vmem:[%s719 + $0x140] sm:$0xff]
      %v876 = vld [vmem:[%s719 + $0x150] sm:$0xff]
      %v877 = vld [vmem:[%s719 + $0x158] sm:$0xff]
      %v878 = vld [vmem:[%s719 + $0x168] sm:$0xff]
      %v879 = vld [vmem:[%s719 + $0x170] sm:$0xff]
      %v880 = vld [vmem:[%s719 + $0x1] sm:$0xff]
      %v881 = vld [vmem:[%s719 + $0x9] sm:$0xff]
      %v882 = vld [vmem:[%s719 + $0x19] sm:$0xff]
      %v883 = vld [vmem:[%s719 + $0x21] sm:$0xff]
      %v884 = vld [vmem:[%s719 + $0x31] sm:$0xff]
      %v885 = vld [vmem:[%s719 + $0x39] sm:$0xff]
      %v886 = vld [vmem:[%s719 + $0x49] sm:$0xff]
      %v887 = vld [vmem:[%s719 + $0x51] sm:$0xff]
      %v888 = vld [vmem:[%s719 + $0x61] sm:$0xff]
      %v889 = vld [vmem:[%s719 + $0x69] sm:$0xff]
      %v890 = vld [vmem:[%s719 + $0x79] sm:$0xff]
      %v891 = vld [vmem:[%s719 + $0x81] sm:$0xff]
      %v892 = vld [vmem:[%s719 + $0x91] sm:$0xff]
      %v893 = vld [vmem:[%s719 + $0x99] sm:$0xff]
      %v894 = vld [vmem:[%s719 + $0xa9] sm:$0xff]
      %v895 = vld [vmem:[%s719 + $0xb1] sm:$0xff]
      %v896 = vld [vmem:[%s719 + $0xc1] sm:$0xff]
      %v897 = vld [vmem:[%s719 + $0xc9] sm:$0xff]
      %v898 = vld [vmem:[%s719 + $0xd9] sm:$0xff]
      %v899 = vld [vmem:[%s719 + $0xe1] sm:$0xff]
      %v900 = vld [vmem:[%s719 + $0xf1] sm:$0xff]
      %v901 = vld [vmem:[%s719 + $0xf9] sm:$0xff]
      %v902 = vld [vmem:[%s719 + $0x109] sm:$0xff]
      %v903 = vld [vmem:[%s719 + $0x111] sm:$0xff]
      %v904 = vld [vmem:[%s719 + $0x121] sm:$0xff]
      %v905 = vld [vmem:[%s719 + $0x129] sm:$0xff]
      %v906 = vld [vmem:[%s719 + $0x139] sm:$0xff]
      %v907 = vld [vmem:[%s719 + $0x141] sm:$0xff]
      %v908 = vld [vmem:[%s719 + $0x151] sm:$0xff]
      %v909 = vld [vmem:[%s719 + $0x159] sm:$0xff]
      %v910 = vld [vmem:[%s719 + $0x169] sm:$0xff]
      %v911 = vld [vmem:[%s719 + $0x171] sm:$0xff]
      %v912 = vld [vmem:[%s719 + $0x2] sm:$0xff]
      %v913 = vld [vmem:[%s719 + $0xa] sm:$0xff]
      %v914 = vld [vmem:[%s719 + $0x1a] sm:$0xff]
      %v915 = vld [vmem:[%s719 + $0x22] sm:$0xff]
      %v916 = vld [vmem:[%s719 + $0x32] sm:$0xff]
      %v917 = vld [vmem:[%s719 + $0x3a] sm:$0xff]
      %v918 = vld [vmem:[%s719 + $0x4a] sm:$0xff]
      %v919 = vld [vmem:[%s719 + $0x52] sm:$0xff]
      %v920 = vld [vmem:[%s719 + $0x62] sm:$0xff]
      %v921 = vld [vmem:[%s719 + $0x6a] sm:$0xff]
      %v922 = vld [vmem:[%s719 + $0x7a] sm:$0xff]
      %v923 = vld [vmem:[%s719 + $0x82] sm:$0xff]
      %v924 = vld [vmem:[%s719 + $0x92] sm:$0xff]
      %v925 = vld [vmem:[%s719 + $0x9a] sm:$0xff]
      %v926 = vld [vmem:[%s719 + $0xaa] sm:$0xff]
      %v927 = vld [vmem:[%s719 + $0xb2] sm:$0xff]
      %v928 = vld [vmem:[%s719 + $0xc2] sm:$0xff]
      %v929 = vld [vmem:[%s719 + $0xca] sm:$0xff]
      %v930 = vld [vmem:[%s719 + $0xda] sm:$0xff]
      %v931 = vld [vmem:[%s719 + $0xe2] sm:$0xff]
      %v932 = vld [vmem:[%s719 + $0xf2] sm:$0xff]
      %v933 = vld [vmem:[%s719 + $0xfa] sm:$0xff]
      %v934 = vld [vmem:[%s719 + $0x10a] sm:$0xff]
      %v935 = vld [vmem:[%s719 + $0x112] sm:$0xff]
      %v936 = vld [vmem:[%s719 + $0x122] sm:$0xff]
      %v937 = vld [vmem:[%s719 + $0x12a] sm:$0xff]
      %v938 = vld [vmem:[%s719 + $0x13a] sm:$0xff]
      %v939 = vld [vmem:[%s719 + $0x142] sm:$0xff]
      %v940 = vld [vmem:[%s719 + $0x152] sm:$0xff]
      %v941 = vld [vmem:[%s719 + $0x15a] sm:$0xff]
      %v942 = vld [vmem:[%s719 + $0x16a] sm:$0xff]
      %v943 = vld [vmem:[%s719 + $0x172] sm:$0xff]
      %s944 = scalar_lea.vmem [#allocation2], 48
      %v945 = vld [vmem:[%s944] sm:$0xff]
      %v946 = vld [vmem:[%s944 + $0x8] sm:$0xff]
      %v947 = vld [vmem:[%s944 + $0x18] sm:$0xff]
      %v948 = vld [vmem:[%s944 + $0x20] sm:$0xff]
      %v949 = vld [vmem:[%s944 + $0x30] sm:$0xff]
      %v950 = vld [vmem:[%s944 + $0x38] sm:$0xff]
      %v951 = vld [vmem:[%s944 + $0x48] sm:$0xff]
      %v952 = vld [vmem:[%s944 + $0x50] sm:$0xff]
      %v953 = vld [vmem:[%s944 + $0x60] sm:$0xff]
      %v954 = vld [vmem:[%s944 + $0x68] sm:$0xff]
      %v955 = vld [vmem:[%s944 + $0x78] sm:$0xff]
      %v956 = vld [vmem:[%s944 + $0x80] sm:$0xff]
      %v957 = vld [vmem:[%s944 + $0x90] sm:$0xff]
      %v958 = vld [vmem:[%s944 + $0x98] sm:$0xff]
      %v959 = vld [vmem:[%s944 + $0xa8] sm:$0xff]
      %v960 = vld [vmem:[%s944 + $0xb0] sm:$0xff]
      %v961 = vld [vmem:[%s944 + $0xc0] sm:$0xff]
      %v962 = vld [vmem:[%s944 + $0xc8] sm:$0xff]
      %v963 = vld [vmem:[%s944 + $0xd8] sm:$0xff]
      %v964 = vld [vmem:[%s944 + $0xe0] sm:$0xff]
      %v965 = vld [vmem:[%s944 + $0xf0] sm:$0xff]
      %v966 = vld [vmem:[%s944 + $0xf8] sm:$0xff]
      %v967 = vld [vmem:[%s944 + $0x108] sm:$0xff]
      %v968 = vld [vmem:[%s944 + $0x110] sm:$0xff]
      %v969 = vld [vmem:[%s944 + $0x120] sm:$0xff]
      %v970 = vld [vmem:[%s944 + $0x128] sm:$0xff]
      %v971 = vld [vmem:[%s944 + $0x138] sm:$0xff]
      %v972 = vld [vmem:[%s944 + $0x140] sm:$0xff]
      %v973 = vld [vmem:[%s944 + $0x150] sm:$0xff]
      %v974 = vld [vmem:[%s944 + $0x158] sm:$0xff]
      %v975 = vld [vmem:[%s944 + $0x168] sm:$0xff]
      %v976 = vld [vmem:[%s944 + $0x170] sm:$0xff]
      %v977 = vld [vmem:[%s944 + $0x1] sm:$0xff]
      %v978 = vld [vmem:[%s944 + $0x9] sm:$0xff]
      %v979 = vld [vmem:[%s944 + $0x19] sm:$0xff]
      %v980 = vld [vmem:[%s944 + $0x21] sm:$0xff]
      %v981 = vld [vmem:[%s944 + $0x31] sm:$0xff]
      %v982 = vld [vmem:[%s944 + $0x39] sm:$0xff]
      %v983 = vld [vmem:[%s944 + $0x49] sm:$0xff]
      %v984 = vld [vmem:[%s944 + $0x51] sm:$0xff]
      %v985 = vld [vmem:[%s944 + $0x61] sm:$0xff]
      %v986 = vld [vmem:[%s944 + $0x69] sm:$0xff]
      %v987 = vld [vmem:[%s944 + $0x79] sm:$0xff]
      %v988 = vld [vmem:[%s944 + $0x81] sm:$0xff]
      %v989 = vld [vmem:[%s944 + $0x91] sm:$0xff]
      %v990 = vld [vmem:[%s944 + $0x99] sm:$0xff]
      %v991 = vld [vmem:[%s944 + $0xa9] sm:$0xff]
      %v992 = vld [vmem:[%s944 + $0xb1] sm:$0xff]
      %v993 = vld [vmem:[%s944 + $0xc1] sm:$0xff]
      %v994 = vld [vmem:[%s944 + $0xc9] sm:$0xff]
      %v995 = vld [vmem:[%s944 + $0xd9] sm:$0xff]
      %v996 = vld [vmem:[%s944 + $0xe1] sm:$0xff]
      %v997 = vld [vmem:[%s944 + $0xf1] sm:$0xff]
      %v998 = vld [vmem:[%s944 + $0xf9] sm:$0xff]
      %v999 = vld [vmem:[%s944 + $0x109] sm:$0xff]
      %v1000 = vld [vmem:[%s944 + $0x111] sm:$0xff]
      %v1001 = vld [vmem:[%s944 + $0x121] sm:$0xff]
      %v1002 = vld [vmem:[%s944 + $0x129] sm:$0xff]
      %v1003 = vld [vmem:[%s944 + $0x139] sm:$0xff]
      %v1004 = vld [vmem:[%s944 + $0x141] sm:$0xff]
      %v1005 = vld [vmem:[%s944 + $0x151] sm:$0xff]
      %v1006 = vld [vmem:[%s944 + $0x159] sm:$0xff]
      %v1007 = vld [vmem:[%s944 + $0x169] sm:$0xff]
      %v1008 = vld [vmem:[%s944 + $0x171] sm:$0xff]
      %v1009 = vld [vmem:[%s944 + $0x2] sm:$0xff]
      %v1010 = vld [vmem:[%s944 + $0xa] sm:$0xff]
      %v1011 = vld [vmem:[%s944 + $0x1a] sm:$0xff]
      %v1012 = vld [vmem:[%s944 + $0x22] sm:$0xff]
      %v1013 = vld [vmem:[%s944 + $0x32] sm:$0xff]
      %v1014 = vld [vmem:[%s944 + $0x3a] sm:$0xff]
      %v1015 = vld [vmem:[%s944 + $0x4a] sm:$0xff]
      %v1016 = vld [vmem:[%s944 + $0x52] sm:$0xff]
      %v1017 = vld [vmem:[%s944 + $0x62] sm:$0xff]
      %v1018 = vld [vmem:[%s944 + $0x6a] sm:$0xff]
      %v1019 = vld [vmem:[%s944 + $0x7a] sm:$0xff]
      %v1020 = vld [vmem:[%s944 + $0x82] sm:$0xff]
      %v1021 = vld [vmem:[%s944 + $0x92] sm:$0xff]
      %v1022 = vld [vmem:[%s944 + $0x9a] sm:$0xff]
      %v1023 = vld [vmem:[%s944 + $0xaa] sm:$0xff]
      %v1024 = vld [vmem:[%s944 + $0xb2] sm:$0xff]
      %v1025 = vld [vmem:[%s944 + $0xc2] sm:$0xff]
      %v1026 = vld [vmem:[%s944 + $0xca] sm:$0xff]
      %v1027 = vld [vmem:[%s944 + $0xda] sm:$0xff]
      %v1028 = vld [vmem:[%s944 + $0xe2] sm:$0xff]
      %v1029 = vld [vmem:[%s944 + $0xf2] sm:$0xff]
      %v1030 = vld [vmem:[%s944 + $0xfa] sm:$0xff]
      %v1031 = vld [vmem:[%s944 + $0x10a] sm:$0xff]
      %v1032 = vld [vmem:[%s944 + $0x112] sm:$0xff]
      %v1033 = vld [vmem:[%s944 + $0x122] sm:$0xff]
      %v1034 = vld [vmem:[%s944 + $0x12a] sm:$0xff]
      %v1035 = vld [vmem:[%s944 + $0x13a] sm:$0xff]
      %v1036 = vld [vmem:[%s944 + $0x142] sm:$0xff]
      %v1037 = vld [vmem:[%s944 + $0x152] sm:$0xff]
      %v1038 = vld [vmem:[%s944 + $0x15a] sm:$0xff]
      %v1039 = vld [vmem:[%s944 + $0x16a] sm:$0xff]
      %v1040 = vld [vmem:[%s944 + $0x172] sm:$0xff]
      %1073 = vrot.lane.b32.xlu0 %v784, 32
      %v1074 = vpop.permute.xlu0 %1073
      %1075 = vrot.lane.b32.xlu0 %v785, 32
      %v1076 = vpop.permute.xlu0 %1075
      %1077 = vrot.lane.b32.xlu0 %v786, 32
      %v1078 = vpop.permute.xlu0 %1077
      %1079 = vrot.lane.b32.xlu0 %v787, 32
      %v1080 = vpop.permute.xlu0 %1079
      %1081 = vrot.lane.b32.xlu0 %v788, 32
      %v1082 = vpop.permute.xlu0 %1081
      %1083 = vrot.lane.b32.xlu0 %v789, 32
      %v1084 = vpop.permute.xlu0 %1083
      %1085 = vrot.lane.b32.xlu0 %v790, 32
      %v1086 = vpop.permute.xlu0 %1085
      %1087 = vrot.lane.b32.xlu0 %v791, 32
      %v1088 = vpop.permute.xlu0 %1087
      %1089 = vrot.lane.b32.xlu0 %v792, 32
      %v1090 = vpop.permute.xlu0 %1089
      %1091 = vrot.lane.b32.xlu0 %v793, 32
      %v1092 = vpop.permute.xlu0 %1091
      %1093 = vrot.lane.b32.xlu0 %v794, 32
      %v1094 = vpop.permute.xlu0 %1093
      %1095 = vrot.lane.b32.xlu0 %v795, 32
      %v1096 = vpop.permute.xlu0 %1095
      %1097 = vrot.lane.b32.xlu0 %v796, 32
      %v1098 = vpop.permute.xlu0 %1097
      %1099 = vrot.lane.b32.xlu0 %v797, 32
      %v1100 = vpop.permute.xlu0 %1099
      %1101 = vrot.lane.b32.xlu0 %v798, 32
      %v1102 = vpop.permute.xlu0 %1101
      %1103 = vrot.lane.b32.xlu0 %v799, 32
      %v1104 = vpop.permute.xlu0 %1103
      %1105 = vrot.lane.b32.xlu0 %v800, 32
      %v1106 = vpop.permute.xlu0 %1105
      %1107 = vrot.lane.b32.xlu0 %v801, 32
      %v1108 = vpop.permute.xlu0 %1107
      %1109 = vrot.lane.b32.xlu0 %v802, 32
      %v1110 = vpop.permute.xlu0 %1109
      %1111 = vrot.lane.b32.xlu0 %v803, 32
      %v1112 = vpop.permute.xlu0 %1111
      %1113 = vrot.lane.b32.xlu0 %v804, 32
      %v1114 = vpop.permute.xlu0 %1113
      %1115 = vrot.lane.b32.xlu0 %v805, 32
      %v1116 = vpop.permute.xlu0 %1115
      %1117 = vrot.lane.b32.xlu0 %v806, 32
      %v1118 = vpop.permute.xlu0 %1117
      %1119 = vrot.lane.b32.xlu0 %v807, 32
      %v1120 = vpop.permute.xlu0 %1119
      %1121 = vrot.lane.b32.xlu0 %v808, 32
      %v1122 = vpop.permute.xlu0 %1121
      %1123 = vrot.lane.b32.xlu0 %v809, 32
      %v1124 = vpop.permute.xlu0 %1123
      %1125 = vrot.lane.b32.xlu0 %v810, 32
      %v1126 = vpop.permute.xlu0 %1125
      %1127 = vrot.lane.b32.xlu0 %v811, 32
      %v1128 = vpop.permute.xlu0 %1127
      %1129 = vrot.lane.b32.xlu0 %v812, 32
      %v1130 = vpop.permute.xlu0 %1129
      %1131 = vrot.lane.b32.xlu0 %v813, 32
      %v1132 = vpop.permute.xlu0 %1131
      %1133 = vrot.lane.b32.xlu0 %v814, 32
      %v1134 = vpop.permute.xlu0 %1133
      %1135 = vrot.lane.b32.xlu0 %v815, 32
      %v1136 = vpop.permute.xlu0 %1135
      %1201 = vrot.lane.b32.xlu0 %v816, 64
      %v1202 = vpop.permute.xlu0 %1201
      %1203 = vrot.lane.b32.xlu0 %v817, 64
      %v1204 = vpop.permute.xlu0 %1203
      %1205 = vrot.lane.b32.xlu0 %v818, 64
      %v1206 = vpop.permute.xlu0 %1205
      %1207 = vrot.lane.b32.xlu0 %v819, 64
      %v1208 = vpop.permute.xlu0 %1207
      %1209 = vrot.lane.b32.xlu0 %v820, 64
      %v1210 = vpop.permute.xlu0 %1209
      %1211 = vrot.lane.b32.xlu0 %v821, 64
      %v1212 = vpop.permute.xlu0 %1211
      %1213 = vrot.lane.b32.xlu0 %v822, 64
      %v1214 = vpop.permute.xlu0 %1213
      %1215 = vrot.lane.b32.xlu0 %v823, 64
      %v1216 = vpop.permute.xlu0 %1215
      %1217 = vrot.lane.b32.xlu0 %v824, 64
      %v1218 = vpop.permute.xlu0 %1217
      %1219 = vrot.lane.b32.xlu0 %v825, 64
      %v1220 = vpop.permute.xlu0 %1219
      %1221 = vrot.lane.b32.xlu0 %v826, 64
      %v1222 = vpop.permute.xlu0 %1221
      %1223 = vrot.lane.b32.xlu0 %v827, 64
      %v1224 = vpop.permute.xlu0 %1223
      %1225 = vrot.lane.b32.xlu0 %v828, 64
      %v1226 = vpop.permute.xlu0 %1225
      %1227 = vrot.lane.b32.xlu0 %v829, 64
      %v1228 = vpop.permute.xlu0 %1227
      %1229 = vrot.lane.b32.xlu0 %v830, 64
      %v1230 = vpop.permute.xlu0 %1229
      %1231 = vrot.lane.b32.xlu0 %v831, 64
      %v1232 = vpop.permute.xlu0 %1231
      %1233 = vrot.lane.b32.xlu0 %v832, 64
      %v1234 = vpop.permute.xlu0 %1233
      %1235 = vrot.lane.b32.xlu0 %v833, 64
      %v1236 = vpop.permute.xlu0 %1235
      %1237 = vrot.lane.b32.xlu0 %v834, 64
      %v1238 = vpop.permute.xlu0 %1237
      %1239 = vrot.lane.b32.xlu0 %v835, 64
      %v1240 = vpop.permute.xlu0 %1239
      %1241 = vrot.lane.b32.xlu0 %v836, 64
      %v1242 = vpop.permute.xlu0 %1241
      %1243 = vrot.lane.b32.xlu0 %v837, 64
      %v1244 = vpop.permute.xlu0 %1243
      %1245 = vrot.lane.b32.xlu0 %v838, 64
      %v1246 = vpop.permute.xlu0 %1245
      %1247 = vrot.lane.b32.xlu0 %v839, 64
      %v1248 = vpop.permute.xlu0 %1247
      %1249 = vrot.lane.b32.xlu0 %v840, 64
      %v1250 = vpop.permute.xlu0 %1249
      %1251 = vrot.lane.b32.xlu0 %v841, 64
      %v1252 = vpop.permute.xlu0 %1251
      %1253 = vrot.lane.b32.xlu0 %v842, 64
      %v1254 = vpop.permute.xlu0 %1253
      %1255 = vrot.lane.b32.xlu0 %v843, 64
      %v1256 = vpop.permute.xlu0 %1255
      %1257 = vrot.lane.b32.xlu0 %v844, 64
      %v1258 = vpop.permute.xlu0 %1257
      %1259 = vrot.lane.b32.xlu0 %v845, 64
      %v1260 = vpop.permute.xlu0 %1259
      %1261 = vrot.lane.b32.xlu0 %v846, 64
      %v1262 = vpop.permute.xlu0 %1261
      %1263 = vrot.lane.b32.xlu0 %v847, 64
      %v1264 = vpop.permute.xlu0 %1263
      %1329 = vrot.lane.b32.xlu0 %v848, 96
      %v1330 = vpop.permute.xlu0 %1329
      %1331 = vrot.lane.b32.xlu0 %v849, 96
      %v1332 = vpop.permute.xlu0 %1331
      %1333 = vrot.lane.b32.xlu0 %v850, 96
      %v1334 = vpop.permute.xlu0 %1333
      %1335 = vrot.lane.b32.xlu0 %v851, 96
      %v1336 = vpop.permute.xlu0 %1335
      %1337 = vrot.lane.b32.xlu0 %v852, 96
      %v1338 = vpop.permute.xlu0 %1337
      %1339 = vrot.lane.b32.xlu0 %v853, 96
      %v1340 = vpop.permute.xlu0 %1339
      %1341 = vrot.lane.b32.xlu0 %v854, 96
      %v1342 = vpop.permute.xlu0 %1341
      %1343 = vrot.lane.b32.xlu0 %v855, 96
      %v1344 = vpop.permute.xlu0 %1343
      %1345 = vrot.lane.b32.xlu0 %v856, 96
      %v1346 = vpop.permute.xlu0 %1345
      %1347 = vrot.lane.b32.xlu0 %v857, 96
      %v1348 = vpop.permute.xlu0 %1347
      %1349 = vrot.lane.b32.xlu0 %v858, 96
      %v1350 = vpop.permute.xlu0 %1349
      %1351 = vrot.lane.b32.xlu0 %v859, 96
      %v1352 = vpop.permute.xlu0 %1351
      %1353 = vrot.lane.b32.xlu0 %v860, 96
      %v1354 = vpop.permute.xlu0 %1353
      %1355 = vrot.lane.b32.xlu0 %v861, 96
      %v1356 = vpop.permute.xlu0 %1355
      %1357 = vrot.lane.b32.xlu0 %v862, 96
      %v1358 = vpop.permute.xlu0 %1357
      %1359 = vrot.lane.b32.xlu0 %v863, 96
      %v1360 = vpop.permute.xlu0 %1359
      %1361 = vrot.lane.b32.xlu0 %v864, 96
      %v1362 = vpop.permute.xlu0 %1361
      %1363 = vrot.lane.b32.xlu0 %v865, 96
      %v1364 = vpop.permute.xlu0 %1363
      %1365 = vrot.lane.b32.xlu0 %v866, 96
      %v1366 = vpop.permute.xlu0 %1365
      %1367 = vrot.lane.b32.xlu0 %v867, 96
      %v1368 = vpop.permute.xlu0 %1367
      %1369 = vrot.lane.b32.xlu0 %v868, 96
      %v1370 = vpop.permute.xlu0 %1369
      %1371 = vrot.lane.b32.xlu0 %v869, 96
      %v1372 = vpop.permute.xlu0 %1371
      %1373 = vrot.lane.b32.xlu0 %v870, 96
      %v1374 = vpop.permute.xlu0 %1373
      %1375 = vrot.lane.b32.xlu0 %v871, 96
      %v1376 = vpop.permute.xlu0 %1375
      %1377 = vrot.lane.b32.xlu0 %v872, 96
      %v1378 = vpop.permute.xlu0 %1377
      %1379 = vrot.lane.b32.xlu0 %v873, 96
      %v1380 = vpop.permute.xlu0 %1379
      %1381 = vrot.lane.b32.xlu0 %v874, 96
      %v1382 = vpop.permute.xlu0 %1381
      %1383 = vrot.lane.b32.xlu0 %v875, 96
      %v1384 = vpop.permute.xlu0 %1383
      %1385 = vrot.lane.b32.xlu0 %v876, 96
      %v1386 = vpop.permute.xlu0 %1385
      %1387 = vrot.lane.b32.xlu0 %v877, 96
      %v1388 = vpop.permute.xlu0 %1387
      %1389 = vrot.lane.b32.xlu0 %v878, 96
      %v1390 = vpop.permute.xlu0 %1389
      %1391 = vrot.lane.b32.xlu0 %v879, 96
      %v1392 = vpop.permute.xlu0 %1391
      %1457 = vrot.lane.b32.xlu0 %v912, 32
      %v1458 = vpop.permute.xlu0 %1457
      %1459 = vrot.lane.b32.xlu0 %v913, 32
      %v1460 = vpop.permute.xlu0 %1459
      %1461 = vrot.lane.b32.xlu0 %v914, 32
      %v1462 = vpop.permute.xlu0 %1461
      %1463 = vrot.lane.b32.xlu0 %v915, 32
      %v1464 = vpop.permute.xlu0 %1463
      %1465 = vrot.lane.b32.xlu0 %v916, 32
      %v1466 = vpop.permute.xlu0 %1465
      %1467 = vrot.lane.b32.xlu0 %v917, 32
      %v1468 = vpop.permute.xlu0 %1467
      %1469 = vrot.lane.b32.xlu0 %v918, 32
      %v1470 = vpop.permute.xlu0 %1469
      %1471 = vrot.lane.b32.xlu0 %v919, 32
      %v1472 = vpop.permute.xlu0 %1471
      %1473 = vrot.lane.b32.xlu0 %v920, 32
      %v1474 = vpop.permute.xlu0 %1473
      %1475 = vrot.lane.b32.xlu0 %v921, 32
      %v1476 = vpop.permute.xlu0 %1475
      %1477 = vrot.lane.b32.xlu0 %v922, 32
      %v1478 = vpop.permute.xlu0 %1477
      %1479 = vrot.lane.b32.xlu0 %v923, 32
      %v1480 = vpop.permute.xlu0 %1479
      %1481 = vrot.lane.b32.xlu0 %v924, 32
      %v1482 = vpop.permute.xlu0 %1481
      %1483 = vrot.lane.b32.xlu0 %v925, 32
      %v1484 = vpop.permute.xlu0 %1483
      %1485 = vrot.lane.b32.xlu0 %v926, 32
      %v1486 = vpop.permute.xlu0 %1485
      %1487 = vrot.lane.b32.xlu0 %v927, 32
      %v1488 = vpop.permute.xlu0 %1487
      %1489 = vrot.lane.b32.xlu0 %v928, 32
      %v1490 = vpop.permute.xlu0 %1489
      %1491 = vrot.lane.b32.xlu0 %v929, 32
      %v1492 = vpop.permute.xlu0 %1491
      %1493 = vrot.lane.b32.xlu0 %v930, 32
      %v1494 = vpop.permute.xlu0 %1493
      %1495 = vrot.lane.b32.xlu0 %v931, 32
      %v1496 = vpop.permute.xlu0 %1495
      %1497 = vrot.lane.b32.xlu0 %v932, 32
      %v1498 = vpop.permute.xlu0 %1497
      %1499 = vrot.lane.b32.xlu0 %v933, 32
      %v1500 = vpop.permute.xlu0 %1499
      %1501 = vrot.lane.b32.xlu0 %v934, 32
      %v1502 = vpop.permute.xlu0 %1501
      %1503 = vrot.lane.b32.xlu0 %v935, 32
      %v1504 = vpop.permute.xlu0 %1503
      %1505 = vrot.lane.b32.xlu0 %v936, 32
      %v1506 = vpop.permute.xlu0 %1505
      %1507 = vrot.lane.b32.xlu0 %v937, 32
      %v1508 = vpop.permute.xlu0 %1507
      %1509 = vrot.lane.b32.xlu0 %v938, 32
      %v1510 = vpop.permute.xlu0 %1509
      %1511 = vrot.lane.b32.xlu0 %v939, 32
      %v1512 = vpop.permute.xlu0 %1511
      %1513 = vrot.lane.b32.xlu0 %v940, 32
      %v1514 = vpop.permute.xlu0 %1513
      %1515 = vrot.lane.b32.xlu0 %v941, 32
      %v1516 = vpop.permute.xlu0 %1515
      %1517 = vrot.lane.b32.xlu0 %v942, 32
      %v1518 = vpop.permute.xlu0 %1517
      %1519 = vrot.lane.b32.xlu0 %v943, 32
      %v1520 = vpop.permute.xlu0 %1519
      %1585 = vrot.lane.b32.xlu0 %v945, 64
      %v1586 = vpop.permute.xlu0 %1585
      %1587 = vrot.lane.b32.xlu0 %v946, 64
      %v1588 = vpop.permute.xlu0 %1587
      %1589 = vrot.lane.b32.xlu0 %v947, 64
      %v1590 = vpop.permute.xlu0 %1589
      %1591 = vrot.lane.b32.xlu0 %v948, 64
      %v1592 = vpop.permute.xlu0 %1591
      %1593 = vrot.lane.b32.xlu0 %v949, 64
      %v1594 = vpop.permute.xlu0 %1593
      %1595 = vrot.lane.b32.xlu0 %v950, 64
      %v1596 = vpop.permute.xlu0 %1595
      %1597 = vrot.lane.b32.xlu0 %v951, 64
      %v1598 = vpop.permute.xlu0 %1597
      %1599 = vrot.lane.b32.xlu0 %v952, 64
      %v1600 = vpop.permute.xlu0 %1599
      %1601 = vrot.lane.b32.xlu0 %v953, 64
      %v1602 = vpop.permute.xlu0 %1601
      %1603 = vrot.lane.b32.xlu0 %v954, 64
      %v1604 = vpop.permute.xlu0 %1603
      %1605 = vrot.lane.b32.xlu0 %v955, 64
      %v1606 = vpop.permute.xlu0 %1605
      %1607 = vrot.lane.b32.xlu0 %v956, 64
      %v1608 = vpop.permute.xlu0 %1607
      %1609 = vrot.lane.b32.xlu0 %v957, 64
      %v1610 = vpop.permute.xlu0 %1609
      %1611 = vrot.lane.b32.xlu0 %v958, 64
      %v1612 = vpop.permute.xlu0 %1611
      %1613 = vrot.lane.b32.xlu0 %v959, 64
      %v1614 = vpop.permute.xlu0 %1613
      %1615 = vrot.lane.b32.xlu0 %v960, 64
      %v1616 = vpop.permute.xlu0 %1615
      %1617 = vrot.lane.b32.xlu0 %v961, 64
      %v1618 = vpop.permute.xlu0 %1617
      %1619 = vrot.lane.b32.xlu0 %v962, 64
      %v1620 = vpop.permute.xlu0 %1619
      %1621 = vrot.lane.b32.xlu0 %v963, 64
      %v1622 = vpop.permute.xlu0 %1621
      %1623 = vrot.lane.b32.xlu0 %v964, 64
      %v1624 = vpop.permute.xlu0 %1623
      %1625 = vrot.lane.b32.xlu0 %v965, 64
      %v1626 = vpop.permute.xlu0 %1625
      %1627 = vrot.lane.b32.xlu0 %v966, 64
      %v1628 = vpop.permute.xlu0 %1627
      %1629 = vrot.lane.b32.xlu0 %v967, 64
      %v1630 = vpop.permute.xlu0 %1629
      %1631 = vrot.lane.b32.xlu0 %v968, 64
      %v1632 = vpop.permute.xlu0 %1631
      %1633 = vrot.lane.b32.xlu0 %v969, 64
      %v1634 = vpop.permute.xlu0 %1633
      %1635 = vrot.lane.b32.xlu0 %v970, 64
      %v1636 = vpop.permute.xlu0 %1635
      %1637 = vrot.lane.b32.xlu0 %v971, 64
      %v1638 = vpop.permute.xlu0 %1637
      %1639 = vrot.lane.b32.xlu0 %v972, 64
      %v1640 = vpop.permute.xlu0 %1639
      %1641 = vrot.lane.b32.xlu0 %v973, 64
      %v1642 = vpop.permute.xlu0 %1641
      %1643 = vrot.lane.b32.xlu0 %v974, 64
      %v1644 = vpop.permute.xlu0 %1643
      %1645 = vrot.lane.b32.xlu0 %v975, 64
      %v1646 = vpop.permute.xlu0 %1645
      %1647 = vrot.lane.b32.xlu0 %v976, 64
      %v1648 = vpop.permute.xlu0 %1647
      %1713 = vrot.lane.b32.xlu0 %v977, 96
      %v1714 = vpop.permute.xlu0 %1713
      %1715 = vrot.lane.b32.xlu0 %v978, 96
      %v1716 = vpop.permute.xlu0 %1715
      %1717 = vrot.lane.b32.xlu0 %v979, 96
      %v1718 = vpop.permute.xlu0 %1717
      %1719 = vrot.lane.b32.xlu0 %v980, 96
      %v1720 = vpop.permute.xlu0 %1719
      %1721 = vrot.lane.b32.xlu0 %v981, 96
      %v1722 = vpop.permute.xlu0 %1721
      %1723 = vrot.lane.b32.xlu0 %v982, 96
      %v1724 = vpop.permute.xlu0 %1723
      %1725 = vrot.lane.b32.xlu0 %v983, 96
      %v1726 = vpop.permute.xlu0 %1725
      %1727 = vrot.lane.b32.xlu0 %v984, 96
      %v1728 = vpop.permute.xlu0 %1727
      %1729 = vrot.lane.b32.xlu0 %v985, 96
      %v1730 = vpop.permute.xlu0 %1729
      %1731 = vrot.lane.b32.xlu0 %v986, 96
      %v1732 = vpop.permute.xlu0 %1731
      %1733 = vrot.lane.b32.xlu0 %v987, 96
      %v1734 = vpop.permute.xlu0 %1733
      %1735 = vrot.lane.b32.xlu0 %v988, 96
      %v1736 = vpop.permute.xlu0 %1735
      %1737 = vrot.lane.b32.xlu0 %v989, 96
      %v1738 = vpop.permute.xlu0 %1737
      %1739 = vrot.lane.b32.xlu0 %v990, 96
      %v1740 = vpop.permute.xlu0 %1739
      %1741 = vrot.lane.b32.xlu0 %v991, 96
      %v1742 = vpop.permute.xlu0 %1741
      %1743 = vrot.lane.b32.xlu0 %v992, 96
      %v1744 = vpop.permute.xlu0 %1743
      %1745 = vrot.lane.b32.xlu0 %v993, 96
      %v1746 = vpop.permute.xlu0 %1745
      %1747 = vrot.lane.b32.xlu0 %v994, 96
      %v1748 = vpop.permute.xlu0 %1747
      %1749 = vrot.lane.b32.xlu0 %v995, 96
      %v1750 = vpop.permute.xlu0 %1749
      %1751 = vrot.lane.b32.xlu0 %v996, 96
      %v1752 = vpop.permute.xlu0 %1751
      %1753 = vrot.lane.b32.xlu0 %v997, 96
      %v1754 = vpop.permute.xlu0 %1753
      %1755 = vrot.lane.b32.xlu0 %v998, 96
      %v1756 = vpop.permute.xlu0 %1755
      %1757 = vrot.lane.b32.xlu0 %v999, 96
      %v1758 = vpop.permute.xlu0 %1757
      %1759 = vrot.lane.b32.xlu0 %v1000, 96
      %v1760 = vpop.permute.xlu0 %1759
      %1761 = vrot.lane.b32.xlu0 %v1001, 96
      %v1762 = vpop.permute.xlu0 %1761
      %1763 = vrot.lane.b32.xlu0 %v1002, 96
      %v1764 = vpop.permute.xlu0 %1763
      %1765 = vrot.lane.b32.xlu0 %v1003, 96
      %v1766 = vpop.permute.xlu0 %1765
      %1767 = vrot.lane.b32.xlu0 %v1004, 96
      %v1768 = vpop.permute.xlu0 %1767
      %1769 = vrot.lane.b32.xlu0 %v1005, 96
      %v1770 = vpop.permute.xlu0 %1769
      %1771 = vrot.lane.b32.xlu0 %v1006, 96
      %v1772 = vpop.permute.xlu0 %1771
      %1773 = vrot.lane.b32.xlu0 %v1007, 96
      %v1774 = vpop.permute.xlu0 %1773
      %1775 = vrot.lane.b32.xlu0 %v1008, 96
      %v1776 = vpop.permute.xlu0 %1775
      %v1809 = vsel %vm380, %v752, %v1074
      %v1810 = vsel %vm380, %v753, %v1076
      %v1811 = vsel %vm380, %v754, %v1078
      %v1812 = vsel %vm380, %v755, %v1080
      %v1813 = vsel %vm380, %v756, %v1082
      %v1814 = vsel %vm380, %v757, %v1084
      %v1815 = vsel %vm380, %v758, %v1086
      %v1816 = vsel %vm380, %v759, %v1088
      %v1817 = vsel %vm380, %v760, %v1090
      %v1818 = vsel %vm380, %v761, %v1092
      %v1819 = vsel %vm380, %v762, %v1094
      %v1820 = vsel %vm380, %v763, %v1096
      %v1821 = vsel %vm380, %v764, %v1098
      %v1822 = vsel %vm380, %v765, %v1100
      %v1823 = vsel %vm380, %v766, %v1102
      %v1824 = vsel %vm380, %v767, %v1104
      %v1825 = vsel %vm380, %v768, %v1106
      %v1826 = vsel %vm380, %v769, %v1108
      %v1827 = vsel %vm380, %v770, %v1110
      %v1828 = vsel %vm380, %v771, %v1112
      %v1829 = vsel %vm380, %v772, %v1114
      %v1830 = vsel %vm380, %v773, %v1116
      %v1831 = vsel %vm380, %v774, %v1118
      %v1832 = vsel %vm380, %v775, %v1120
      %v1833 = vsel %vm380, %v776, %v1122
      %v1834 = vsel %vm380, %v777, %v1124
      %v1835 = vsel %vm380, %v778, %v1126
      %v1836 = vsel %vm380, %v779, %v1128
      %v1837 = vsel %vm380, %v780, %v1130
      %v1838 = vsel %vm380, %v781, %v1132
      %v1839 = vsel %vm380, %v782, %v1134
      %v1840 = vsel %vm380, %v783, %v1136
      %vm1841 = vcmask 523264
      %v1842 = vsel %vm1841, %v1809, %v1202
      %v1843 = vsel %vm1841, %v1810, %v1204
      %v1844 = vsel %vm1841, %v1811, %v1206
      %v1845 = vsel %vm1841, %v1812, %v1208
      %v1846 = vsel %vm1841, %v1813, %v1210
      %v1847 = vsel %vm1841, %v1814, %v1212
      %v1848 = vsel %vm1841, %v1815, %v1214
      %v1849 = vsel %vm1841, %v1816, %v1216
      %v1850 = vsel %vm1841, %v1817, %v1218
      %v1851 = vsel %vm1841, %v1818, %v1220
      %v1852 = vsel %vm1841, %v1819, %v1222
      %v1853 = vsel %vm1841, %v1820, %v1224
      %v1854 = vsel %vm1841, %v1821, %v1226
      %v1855 = vsel %vm1841, %v1822, %v1228
      %v1856 = vsel %vm1841, %v1823, %v1230
      %v1857 = vsel %vm1841, %v1824, %v1232
      %v1858 = vsel %vm1841, %v1825, %v1234
      %v1859 = vsel %vm1841, %v1826, %v1236
      %v1860 = vsel %vm1841, %v1827, %v1238
      %v1861 = vsel %vm1841, %v1828, %v1240
      %v1862 = vsel %vm1841, %v1829, %v1242
      %v1863 = vsel %vm1841, %v1830, %v1244
      %v1864 = vsel %vm1841, %v1831, %v1246
      %v1865 = vsel %vm1841, %v1832, %v1248
      %v1866 = vsel %vm1841, %v1833, %v1250
      %v1867 = vsel %vm1841, %v1834, %v1252
      %v1868 = vsel %vm1841, %v1835, %v1254
      %v1869 = vsel %vm1841, %v1836, %v1256
      %v1870 = vsel %vm1841, %v1837, %v1258
      %v1871 = vsel %vm1841, %v1838, %v1260
      %v1872 = vsel %vm1841, %v1839, %v1262
      %v1873 = vsel %vm1841, %v1840, %v1264
      %vm1874 = vcmask 785408
      %v1875 = vsel %vm1874, %v1842, %v1330
      %v1876 = vsel %vm1874, %v1843, %v1332
      %v1877 = vsel %vm1874, %v1844, %v1334
      %v1878 = vsel %vm1874, %v1845, %v1336
      %v1879 = vsel %vm1874, %v1846, %v1338
      %v1880 = vsel %vm1874, %v1847, %v1340
      %v1881 = vsel %vm1874, %v1848, %v1342
      %v1882 = vsel %vm1874, %v1849, %v1344
      %v1883 = vsel %vm1874, %v1850, %v1346
      %v1884 = vsel %vm1874, %v1851, %v1348
      %v1885 = vsel %vm1874, %v1852, %v1350
      %v1886 = vsel %vm1874, %v1853, %v1352
      %v1887 = vsel %vm1874, %v1854, %v1354
      %v1888 = vsel %vm1874, %v1855, %v1356
      %v1889 = vsel %vm1874, %v1856, %v1358
      %v1890 = vsel %vm1874, %v1857, %v1360
      %v1891 = vsel %vm1874, %v1858, %v1362
      %v1892 = vsel %vm1874, %v1859, %v1364
      %v1893 = vsel %vm1874, %v1860, %v1366
      %v1894 = vsel %vm1874, %v1861, %v1368
      %v1895 = vsel %vm1874, %v1862, %v1370
      %v1896 = vsel %vm1874, %v1863, %v1372
      %v1897 = vsel %vm1874, %v1864, %v1374
      %v1898 = vsel %vm1874, %v1865, %v1376
      %v1899 = vsel %vm1874, %v1866, %v1378
      %v1900 = vsel %vm1874, %v1867, %v1380
      %v1901 = vsel %vm1874, %v1868, %v1382
      %v1902 = vsel %vm1874, %v1869, %v1384
      %v1903 = vsel %vm1874, %v1870, %v1386
      %v1904 = vsel %vm1874, %v1871, %v1388
      %v1905 = vsel %vm1874, %v1872, %v1390
      %v1906 = vsel %vm1874, %v1873, %v1392
      %v1907 = vsel %vm380, %v880, %v1458
      %v1908 = vsel %vm380, %v881, %v1460
      %v1909 = vsel %vm380, %v882, %v1462
      %v1910 = vsel %vm380, %v883, %v1464
      %v1911 = vsel %vm380, %v884, %v1466
      %v1912 = vsel %vm380, %v885, %v1468
      %v1913 = vsel %vm380, %v886, %v1470
      %v1914 = vsel %vm380, %v887, %v1472
      %v1915 = vsel %vm380, %v888, %v1474
      %v1916 = vsel %vm380, %v889, %v1476
      %v1917 = vsel %vm380, %v890, %v1478
      %v1918 = vsel %vm380, %v891, %v1480
      %v1919 = vsel %vm380, %v892, %v1482
      %v1920 = vsel %vm380, %v893, %v1484
      %v1921 = vsel %vm380, %v894, %v1486
      %v1922 = vsel %vm380, %v895, %v1488
      %v1923 = vsel %vm380, %v896, %v1490
      %v1924 = vsel %vm380, %v897, %v1492
      %v1925 = vsel %vm380, %v898, %v1494
      %v1926 = vsel %vm380, %v899, %v1496
      %v1927 = vsel %vm380, %v900, %v1498
      %v1928 = vsel %vm380, %v901, %v1500
      %v1929 = vsel %vm380, %v902, %v1502
      %v1930 = vsel %vm380, %v903, %v1504
      %v1931 = vsel %vm380, %v904, %v1506
      %v1932 = vsel %vm380, %v905, %v1508
      %v1933 = vsel %vm380, %v906, %v1510
      %v1934 = vsel %vm380, %v907, %v1512
      %v1935 = vsel %vm380, %v908, %v1514
      %v1936 = vsel %vm380, %v909, %v1516
      %v1937 = vsel %vm380, %v910, %v1518
      %v1938 = vsel %vm380, %v911, %v1520
      %v1939 = vsel %vm1841, %v1907, %v1586
      %v1940 = vsel %vm1841, %v1908, %v1588
      %v1941 = vsel %vm1841, %v1909, %v1590
      %v1942 = vsel %vm1841, %v1910, %v1592
      %v1943 = vsel %vm1841, %v1911, %v1594
      %v1944 = vsel %vm1841, %v1912, %v1596
      %v1945 = vsel %vm1841, %v1913, %v1598
      %v1946 = vsel %vm1841, %v1914, %v1600
      %v1947 = vsel %vm1841, %v1915, %v1602
      %v1948 = vsel %vm1841, %v1916, %v1604
      %v1949 = vsel %vm1841, %v1917, %v1606
      %v1950 = vsel %vm1841, %v1918, %v1608
      %v1951 = vsel %vm1841, %v1919, %v1610
      %v1952 = vsel %vm1841, %v1920, %v1612
      %v1953 = vsel %vm1841, %v1921, %v1614
      %v1954 = vsel %vm1841, %v1922, %v1616
      %v1955 = vsel %vm1841, %v1923, %v1618
      %v1956 = vsel %vm1841, %v1924, %v1620
      %v1957 = vsel %vm1841, %v1925, %v1622
      %v1958 = vsel %vm1841, %v1926, %v1624
      %v1959 = vsel %vm1841, %v1927, %v1626
      %v1960 = vsel %vm1841, %v1928, %v1628
      %v1961 = vsel %vm1841, %v1929, %v1630
      %v1962 = vsel %vm1841, %v1930, %v1632
      %v1963 = vsel %vm1841, %v1931, %v1634
      %v1964 = vsel %vm1841, %v1932, %v1636
      %v1965 = vsel %vm1841, %v1933, %v1638
      %v1966 = vsel %vm1841, %v1934, %v1640
      %v1967 = vsel %vm1841, %v1935, %v1642
      %v1968 = vsel %vm1841, %v1936, %v1644
      %v1969 = vsel %vm1841, %v1937, %v1646
      %v1970 = vsel %vm1841, %v1938, %v1648
      %v1971 = vsel %vm1874, %v1939, %v1714
      %v1972 = vsel %vm1874, %v1940, %v1716
      %v1973 = vsel %vm1874, %v1941, %v1718
      %v1974 = vsel %vm1874, %v1942, %v1720
      %v1975 = vsel %vm1874, %v1943, %v1722
      %v1976 = vsel %vm1874, %v1944, %v1724
      %v1977 = vsel %vm1874, %v1945, %v1726
      %v1978 = vsel %vm1874, %v1946, %v1728
      %v1979 = vsel %vm1874, %v1947, %v1730
      %v1980 = vsel %vm1874, %v1948, %v1732
      %v1981 = vsel %vm1874, %v1949, %v1734
      %v1982 = vsel %vm1874, %v1950, %v1736
      %v1983 = vsel %vm1874, %v1951, %v1738
      %v1984 = vsel %vm1874, %v1952, %v1740
      %v1985 = vsel %vm1874, %v1953, %v1742
      %v1986 = vsel %vm1874, %v1954, %v1744
      %v1987 = vsel %vm1874, %v1955, %v1746
      %v1988 = vsel %vm1874, %v1956, %v1748
      %v1989 = vsel %vm1874, %v1957, %v1750
      %v1990 = vsel %vm1874, %v1958, %v1752
      %v1991 = vsel %vm1874, %v1959, %v1754
      %v1992 = vsel %vm1874, %v1960, %v1756
      %v1993 = vsel %vm1874, %v1961, %v1758
      %v1994 = vsel %vm1874, %v1962, %v1760
      %v1995 = vsel %vm1874, %v1963, %v1762
      %v1996 = vsel %vm1874, %v1964, %v1764
      %v1997 = vsel %vm1874, %v1965, %v1766
      %v1998 = vsel %vm1874, %v1966, %v1768
      %v1999 = vsel %vm1874, %v1967, %v1770
      %v2000 = vsel %vm1874, %v1968, %v1772
      %v2001 = vsel %vm1874, %v1969, %v1774
      %v2002 = vsel %vm1874, %v1970, %v1776
      %v2003 = vld [vmem:[%s4] sm:$0xff]
      %v2004 = vld [vmem:[%s4 + $0x8] sm:$0xff]
      %v2005 = vld [vmem:[%s4 + $0x10] sm:$0xff]
      %v2006 = vld [vmem:[%s4 + $0x18] sm:$0xff]
      %v2007 = vld [vmem:[%s4 + $0x20] sm:$0xff]
      %v2008 = vld [vmem:[%s4 + $0x28] sm:$0xff]
      %v2009 = vld [vmem:[%s4 + $0x30] sm:$0xff]
      %v2010 = vld [vmem:[%s4 + $0x38] sm:$0xff]
      %v2011 = vld [vmem:[%s4 + $0x40] sm:$0xff]
      %v2012 = vld [vmem:[%s4 + $0x48] sm:$0xff]
      %v2013 = vld [vmem:[%s4 + $0x50] sm:$0xff]
      %v2014 = vld [vmem:[%s4 + $0x58] sm:$0xff]
      %v2015 = vld [vmem:[%s4 + $0x60] sm:$0xff]
      %v2016 = vld [vmem:[%s4 + $0x68] sm:$0xff]
      %v2017 = vld [vmem:[%s4 + $0x70] sm:$0xff]
      %v2018 = vld [vmem:[%s4 + $0x78] sm:$0xff]
      %v2019 = vld [vmem:[%s4 + $0x80] sm:$0xff]
      %v2020 = vld [vmem:[%s4 + $0x88] sm:$0xff]
      %v2021 = vld [vmem:[%s4 + $0x90] sm:$0xff]
      %v2022 = vld [vmem:[%s4 + $0x98] sm:$0xff]
      %v2023 = vld [vmem:[%s4 + $0xa0] sm:$0xff]
      %v2024 = vld [vmem:[%s4 + $0xa8] sm:$0xff]
      %v2025 = vld [vmem:[%s4 + $0xb0] sm:$0xff]
      %v2026 = vld [vmem:[%s4 + $0xb8] sm:$0xff]
      %v2027 = vld [vmem:[%s4 + $0xc0] sm:$0xff]
      %v2028 = vld [vmem:[%s4 + $0xc8] sm:$0xff]
      %v2029 = vld [vmem:[%s4 + $0xd0] sm:$0xff]
      %v2030 = vld [vmem:[%s4 + $0xd8] sm:$0xff]
      %v2031 = vld [vmem:[%s4 + $0xe0] sm:$0xff]
      %v2032 = vld [vmem:[%s4 + $0xe8] sm:$0xff]
      %v2033 = vld [vmem:[%s4 + $0xf0] sm:$0xff]
      %v2034 = vld [vmem:[%s4 + $0xf8] sm:$0xff]
      %v2035 = vld [vmem:[%s4 + $0x100] sm:$0xff]
      %v2036 = vld [vmem:[%s4 + $0x108] sm:$0xff]
      %v2037 = vld [vmem:[%s4 + $0x110] sm:$0xff]
      %v2038 = vld [vmem:[%s4 + $0x118] sm:$0xff]
      %v2039 = vld [vmem:[%s5] sm:$0x1]
      %v2041 = vperm.slane %v2039, 0
      %v2044 = vsel %vm380, %v1009, 0
      %v2047 = vsel %vm380, %v1010, 0
      %v2050 = vsel %vm380, %v1011, 0
      %v2053 = vsel %vm380, %v1012, 0
      %v2056 = vsel %vm380, %v1013, 0
      %v2059 = vsel %vm380, %v1014, 0
      %v2062 = vsel %vm380, %v1015, 0
      %v2065 = vsel %vm380, %v1016, 0
      %v2068 = vsel %vm380, %v1017, 0
      %v2071 = vsel %vm380, %v1018, 0
      %v2074 = vsel %vm380, %v1019, 0
      %v2077 = vsel %vm380, %v1020, 0
      %v2080 = vsel %vm380, %v1021, 0
      %v2083 = vsel %vm380, %v1022, 0
      %v2086 = vsel %vm380, %v1023, 0
      %v2089 = vsel %vm380, %v1024, 0
      %v2092 = vsel %vm380, %v1025, 0
      %v2095 = vsel %vm380, %v1026, 0
      %v2098 = vsel %vm380, %v1027, 0
      %v2101 = vsel %vm380, %v1028, 0
      %v2104 = vsel %vm380, %v1029, 0
      %v2107 = vsel %vm380, %v1030, 0
      %v2110 = vsel %vm380, %v1031, 0
      %v2113 = vsel %vm380, %v1032, 0
      %v2116 = vsel %vm380, %v1033, 0
      %v2119 = vsel %vm380, %v1034, 0
      %v2122 = vsel %vm380, %v1035, 0
      %v2125 = vsel %vm380, %v1036, 0
      %v2128 = vsel %vm380, %v1037, 0
      %v2131 = vsel %vm380, %v1038, 0
      %v2134 = vsel %vm380, %v1039, 0
      %v2137 = vsel %vm380, %v1040, 0
      %2139 = vmatpush.msra.mxu0 %v2018
      %2140 = vmatpush.msra.mxu0 %v2017
      %2141 = vmatpush.msra.mxu0 %v2016
      %2142 = vmatpush.msra.mxu0 %v2015
      %2143 = vmatpush.msra.mxu0 %v2014
      %2144 = vmatpush.msra.mxu0 %v2013
      %2145 = vmatpush.msra.mxu0 %v2012
      %2146 = vmatpush.msra.mxu0 %v2011
      %2147 = vmatpush.msra.mxu0 %v2010
      %2148 = vmatpush.msra.mxu0 %v2009
      %2149 = vmatpush.msra.mxu0 %v2008
      %2150 = vmatpush.msra.mxu0 %v2007
      %2151 = vmatpush.msra.mxu0 %v2006
      %2152 = vmatpush.msra.mxu0 %v2005
      %2153 = vmatpush.msra.mxu0 %v2004
      %2154 = vmatpush.msra.mxu0 %v2003
      %2155 = vmatmul.f32.gmra.mxu0 %v1875
      %v2156 = vpop.f32.mrf.mxu0
      %v2157 = vadd.f32 %v2041, %v2156
      %2158 = vmatmul.f32.gmra.mxu0 %v1876
      %v2159 = vpop.f32.mrf.mxu0
      %v2160 = vadd.f32 %v2041, %v2159
      %2161 = vmatmul.f32.gmra.mxu0 %v1877
      %v2162 = vpop.f32.mrf.mxu0
      %v2163 = vadd.f32 %v2041, %v2162
      %2164 = vmatmul.f32.gmra.mxu0 %v1878
      %v2165 = vpop.f32.mrf.mxu0
      %v2166 = vadd.f32 %v2041, %v2165
      %2167 = vmatmul.f32.gmra.mxu0 %v1879
      %v2168 = vpop.f32.mrf.mxu0
      %v2169 = vadd.f32 %v2041, %v2168
      %2170 = vmatmul.f32.gmra.mxu0 %v1880
      %v2171 = vpop.f32.mrf.mxu0
      %v2172 = vadd.f32 %v2041, %v2171
      %2173 = vmatmul.f32.gmra.mxu0 %v1881
      %v2174 = vpop.f32.mrf.mxu0
      %v2175 = vadd.f32 %v2041, %v2174
      %2176 = vmatmul.f32.gmra.mxu0 %v1882
      %v2177 = vpop.f32.mrf.mxu0
      %v2178 = vadd.f32 %v2041, %v2177
      %2179 = vmatmul.f32.gmra.mxu0 %v1883
      %v2180 = vpop.f32.mrf.mxu0
      %v2181 = vadd.f32 %v2041, %v2180
      %2182 = vmatmul.f32.gmra.mxu0 %v1884
      %v2183 = vpop.f32.mrf.mxu0
      %v2184 = vadd.f32 %v2041, %v2183
      %2185 = vmatmul.f32.gmra.mxu0 %v1885
      %v2186 = vpop.f32.mrf.mxu0
      %v2187 = vadd.f32 %v2041, %v2186
      %2188 = vmatmul.f32.gmra.mxu0 %v1886
      %v2189 = vpop.f32.mrf.mxu0
      %v2190 = vadd.f32 %v2041, %v2189
      %2191 = vmatmul.f32.gmra.mxu0 %v1887
      %v2192 = vpop.f32.mrf.mxu0
      %v2193 = vadd.f32 %v2041, %v2192
      %2194 = vmatmul.f32.gmra.mxu0 %v1888
      %v2195 = vpop.f32.mrf.mxu0
      %v2196 = vadd.f32 %v2041, %v2195
      %2197 = vmatmul.f32.gmra.mxu0 %v1889
      %v2198 = vpop.f32.mrf.mxu0
      %v2199 = vadd.f32 %v2041, %v2198
      %2200 = vmatmul.f32.gmra.mxu0 %v1890
      %v2201 = vpop.f32.mrf.mxu0
      %v2202 = vadd.f32 %v2041, %v2201
      %2203 = vmatmul.f32.gmra.mxu0 %v1891
      %v2204 = vpop.f32.mrf.mxu0
      %v2205 = vadd.f32 %v2041, %v2204
      %2206 = vmatmul.f32.gmra.mxu0 %v1892
      %v2207 = vpop.f32.mrf.mxu0
      %v2208 = vadd.f32 %v2041, %v2207
      %2209 = vmatmul.f32.gmra.mxu0 %v1893
      %v2210 = vpop.f32.mrf.mxu0
      %v2211 = vadd.f32 %v2041, %v2210
      %2212 = vmatmul.f32.gmra.mxu0 %v1894
      %v2213 = vpop.f32.mrf.mxu0
      %v2214 = vadd.f32 %v2041, %v2213
      %2215 = vmatmul.f32.gmra.mxu0 %v1895
      %v2216 = vpop.f32.mrf.mxu0
      %v2217 = vadd.f32 %v2041, %v2216
      %2218 = vmatmul.f32.gmra.mxu0 %v1896
      %v2219 = vpop.f32.mrf.mxu0
      %v2220 = vadd.f32 %v2041, %v2219
      %2221 = vmatmul.f32.gmra.mxu0 %v1897
      %v2222 = vpop.f32.mrf.mxu0
      %v2223 = vadd.f32 %v2041, %v2222
      %2224 = vmatmul.f32.gmra.mxu0 %v1898
      %v2225 = vpop.f32.mrf.mxu0
      %v2226 = vadd.f32 %v2041, %v2225
      %2227 = vmatmul.f32.gmra.mxu0 %v1899
      %v2228 = vpop.f32.mrf.mxu0
      %v2229 = vadd.f32 %v2041, %v2228
      %2230 = vmatmul.f32.gmra.mxu0 %v1900
      %v2231 = vpop.f32.mrf.mxu0
      %v2232 = vadd.f32 %v2041, %v2231
      %2233 = vmatmul.f32.gmra.mxu0 %v1901
      %v2234 = vpop.f32.mrf.mxu0
      %v2235 = vadd.f32 %v2041, %v2234
      %2236 = vmatmul.f32.gmra.mxu0 %v1902
      %v2237 = vpop.f32.mrf.mxu0
      %v2238 = vadd.f32 %v2041, %v2237
      %2239 = vmatmul.f32.gmra.mxu0 %v1903
      %v2240 = vpop.f32.mrf.mxu0
      %v2241 = vadd.f32 %v2041, %v2240
      %2242 = vmatmul.f32.gmra.mxu0 %v1904
      %v2243 = vpop.f32.mrf.mxu0
      %v2244 = vadd.f32 %v2041, %v2243
      %2245 = vmatmul.f32.gmra.mxu0 %v1905
      %v2246 = vpop.f32.mrf.mxu0
      %v2247 = vadd.f32 %v2041, %v2246
      %2248 = vmatmul.f32.gmra.mxu0 %v1906
      %v2249 = vpop.f32.mrf.mxu0
      %v2250 = vadd.f32 %v2041, %v2249
      %2251 = vdwg.mxu0
      %2252 = vmatpush.msra.mxu0 %v2034
      %2253 = vmatpush.msra.mxu0 %v2033
      %2254 = vmatpush.msra.mxu0 %v2032
      %2255 = vmatpush.msra.mxu0 %v2031
      %2256 = vmatpush.msra.mxu0 %v2030
      %2257 = vmatpush.msra.mxu0 %v2029
      %2258 = vmatpush.msra.mxu0 %v2028
      %2259 = vmatpush.msra.mxu0 %v2027
      %2260 = vmatpush.msra.mxu0 %v2026
      %2261 = vmatpush.msra.mxu0 %v2025
      %2262 = vmatpush.msra.mxu0 %v2024
      %2263 = vmatpush.msra.mxu0 %v2023
      %2264 = vmatpush.msra.mxu0 %v2022
      %2265 = vmatpush.msra.mxu0 %v2021
      %2266 = vmatpush.msra.mxu0 %v2020
      %2267 = vmatpush.msra.mxu0 %v2019
      %2268 = vmatmul.f32.gmra.mxu0 %v1971
      %v2269 = vpop.f32.mrf.mxu0
      %v2270 = vadd.f32 %v2157, %v2269
      %2271 = vmatmul.f32.gmra.mxu0 %v1972
      %v2272 = vpop.f32.mrf.mxu0
      %v2273 = vadd.f32 %v2160, %v2272
      %2274 = vmatmul.f32.gmra.mxu0 %v1973
      %v2275 = vpop.f32.mrf.mxu0
      %v2276 = vadd.f32 %v2163, %v2275
      %2277 = vmatmul.f32.gmra.mxu0 %v1974
      %v2278 = vpop.f32.mrf.mxu0
      %v2279 = vadd.f32 %v2166, %v2278
      %2280 = vmatmul.f32.gmra.mxu0 %v1975
      %v2281 = vpop.f32.mrf.mxu0
      %v2282 = vadd.f32 %v2169, %v2281
      %2283 = vmatmul.f32.gmra.mxu0 %v1976
      %v2284 = vpop.f32.mrf.mxu0
      %v2285 = vadd.f32 %v2172, %v2284
      %2286 = vmatmul.f32.gmra.mxu0 %v1977
      %v2287 = vpop.f32.mrf.mxu0
      %v2288 = vadd.f32 %v2175, %v2287
      %2289 = vmatmul.f32.gmra.mxu0 %v1978
      %v2290 = vpop.f32.mrf.mxu0
      %v2291 = vadd.f32 %v2178, %v2290
      %2292 = vmatmul.f32.gmra.mxu0 %v1979
      %v2293 = vpop.f32.mrf.mxu0
      %v2294 = vadd.f32 %v2181, %v2293
      %2295 = vmatmul.f32.gmra.mxu0 %v1980
      %v2296 = vpop.f32.mrf.mxu0
      %v2297 = vadd.f32 %v2184, %v2296
      %2298 = vmatmul.f32.gmra.mxu0 %v1981
      %v2299 = vpop.f32.mrf.mxu0
      %v2300 = vadd.f32 %v2187, %v2299
      %2301 = vmatmul.f32.gmra.mxu0 %v1982
      %v2302 = vpop.f32.mrf.mxu0
      %v2303 = vadd.f32 %v2190, %v2302
      %2304 = vmatmul.f32.gmra.mxu0 %v1983
      %v2305 = vpop.f32.mrf.mxu0
      %v2306 = vadd.f32 %v2193, %v2305
      %2307 = vmatmul.f32.gmra.mxu0 %v1984
      %v2308 = vpop.f32.mrf.mxu0
      %v2309 = vadd.f32 %v2196, %v2308
      %2310 = vmatmul.f32.gmra.mxu0 %v1985
      %v2311 = vpop.f32.mrf.mxu0
      %v2312 = vadd.f32 %v2199, %v2311
      %2313 = vmatmul.f32.gmra.mxu0 %v1986
      %v2314 = vpop.f32.mrf.mxu0
      %v2315 = vadd.f32 %v2202, %v2314
      %2316 = vmatmul.f32.gmra.mxu0 %v1987
      %v2317 = vpop.f32.mrf.mxu0
      %v2318 = vadd.f32 %v2205, %v2317
      %2319 = vmatmul.f32.gmra.mxu0 %v1988
      %v2320 = vpop.f32.mrf.mxu0
      %v2321 = vadd.f32 %v2208, %v2320
      %2322 = vmatmul.f32.gmra.mxu0 %v1989
      %v2323 = vpop.f32.mrf.mxu0
      %v2324 = vadd.f32 %v2211, %v2323
      %2325 = vmatmul.f32.gmra.mxu0 %v1990
      %v2326 = vpop.f32.mrf.mxu0
      %v2327 = vadd.f32 %v2214, %v2326
      %2328 = vmatmul.f32.gmra.mxu0 %v1991
      %v2329 = vpop.f32.mrf.mxu0
      %v2330 = vadd.f32 %v2217, %v2329
      %2331 = vmatmul.f32.gmra.mxu0 %v1992
      %v2332 = vpop.f32.mrf.mxu0
      %v2333 = vadd.f32 %v2220, %v2332
      %2334 = vmatmul.f32.gmra.mxu0 %v1993
      %v2335 = vpop.f32.mrf.mxu0
      %v2336 = vadd.f32 %v2223, %v2335
      %2337 = vmatmul.f32.gmra.mxu0 %v1994
      %v2338 = vpop.f32.mrf.mxu0
      %v2339 = vadd.f32 %v2226, %v2338
      %2340 = vmatmul.f32.gmra.mxu0 %v1995
      %v2341 = vpop.f32.mrf.mxu0
      %v2342 = vadd.f32 %v2229, %v2341
      %2343 = vmatmul.f32.gmra.mxu0 %v1996
      %v2344 = vpop.f32.mrf.mxu0
      %v2345 = vadd.f32 %v2232, %v2344
      %2346 = vmatmul.f32.gmra.mxu0 %v1997
      %v2347 = vpop.f32.mrf.mxu0
      %v2348 = vadd.f32 %v2235, %v2347
      %2349 = vmatmul.f32.gmra.mxu0 %v1998
      %v2350 = vpop.f32.mrf.mxu0
      %v2351 = vadd.f32 %v2238, %v2350
      %2352 = vmatmul.f32.gmra.mxu0 %v1999
      %v2353 = vpop.f32.mrf.mxu0
      %v2354 = vadd.f32 %v2241, %v2353
      %2355 = vmatmul.f32.gmra.mxu0 %v2000
      %v2356 = vpop.f32.mrf.mxu0
      %v2357 = vadd.f32 %v2244, %v2356
      %2358 = vmatmul.f32.gmra.mxu0 %v2001
      %v2359 = vpop.f32.mrf.mxu0
      %v2360 = vadd.f32 %v2247, %v2359
      %2361 = vmatmul.f32.gmra.mxu0 %v2002
      %v2362 = vpop.f32.mrf.mxu0
      %v2363 = vadd.f32 %v2250, %v2362
      %2364 = vdwg.mxu0
      %2365 = vmatpush.msra.mxu0 0.0
      %2366 = vmatpush.msra.mxu0 0.0
      %2367 = vmatpush.msra.mxu0 0.0
      %2368 = vmatpush.msra.mxu0 0.0
      %2369 = vmatpush.msra.mxu0 0.0
      %2370 = vmatpush.msra.mxu0 0.0
      %2371 = vmatpush.msra.mxu0 0.0
      %2372 = vmatpush.msra.mxu0 0.0
      %2373 = vmatpush.msra.mxu0 0.0
      %2374 = vmatpush.msra.mxu0 0.0
      %2375 = vmatpush.msra.mxu0 0.0
      %2376 = vmatpush.msra.mxu0 0.0
      %2377 = vmatpush.msra.mxu0 %v2038
      %2378 = vmatpush.msra.mxu0 %v2037
      %2379 = vmatpush.msra.mxu0 %v2036
      %2380 = vmatpush.msra.mxu0 %v2035
      %2381 = vmatmul.f32.gmra.mxu0 %v2044
      %v2382 = vpop.f32.mrf.mxu0
      %v2383 = vadd.f32 %v2270, %v2382
      %2384 = vmatmul.f32.gmra.mxu0 %v2047
      %v2385 = vpop.f32.mrf.mxu0
      %v2386 = vadd.f32 %v2273, %v2385
      %2387 = vmatmul.f32.gmra.mxu0 %v2050
      %v2388 = vpop.f32.mrf.mxu0
      %v2389 = vadd.f32 %v2276, %v2388
      %2390 = vmatmul.f32.gmra.mxu0 %v2053
      %v2391 = vpop.f32.mrf.mxu0
      %v2392 = vadd.f32 %v2279, %v2391
      %2393 = vmatmul.f32.gmra.mxu0 %v2056
      %v2394 = vpop.f32.mrf.mxu0
      %v2395 = vadd.f32 %v2282, %v2394
      %2396 = vmatmul.f32.gmra.mxu0 %v2059
      %v2397 = vpop.f32.mrf.mxu0
      %v2398 = vadd.f32 %v2285, %v2397
      %2399 = vmatmul.f32.gmra.mxu0 %v2062
      %v2400 = vpop.f32.mrf.mxu0
      %v2401 = vadd.f32 %v2288, %v2400
      %2402 = vmatmul.f32.gmra.mxu0 %v2065
      %v2403 = vpop.f32.mrf.mxu0
      %v2404 = vadd.f32 %v2291, %v2403
      %2405 = vmatmul.f32.gmra.mxu0 %v2068
      %v2406 = vpop.f32.mrf.mxu0
      %v2407 = vadd.f32 %v2294, %v2406
      %2408 = vmatmul.f32.gmra.mxu0 %v2071
      %v2409 = vpop.f32.mrf.mxu0
      %v2410 = vadd.f32 %v2297, %v2409
      %2411 = vmatmul.f32.gmra.mxu0 %v2074
      %v2412 = vpop.f32.mrf.mxu0
      %v2413 = vadd.f32 %v2300, %v2412
      %2414 = vmatmul.f32.gmra.mxu0 %v2077
      %v2415 = vpop.f32.mrf.mxu0
      %v2416 = vadd.f32 %v2303, %v2415
      %2417 = vmatmul.f32.gmra.mxu0 %v2080
      %v2418 = vpop.f32.mrf.mxu0
      %v2419 = vadd.f32 %v2306, %v2418
      %2420 = vmatmul.f32.gmra.mxu0 %v2083
      %v2421 = vpop.f32.mrf.mxu0
      %v2422 = vadd.f32 %v2309, %v2421
      %2423 = vmatmul.f32.gmra.mxu0 %v2086
      %v2424 = vpop.f32.mrf.mxu0
      %v2425 = vadd.f32 %v2312, %v2424
      %2426 = vmatmul.f32.gmra.mxu0 %v2089
      %v2427 = vpop.f32.mrf.mxu0
      %v2428 = vadd.f32 %v2315, %v2427
      %2429 = vmatmul.f32.gmra.mxu0 %v2092
      %v2430 = vpop.f32.mrf.mxu0
      %v2431 = vadd.f32 %v2318, %v2430
      %2432 = vmatmul.f32.gmra.mxu0 %v2095
      %v2433 = vpop.f32.mrf.mxu0
      %v2434 = vadd.f32 %v2321, %v2433
      %2435 = vmatmul.f32.gmra.mxu0 %v2098
      %v2436 = vpop.f32.mrf.mxu0
      %v2437 = vadd.f32 %v2324, %v2436
      %2438 = vmatmul.f32.gmra.mxu0 %v2101
      %v2439 = vpop.f32.mrf.mxu0
      %v2440 = vadd.f32 %v2327, %v2439
      %2441 = vmatmul.f32.gmra.mxu0 %v2104
      %v2442 = vpop.f32.mrf.mxu0
      %v2443 = vadd.f32 %v2330, %v2442
      %2444 = vmatmul.f32.gmra.mxu0 %v2107
      %v2445 = vpop.f32.mrf.mxu0
      %v2446 = vadd.f32 %v2333, %v2445
      %2447 = vmatmul.f32.gmra.mxu0 %v2110
      %v2448 = vpop.f32.mrf.mxu0
      %v2449 = vadd.f32 %v2336, %v2448
      %2450 = vmatmul.f32.gmra.mxu0 %v2113
      %v2451 = vpop.f32.mrf.mxu0
      %v2452 = vadd.f32 %v2339, %v2451
      %2453 = vmatmul.f32.gmra.mxu0 %v2116
      %v2454 = vpop.f32.mrf.mxu0
      %v2455 = vadd.f32 %v2342, %v2454
      %2456 = vmatmul.f32.gmra.mxu0 %v2119
      %v2457 = vpop.f32.mrf.mxu0
      %v2458 = vadd.f32 %v2345, %v2457
      %2459 = vmatmul.f32.gmra.mxu0 %v2122
      %v2460 = vpop.f32.mrf.mxu0
      %v2461 = vadd.f32 %v2348, %v2460
      %2462 = vmatmul.f32.gmra.mxu0 %v2125
      %v2463 = vpop.f32.mrf.mxu0
      %v2464 = vadd.f32 %v2351, %v2463
      %2465 = vmatmul.f32.gmra.mxu0 %v2128
      %v2466 = vpop.f32.mrf.mxu0
      %v2467 = vadd.f32 %v2354, %v2466
      %2468 = vmatmul.f32.gmra.mxu0 %v2131
      %v2469 = vpop.f32.mrf.mxu0
      %v2470 = vadd.f32 %v2357, %v2469
      %2471 = vmatmul.f32.gmra.mxu0 %v2134
      %v2472 = vpop.f32.mrf.mxu0
      %v2473 = vadd.f32 %v2360, %v2472
      %2474 = vmatmul.f32.gmra.mxu0 %v2137
      %v2475 = vpop.f32.mrf.mxu0
      %v2476 = vadd.f32 %v2363, %v2475
      %2477 = vdwg.mxu0
      %v2478 = vmax.f32 %v2383, 0.0
      %v2479 = vmax.f32 %v2386, 0.0
      %v2480 = vmax.f32 %v2389, 0.0
      %v2481 = vmax.f32 %v2392, 0.0
      %v2482 = vmax.f32 %v2395, 0.0
      %v2483 = vmax.f32 %v2398, 0.0
      %v2484 = vmax.f32 %v2401, 0.0
      %v2485 = vmax.f32 %v2404, 0.0
      %v2486 = vmax.f32 %v2407, 0.0
      %v2487 = vmax.f32 %v2410, 0.0
      %v2488 = vmax.f32 %v2413, 0.0
      %v2489 = vmax.f32 %v2416, 0.0
      %v2490 = vmax.f32 %v2419, 0.0
      %v2491 = vmax.f32 %v2422, 0.0
      %v2492 = vmax.f32 %v2425, 0.0
      %v2493 = vmax.f32 %v2428, 0.0
      %v2494 = vmax.f32 %v2431, 0.0
      %v2495 = vmax.f32 %v2434, 0.0
      %v2496 = vmax.f32 %v2437, 0.0
      %v2497 = vmax.f32 %v2440, 0.0
      %v2498 = vmax.f32 %v2443, 0.0
      %v2499 = vmax.f32 %v2446, 0.0
      %v2500 = vmax.f32 %v2449, 0.0
      %v2501 = vmax.f32 %v2452, 0.0
      %v2502 = vmax.f32 %v2455, 0.0
      %v2503 = vmax.f32 %v2458, 0.0
      %v2504 = vmax.f32 %v2461, 0.0
      %v2505 = vmax.f32 %v2464, 0.0
      %v2506 = vmax.f32 %v2467, 0.0
      %v2507 = vmax.f32 %v2470, 0.0
      %v2508 = vmax.f32 %v2473, 0.0
      %v2509 = vmax.f32 %v2476, 0.0
      %2510 = vst.msk [vmem:[%s719 + $0x1] sm:$0xff] %vm380, %v2478
      %2511 = vst.msk [vmem:[%s719 + $0x9] sm:$0xff] %vm380, %v2479
      %2512 = vst.msk [vmem:[%s719 + $0x19] sm:$0xff] %vm380, %v2480
      %2513 = vst.msk [vmem:[%s719 + $0x21] sm:$0xff] %vm380, %v2481
      %2514 = vst.msk [vmem:[%s719 + $0x31] sm:$0xff] %vm380, %v2482
      %2515 = vst.msk [vmem:[%s719 + $0x39] sm:$0xff] %vm380, %v2483
      %2516 = vst.msk [vmem:[%s719 + $0x49] sm:$0xff] %vm380, %v2484
      %2517 = vst.msk [vmem:[%s719 + $0x51] sm:$0xff] %vm380, %v2485
      %2518 = vst.msk [vmem:[%s719 + $0x61] sm:$0xff] %vm380, %v2486
      %2519 = vst.msk [vmem:[%s719 + $0x69] sm:$0xff] %vm380, %v2487
      %2520 = vst.msk [vmem:[%s719 + $0x79] sm:$0xff] %vm380, %v2488
      %2521 = vst.msk [vmem:[%s719 + $0x81] sm:$0xff] %vm380, %v2489
      %2522 = vst.msk [vmem:[%s719 + $0x91] sm:$0xff] %vm380, %v2490
      %2523 = vst.msk [vmem:[%s719 + $0x99] sm:$0xff] %vm380, %v2491
      %2524 = vst.msk [vmem:[%s719 + $0xa9] sm:$0xff] %vm380, %v2492
      %2525 = vst.msk [vmem:[%s719 + $0xb1] sm:$0xff] %vm380, %v2493
      %2526 = vst.msk [vmem:[%s719 + $0xc1] sm:$0xff] %vm380, %v2494
      %2527 = vst.msk [vmem:[%s719 + $0xc9] sm:$0xff] %vm380, %v2495
      %2528 = vst.msk [vmem:[%s719 + $0xd9] sm:$0xff] %vm380, %v2496
      %2529 = vst.msk [vmem:[%s719 + $0xe1] sm:$0xff] %vm380, %v2497
      %2530 = vst.msk [vmem:[%s719 + $0xf1] sm:$0xff] %vm380, %v2498
      %2531 = vst.msk [vmem:[%s719 + $0xf9] sm:$0xff] %vm380, %v2499
      %2532 = vst.msk [vmem:[%s719 + $0x109] sm:$0xff] %vm380, %v2500
      %2533 = vst.msk [vmem:[%s719 + $0x111] sm:$0xff] %vm380, %v2501
      %2534 = vst.msk [vmem:[%s719 + $0x121] sm:$0xff] %vm380, %v2502
      %2535 = vst.msk [vmem:[%s719 + $0x129] sm:$0xff] %vm380, %v2503
      %2536 = vst.msk [vmem:[%s719 + $0x139] sm:$0xff] %vm380, %v2504
      %2537 = vst.msk [vmem:[%s719 + $0x141] sm:$0xff] %vm380, %v2505
      %2538 = vst.msk [vmem:[%s719 + $0x151] sm:$0xff] %vm380, %v2506
      %2539 = vst.msk [vmem:[%s719 + $0x159] sm:$0xff] %vm380, %v2507
      %2540 = vst.msk [vmem:[%s719 + $0x169] sm:$0xff] %vm380, %v2508
      %2541 = vst.msk [vmem:[%s719 + $0x171] sm:$0xff] %vm380, %v2509
      %v2542 = vld [vmem:[#allocation2] sm:$0xff]
      %v2543 = vld [vmem:[#allocation2 + $0x8] sm:$0xff]
      %v2544 = vld [vmem:[#allocation2 + $0x18] sm:$0xff]
      %v2545 = vld [vmem:[#allocation2 + $0x20] sm:$0xff]
      %v2546 = vld [vmem:[#allocation2 + $0x30] sm:$0xff]
      %v2547 = vld [vmem:[#allocation2 + $0x38] sm:$0xff]
      %v2548 = vld [vmem:[#allocation2 + $0x48] sm:$0xff]
      %v2549 = vld [vmem:[#allocation2 + $0x50] sm:$0xff]
      %v2550 = vld [vmem:[#allocation2 + $0x60] sm:$0xff]
      %v2551 = vld [vmem:[#allocation2 + $0x68] sm:$0xff]
      %v2552 = vld [vmem:[#allocation2 + $0x78] sm:$0xff]
      %v2553 = vld [vmem:[#allocation2 + $0x80] sm:$0xff]
      %v2554 = vld [vmem:[#allocation2 + $0x90] sm:$0xff]
      %v2555 = vld [vmem:[#allocation2 + $0x98] sm:$0xff]
      %v2556 = vld [vmem:[#allocation2 + $0xa8] sm:$0xff]
      %v2557 = vld [vmem:[#allocation2 + $0xb0] sm:$0xff]
      %v2558 = vld [vmem:[#allocation2 + $0xc0] sm:$0xff]
      %v2559 = vld [vmem:[#allocation2 + $0xc8] sm:$0xff]
      %v2560 = vld [vmem:[#allocation2 + $0xd8] sm:$0xff]
      %v2561 = vld [vmem:[#allocation2 + $0xe0] sm:$0xff]
      %v2562 = vld [vmem:[#allocation2 + $0xf0] sm:$0xff]
      %v2563 = vld [vmem:[#allocation2 + $0xf8] sm:$0xff]
      %v2564 = vld [vmem:[#allocation2 + $0x108] sm:$0xff]
      %v2565 = vld [vmem:[#allocation2 + $0x110] sm:$0xff]
      %v2566 = vld [vmem:[#allocation2 + $0x120] sm:$0xff]
      %v2567 = vld [vmem:[#allocation2 + $0x128] sm:$0xff]
      %v2568 = vld [vmem:[#allocation2 + $0x138] sm:$0xff]
      %v2569 = vld [vmem:[#allocation2 + $0x140] sm:$0xff]
      %v2570 = vld [vmem:[#allocation2 + $0x150] sm:$0xff]
      %v2571 = vld [vmem:[#allocation2 + $0x158] sm:$0xff]
      %v2572 = vld [vmem:[#allocation2 + $0x168] sm:$0xff]
      %v2573 = vld [vmem:[#allocation2 + $0x170] sm:$0xff]
      %v2574 = vld [vmem:[#allocation2 + $0x1] sm:$0xff]
      %v2575 = vld [vmem:[#allocation2 + $0x9] sm:$0xff]
      %v2576 = vld [vmem:[#allocation2 + $0x19] sm:$0xff]
      %v2577 = vld [vmem:[#allocation2 + $0x21] sm:$0xff]
      %v2578 = vld [vmem:[#allocation2 + $0x31] sm:$0xff]
      %v2579 = vld [vmem:[#allocation2 + $0x39] sm:$0xff]
      %v2580 = vld [vmem:[#allocation2 + $0x49] sm:$0xff]
      %v2581 = vld [vmem:[#allocation2 + $0x51] sm:$0xff]
      %v2582 = vld [vmem:[#allocation2 + $0x61] sm:$0xff]
      %v2583 = vld [vmem:[#allocation2 + $0x69] sm:$0xff]
      %v2584 = vld [vmem:[#allocation2 + $0x79] sm:$0xff]
      %v2585 = vld [vmem:[#allocation2 + $0x81] sm:$0xff]
      %v2586 = vld [vmem:[#allocation2 + $0x91] sm:$0xff]
      %v2587 = vld [vmem:[#allocation2 + $0x99] sm:$0xff]
      %v2588 = vld [vmem:[#allocation2 + $0xa9] sm:$0xff]
      %v2589 = vld [vmem:[#allocation2 + $0xb1] sm:$0xff]
      %v2590 = vld [vmem:[#allocation2 + $0xc1] sm:$0xff]
      %v2591 = vld [vmem:[#allocation2 + $0xc9] sm:$0xff]
      %v2592 = vld [vmem:[#allocation2 + $0xd9] sm:$0xff]
      %v2593 = vld [vmem:[#allocation2 + $0xe1] sm:$0xff]
      %v2594 = vld [vmem:[#allocation2 + $0xf1] sm:$0xff]
      %v2595 = vld [vmem:[#allocation2 + $0xf9] sm:$0xff]
      %v2596 = vld [vmem:[#allocation2 + $0x109] sm:$0xff]
      %v2597 = vld [vmem:[#allocation2 + $0x111] sm:$0xff]
      %v2598 = vld [vmem:[#allocation2 + $0x121] sm:$0xff]
      %v2599 = vld [vmem:[#allocation2 + $0x129] sm:$0xff]
      %v2600 = vld [vmem:[#allocation2 + $0x139] sm:$0xff]
      %v2601 = vld [vmem:[#allocation2 + $0x141] sm:$0xff]
      %v2602 = vld [vmem:[#allocation2 + $0x151] sm:$0xff]
      %v2603 = vld [vmem:[#allocation2 + $0x159] sm:$0xff]
      %v2604 = vld [vmem:[#allocation2 + $0x169] sm:$0xff]
      %v2605 = vld [vmem:[#allocation2 + $0x171] sm:$0xff]
      %v2606 = vld [vmem:[#allocation2 + $0x2] sm:$0xff]
      %v2607 = vld [vmem:[#allocation2 + $0xa] sm:$0xff]
      %v2608 = vld [vmem:[#allocation2 + $0x1a] sm:$0xff]
      %v2609 = vld [vmem:[#allocation2 + $0x22] sm:$0xff]
      %v2610 = vld [vmem:[#allocation2 + $0x32] sm:$0xff]
      %v2611 = vld [vmem:[#allocation2 + $0x3a] sm:$0xff]
      %v2612 = vld [vmem:[#allocation2 + $0x4a] sm:$0xff]
      %v2613 = vld [vmem:[#allocation2 + $0x52] sm:$0xff]
      %v2614 = vld [vmem:[#allocation2 + $0x62] sm:$0xff]
      %v2615 = vld [vmem:[#allocation2 + $0x6a] sm:$0xff]
      %v2616 = vld [vmem:[#allocation2 + $0x7a] sm:$0xff]
      %v2617 = vld [vmem:[#allocation2 + $0x82] sm:$0xff]
      %v2618 = vld [vmem:[#allocation2 + $0x92] sm:$0xff]
      %v2619 = vld [vmem:[#allocation2 + $0x9a] sm:$0xff]
      %v2620 = vld [vmem:[#allocation2 + $0xaa] sm:$0xff]
      %v2621 = vld [vmem:[#allocation2 + $0xb2] sm:$0xff]
      %v2622 = vld [vmem:[#allocation2 + $0xc2] sm:$0xff]
      %v2623 = vld [vmem:[#allocation2 + $0xca] sm:$0xff]
      %v2624 = vld [vmem:[#allocation2 + $0xda] sm:$0xff]
      %v2625 = vld [vmem:[#allocation2 + $0xe2] sm:$0xff]
      %v2626 = vld [vmem:[#allocation2 + $0xf2] sm:$0xff]
      %v2627 = vld [vmem:[#allocation2 + $0xfa] sm:$0xff]
      %v2628 = vld [vmem:[#allocation2 + $0x10a] sm:$0xff]
      %v2629 = vld [vmem:[#allocation2 + $0x112] sm:$0xff]
      %v2630 = vld [vmem:[#allocation2 + $0x122] sm:$0xff]
      %v2631 = vld [vmem:[#allocation2 + $0x12a] sm:$0xff]
      %v2632 = vld [vmem:[#allocation2 + $0x13a] sm:$0xff]
      %v2633 = vld [vmem:[#allocation2 + $0x142] sm:$0xff]
      %v2634 = vld [vmem:[#allocation2 + $0x152] sm:$0xff]
      %v2635 = vld [vmem:[#allocation2 + $0x15a] sm:$0xff]
      %v2636 = vld [vmem:[#allocation2 + $0x16a] sm:$0xff]
      %v2637 = vld [vmem:[#allocation2 + $0x172] sm:$0xff]
      %v2638 = vld [vmem:[%s719] sm:$0xff]
      %v2639 = vld [vmem:[%s719 + $0x8] sm:$0xff]
      %v2640 = vld [vmem:[%s719 + $0x18] sm:$0xff]
      %v2641 = vld [vmem:[%s719 + $0x20] sm:$0xff]
      %v2642 = vld [vmem:[%s719 + $0x30] sm:$0xff]
      %v2643 = vld [vmem:[%s719 + $0x38] sm:$0xff]
      %v2644 = vld [vmem:[%s719 + $0x48] sm:$0xff]
      %v2645 = vld [vmem:[%s719 + $0x50] sm:$0xff]
      %v2646 = vld [vmem:[%s719 + $0x60] sm:$0xff]
      %v2647 = vld [vmem:[%s719 + $0x68] sm:$0xff]
      %v2648 = vld [vmem:[%s719 + $0x78] sm:$0xff]
      %v2649 = vld [vmem:[%s719 + $0x80] sm:$0xff]
      %v2650 = vld [vmem:[%s719 + $0x90] sm:$0xff]
      %v2651 = vld [vmem:[%s719 + $0x98] sm:$0xff]
      %v2652 = vld [vmem:[%s719 + $0xa8] sm:$0xff]
      %v2653 = vld [vmem:[%s719 + $0xb0] sm:$0xff]
      %v2654 = vld [vmem:[%s719 + $0xc0] sm:$0xff]
      %v2655 = vld [vmem:[%s719 + $0xc8] sm:$0xff]
      %v2656 = vld [vmem:[%s719 + $0xd8] sm:$0xff]
      %v2657 = vld [vmem:[%s719 + $0xe0] sm:$0xff]
      %v2658 = vld [vmem:[%s719 + $0xf0] sm:$0xff]
      %v2659 = vld [vmem:[%s719 + $0xf8] sm:$0xff]
      %v2660 = vld [vmem:[%s719 + $0x108] sm:$0xff]
      %v2661 = vld [vmem:[%s719 + $0x110] sm:$0xff]
      %v2662 = vld [vmem:[%s719 + $0x120] sm:$0xff]
      %v2663 = vld [vmem:[%s719 + $0x128] sm:$0xff]
      %v2664 = vld [vmem:[%s719 + $0x138] sm:$0xff]
      %v2665 = vld [vmem:[%s719 + $0x140] sm:$0xff]
      %v2666 = vld [vmem:[%s719 + $0x150] sm:$0xff]
      %v2667 = vld [vmem:[%s719 + $0x158] sm:$0xff]
      %v2668 = vld [vmem:[%s719 + $0x168] sm:$0xff]
      %v2669 = vld [vmem:[%s719 + $0x170] sm:$0xff]
      %v2670 = vld [vmem:[%s719 + $0x1] sm:$0xff]
      %v2671 = vld [vmem:[%s719 + $0x9] sm:$0xff]
      %v2672 = vld [vmem:[%s719 + $0x19] sm:$0xff]
      %v2673 = vld [vmem:[%s719 + $0x21] sm:$0xff]
      %v2674 = vld [vmem:[%s719 + $0x31] sm:$0xff]
      %v2675 = vld [vmem:[%s719 + $0x39] sm:$0xff]
      %v2676 = vld [vmem:[%s719 + $0x49] sm:$0xff]
      %v2677 = vld [vmem:[%s719 + $0x51] sm:$0xff]
      %v2678 = vld [vmem:[%s719 + $0x61] sm:$0xff]
      %v2679 = vld [vmem:[%s719 + $0x69] sm:$0xff]
      %v2680 = vld [vmem:[%s719 + $0x79] sm:$0xff]
      %v2681 = vld [vmem:[%s719 + $0x81] sm:$0xff]
      %v2682 = vld [vmem:[%s719 + $0x91] sm:$0xff]
      %v2683 = vld [vmem:[%s719 + $0x99] sm:$0xff]
      %v2684 = vld [vmem:[%s719 + $0xa9] sm:$0xff]
      %v2685 = vld [vmem:[%s719 + $0xb1] sm:$0xff]
      %v2686 = vld [vmem:[%s719 + $0xc1] sm:$0xff]
      %v2687 = vld [vmem:[%s719 + $0xc9] sm:$0xff]
      %v2688 = vld [vmem:[%s719 + $0xd9] sm:$0xff]
      %v2689 = vld [vmem:[%s719 + $0xe1] sm:$0xff]
      %v2690 = vld [vmem:[%s719 + $0xf1] sm:$0xff]
      %v2691 = vld [vmem:[%s719 + $0xf9] sm:$0xff]
      %v2692 = vld [vmem:[%s719 + $0x109] sm:$0xff]
      %v2693 = vld [vmem:[%s719 + $0x111] sm:$0xff]
      %v2694 = vld [vmem:[%s719 + $0x121] sm:$0xff]
      %v2695 = vld [vmem:[%s719 + $0x129] sm:$0xff]
      %v2696 = vld [vmem:[%s719 + $0x139] sm:$0xff]
      %v2697 = vld [vmem:[%s719 + $0x141] sm:$0xff]
      %v2698 = vld [vmem:[%s719 + $0x151] sm:$0xff]
      %v2699 = vld [vmem:[%s719 + $0x159] sm:$0xff]
      %v2700 = vld [vmem:[%s719 + $0x169] sm:$0xff]
      %v2701 = vld [vmem:[%s719 + $0x171] sm:$0xff]
      %v2702 = vld [vmem:[%s719 + $0x2] sm:$0xff]
      %v2703 = vld [vmem:[%s719 + $0xa] sm:$0xff]
      %v2704 = vld [vmem:[%s719 + $0x1a] sm:$0xff]
      %v2705 = vld [vmem:[%s719 + $0x22] sm:$0xff]
      %v2706 = vld [vmem:[%s719 + $0x32] sm:$0xff]
      %v2707 = vld [vmem:[%s719 + $0x3a] sm:$0xff]
      %v2708 = vld [vmem:[%s719 + $0x4a] sm:$0xff]
      %v2709 = vld [vmem:[%s719 + $0x52] sm:$0xff]
      %v2710 = vld [vmem:[%s719 + $0x62] sm:$0xff]
      %v2711 = vld [vmem:[%s719 + $0x6a] sm:$0xff]
      %v2712 = vld [vmem:[%s719 + $0x7a] sm:$0xff]
      %v2713 = vld [vmem:[%s719 + $0x82] sm:$0xff]
      %v2714 = vld [vmem:[%s719 + $0x92] sm:$0xff]
      %v2715 = vld [vmem:[%s719 + $0x9a] sm:$0xff]
      %v2716 = vld [vmem:[%s719 + $0xaa] sm:$0xff]
      %v2717 = vld [vmem:[%s719 + $0xb2] sm:$0xff]
      %v2718 = vld [vmem:[%s719 + $0xc2] sm:$0xff]
      %v2719 = vld [vmem:[%s719 + $0xca] sm:$0xff]
      %v2720 = vld [vmem:[%s719 + $0xda] sm:$0xff]
      %v2721 = vld [vmem:[%s719 + $0xe2] sm:$0xff]
      %v2722 = vld [vmem:[%s719 + $0xf2] sm:$0xff]
      %v2723 = vld [vmem:[%s719 + $0xfa] sm:$0xff]
      %v2724 = vld [vmem:[%s719 + $0x10a] sm:$0xff]
      %v2725 = vld [vmem:[%s719 + $0x112] sm:$0xff]
      %v2726 = vld [vmem:[%s719 + $0x122] sm:$0xff]
      %v2727 = vld [vmem:[%s719 + $0x12a] sm:$0xff]
      %v2728 = vld [vmem:[%s719 + $0x13a] sm:$0xff]
      %v2729 = vld [vmem:[%s719 + $0x142] sm:$0xff]
      %v2730 = vld [vmem:[%s719 + $0x152] sm:$0xff]
      %v2731 = vld [vmem:[%s719 + $0x15a] sm:$0xff]
      %v2732 = vld [vmem:[%s719 + $0x16a] sm:$0xff]
      %v2733 = vld [vmem:[%s719 + $0x172] sm:$0xff]
      %v2734 = vld [vmem:[%s944] sm:$0xff]
      %v2735 = vld [vmem:[%s944 + $0x8] sm:$0xff]
      %v2736 = vld [vmem:[%s944 + $0x18] sm:$0xff]
      %v2737 = vld [vmem:[%s944 + $0x20] sm:$0xff]
      %v2738 = vld [vmem:[%s944 + $0x30] sm:$0xff]
      %v2739 = vld [vmem:[%s944 + $0x38] sm:$0xff]
      %v2740 = vld [vmem:[%s944 + $0x48] sm:$0xff]
      %v2741 = vld [vmem:[%s944 + $0x50] sm:$0xff]
      %v2742 = vld [vmem:[%s944 + $0x60] sm:$0xff]
      %v2743 = vld [vmem:[%s944 + $0x68] sm:$0xff]
      %v2744 = vld [vmem:[%s944 + $0x78] sm:$0xff]
      %v2745 = vld [vmem:[%s944 + $0x80] sm:$0xff]
      %v2746 = vld [vmem:[%s944 + $0x90] sm:$0xff]
      %v2747 = vld [vmem:[%s944 + $0x98] sm:$0xff]
      %v2748 = vld [vmem:[%s944 + $0xa8] sm:$0xff]
      %v2749 = vld [vmem:[%s944 + $0xb0] sm:$0xff]
      %v2750 = vld [vmem:[%s944 + $0xc0] sm:$0xff]
      %v2751 = vld [vmem:[%s944 + $0xc8] sm:$0xff]
      %v2752 = vld [vmem:[%s944 + $0xd8] sm:$0xff]
      %v2753 = vld [vmem:[%s944 + $0xe0] sm:$0xff]
      %v2754 = vld [vmem:[%s944 + $0xf0] sm:$0xff]
      %v2755 = vld [vmem:[%s944 + $0xf8] sm:$0xff]
      %v2756 = vld [vmem:[%s944 + $0x108] sm:$0xff]
      %v2757 = vld [vmem:[%s944 + $0x110] sm:$0xff]
      %v2758 = vld [vmem:[%s944 + $0x120] sm:$0xff]
      %v2759 = vld [vmem:[%s944 + $0x128] sm:$0xff]
      %v2760 = vld [vmem:[%s944 + $0x138] sm:$0xff]
      %v2761 = vld [vmem:[%s944 + $0x140] sm:$0xff]
      %v2762 = vld [vmem:[%s944 + $0x150] sm:$0xff]
      %v2763 = vld [vmem:[%s944 + $0x158] sm:$0xff]
      %v2764 = vld [vmem:[%s944 + $0x168] sm:$0xff]
      %v2765 = vld [vmem:[%s944 + $0x170] sm:$0xff]
      %v2766 = vld [vmem:[%s944 + $0x1] sm:$0xff]
      %v2767 = vld [vmem:[%s944 + $0x9] sm:$0xff]
      %v2768 = vld [vmem:[%s944 + $0x19] sm:$0xff]
      %v2769 = vld [vmem:[%s944 + $0x21] sm:$0xff]
      %v2770 = vld [vmem:[%s944 + $0x31] sm:$0xff]
      %v2771 = vld [vmem:[%s944 + $0x39] sm:$0xff]
      %v2772 = vld [vmem:[%s944 + $0x49] sm:$0xff]
      %v2773 = vld [vmem:[%s944 + $0x51] sm:$0xff]
      %v2774 = vld [vmem:[%s944 + $0x61] sm:$0xff]
      %v2775 = vld [vmem:[%s944 + $0x69] sm:$0xff]
      %v2776 = vld [vmem:[%s944 + $0x79] sm:$0xff]
      %v2777 = vld [vmem:[%s944 + $0x81] sm:$0xff]
      %v2778 = vld [vmem:[%s944 + $0x91] sm:$0xff]
      %v2779 = vld [vmem:[%s944 + $0x99] sm:$0xff]
      %v2780 = vld [vmem:[%s944 + $0xa9] sm:$0xff]
      %v2781 = vld [vmem:[%s944 + $0xb1] sm:$0xff]
      %v2782 = vld [vmem:[%s944 + $0xc1] sm:$0xff]
      %v2783 = vld [vmem:[%s944 + $0xc9] sm:$0xff]
      %v2784 = vld [vmem:[%s944 + $0xd9] sm:$0xff]
      %v2785 = vld [vmem:[%s944 + $0xe1] sm:$0xff]
      %v2786 = vld [vmem:[%s944 + $0xf1] sm:$0xff]
      %v2787 = vld [vmem:[%s944 + $0xf9] sm:$0xff]
      %v2788 = vld [vmem:[%s944 + $0x109] sm:$0xff]
      %v2789 = vld [vmem:[%s944 + $0x111] sm:$0xff]
      %v2790 = vld [vmem:[%s944 + $0x121] sm:$0xff]
      %v2791 = vld [vmem:[%s944 + $0x129] sm:$0xff]
      %v2792 = vld [vmem:[%s944 + $0x139] sm:$0xff]
      %v2793 = vld [vmem:[%s944 + $0x141] sm:$0xff]
      %v2794 = vld [vmem:[%s944 + $0x151] sm:$0xff]
      %v2795 = vld [vmem:[%s944 + $0x159] sm:$0xff]
      %v2796 = vld [vmem:[%s944 + $0x169] sm:$0xff]
      %v2797 = vld [vmem:[%s944 + $0x171] sm:$0xff]
      %v2798 = vld [vmem:[%s944 + $0x2] sm:$0xff]
      %v2799 = vld [vmem:[%s944 + $0xa] sm:$0xff]
      %v2800 = vld [vmem:[%s944 + $0x1a] sm:$0xff]
      %v2801 = vld [vmem:[%s944 + $0x22] sm:$0xff]
      %v2802 = vld [vmem:[%s944 + $0x32] sm:$0xff]
      %v2803 = vld [vmem:[%s944 + $0x3a] sm:$0xff]
      %v2804 = vld [vmem:[%s944 + $0x4a] sm:$0xff]
      %v2805 = vld [vmem:[%s944 + $0x52] sm:$0xff]
      %v2806 = vld [vmem:[%s944 + $0x62] sm:$0xff]
      %v2807 = vld [vmem:[%s944 + $0x6a] sm:$0xff]
      %v2808 = vld [vmem:[%s944 + $0x7a] sm:$0xff]
      %v2809 = vld [vmem:[%s944 + $0x82] sm:$0xff]
      %v2810 = vld [vmem:[%s944 + $0x92] sm:$0xff]
      %v2811 = vld [vmem:[%s944 + $0x9a] sm:$0xff]
      %v2812 = vld [vmem:[%s944 + $0xaa] sm:$0xff]
      %v2813 = vld [vmem:[%s944 + $0xb2] sm:$0xff]
      %v2814 = vld [vmem:[%s944 + $0xc2] sm:$0xff]
      %v2815 = vld [vmem:[%s944 + $0xca] sm:$0xff]
      %v2816 = vld [vmem:[%s944 + $0xda] sm:$0xff]
      %v2817 = vld [vmem:[%s944 + $0xe2] sm:$0xff]
      %v2818 = vld [vmem:[%s944 + $0xf2] sm:$0xff]
      %v2819 = vld [vmem:[%s944 + $0xfa] sm:$0xff]
      %v2820 = vld [vmem:[%s944 + $0x10a] sm:$0xff]
      %v2821 = vld [vmem:[%s944 + $0x112] sm:$0xff]
      %v2822 = vld [vmem:[%s944 + $0x122] sm:$0xff]
      %v2823 = vld [vmem:[%s944 + $0x12a] sm:$0xff]
      %v2824 = vld [vmem:[%s944 + $0x13a] sm:$0xff]
      %v2825 = vld [vmem:[%s944 + $0x142] sm:$0xff]
      %v2826 = vld [vmem:[%s944 + $0x152] sm:$0xff]
      %v2827 = vld [vmem:[%s944 + $0x15a] sm:$0xff]
      %v2828 = vld [vmem:[%s944 + $0x16a] sm:$0xff]
      %v2829 = vld [vmem:[%s944 + $0x172] sm:$0xff]
      %2862 = vrot.lane.b32.xlu0 %v2574, 32
      %v2863 = vpop.permute.xlu0 %2862
      %2864 = vrot.lane.b32.xlu0 %v2575, 32
      %v2865 = vpop.permute.xlu0 %2864
      %2866 = vrot.lane.b32.xlu0 %v2576, 32
      %v2867 = vpop.permute.xlu0 %2866
      %2868 = vrot.lane.b32.xlu0 %v2577, 32
      %v2869 = vpop.permute.xlu0 %2868
      %2870 = vrot.lane.b32.xlu0 %v2578, 32
      %v2871 = vpop.permute.xlu0 %2870
      %2872 = vrot.lane.b32.xlu0 %v2579, 32
      %v2873 = vpop.permute.xlu0 %2872
      %2874 = vrot.lane.b32.xlu0 %v2580, 32
      %v2875 = vpop.permute.xlu0 %2874
      %2876 = vrot.lane.b32.xlu0 %v2581, 32
      %v2877 = vpop.permute.xlu0 %2876
      %2878 = vrot.lane.b32.xlu0 %v2582, 32
      %v2879 = vpop.permute.xlu0 %2878
      %2880 = vrot.lane.b32.xlu0 %v2583, 32
      %v2881 = vpop.permute.xlu0 %2880
      %2882 = vrot.lane.b32.xlu0 %v2584, 32
      %v2883 = vpop.permute.xlu0 %2882
      %2884 = vrot.lane.b32.xlu0 %v2585, 32
      %v2885 = vpop.permute.xlu0 %2884
      %2886 = vrot.lane.b32.xlu0 %v2586, 32
      %v2887 = vpop.permute.xlu0 %2886
      %2888 = vrot.lane.b32.xlu0 %v2587, 32
      %v2889 = vpop.permute.xlu0 %2888
      %2890 = vrot.lane.b32.xlu0 %v2588, 32
      %v2891 = vpop.permute.xlu0 %2890
      %2892 = vrot.lane.b32.xlu0 %v2589, 32
      %v2893 = vpop.permute.xlu0 %2892
      %2894 = vrot.lane.b32.xlu0 %v2590, 32
      %v2895 = vpop.permute.xlu0 %2894
      %2896 = vrot.lane.b32.xlu0 %v2591, 32
      %v2897 = vpop.permute.xlu0 %2896
      %2898 = vrot.lane.b32.xlu0 %v2592, 32
      %v2899 = vpop.permute.xlu0 %2898
      %2900 = vrot.lane.b32.xlu0 %v2593, 32
      %v2901 = vpop.permute.xlu0 %2900
      %2902 = vrot.lane.b32.xlu0 %v2594, 32
      %v2903 = vpop.permute.xlu0 %2902
      %2904 = vrot.lane.b32.xlu0 %v2595, 32
      %v2905 = vpop.permute.xlu0 %2904
      %2906 = vrot.lane.b32.xlu0 %v2596, 32
      %v2907 = vpop.permute.xlu0 %2906
      %2908 = vrot.lane.b32.xlu0 %v2597, 32
      %v2909 = vpop.permute.xlu0 %2908
      %2910 = vrot.lane.b32.xlu0 %v2598, 32
      %v2911 = vpop.permute.xlu0 %2910
      %2912 = vrot.lane.b32.xlu0 %v2599, 32
      %v2913 = vpop.permute.xlu0 %2912
      %2914 = vrot.lane.b32.xlu0 %v2600, 32
      %v2915 = vpop.permute.xlu0 %2914
      %2916 = vrot.lane.b32.xlu0 %v2601, 32
      %v2917 = vpop.permute.xlu0 %2916
      %2918 = vrot.lane.b32.xlu0 %v2602, 32
      %v2919 = vpop.permute.xlu0 %2918
      %2920 = vrot.lane.b32.xlu0 %v2603, 32
      %v2921 = vpop.permute.xlu0 %2920
      %2922 = vrot.lane.b32.xlu0 %v2604, 32
      %v2923 = vpop.permute.xlu0 %2922
      %2924 = vrot.lane.b32.xlu0 %v2605, 32
      %v2925 = vpop.permute.xlu0 %2924
      %2990 = vrot.lane.b32.xlu0 %v2606, 64
      %v2991 = vpop.permute.xlu0 %2990
      %2992 = vrot.lane.b32.xlu0 %v2607, 64
      %v2993 = vpop.permute.xlu0 %2992
      %2994 = vrot.lane.b32.xlu0 %v2608, 64
      %v2995 = vpop.permute.xlu0 %2994
      %2996 = vrot.lane.b32.xlu0 %v2609, 64
      %v2997 = vpop.permute.xlu0 %2996
      %2998 = vrot.lane.b32.xlu0 %v2610, 64
      %v2999 = vpop.permute.xlu0 %2998
      %3000 = vrot.lane.b32.xlu0 %v2611, 64
      %v3001 = vpop.permute.xlu0 %3000
      %3002 = vrot.lane.b32.xlu0 %v2612, 64
      %v3003 = vpop.permute.xlu0 %3002
      %3004 = vrot.lane.b32.xlu0 %v2613, 64
      %v3005 = vpop.permute.xlu0 %3004
      %3006 = vrot.lane.b32.xlu0 %v2614, 64
      %v3007 = vpop.permute.xlu0 %3006
      %3008 = vrot.lane.b32.xlu0 %v2615, 64
      %v3009 = vpop.permute.xlu0 %3008
      %3010 = vrot.lane.b32.xlu0 %v2616, 64
      %v3011 = vpop.permute.xlu0 %3010
      %3012 = vrot.lane.b32.xlu0 %v2617, 64
      %v3013 = vpop.permute.xlu0 %3012
      %3014 = vrot.lane.b32.xlu0 %v2618, 64
      %v3015 = vpop.permute.xlu0 %3014
      %3016 = vrot.lane.b32.xlu0 %v2619, 64
      %v3017 = vpop.permute.xlu0 %3016
      %3018 = vrot.lane.b32.xlu0 %v2620, 64
      %v3019 = vpop.permute.xlu0 %3018
      %3020 = vrot.lane.b32.xlu0 %v2621, 64
      %v3021 = vpop.permute.xlu0 %3020
      %3022 = vrot.lane.b32.xlu0 %v2622, 64
      %v3023 = vpop.permute.xlu0 %3022
      %3024 = vrot.lane.b32.xlu0 %v2623, 64
      %v3025 = vpop.permute.xlu0 %3024
      %3026 = vrot.lane.b32.xlu0 %v2624, 64
      %v3027 = vpop.permute.xlu0 %3026
      %3028 = vrot.lane.b32.xlu0 %v2625, 64
      %v3029 = vpop.permute.xlu0 %3028
      %3030 = vrot.lane.b32.xlu0 %v2626, 64
      %v3031 = vpop.permute.xlu0 %3030
      %3032 = vrot.lane.b32.xlu0 %v2627, 64
      %v3033 = vpop.permute.xlu0 %3032
      %3034 = vrot.lane.b32.xlu0 %v2628, 64
      %v3035 = vpop.permute.xlu0 %3034
      %3036 = vrot.lane.b32.xlu0 %v2629, 64
      %v3037 = vpop.permute.xlu0 %3036
      %3038 = vrot.lane.b32.xlu0 %v2630, 64
      %v3039 = vpop.permute.xlu0 %3038
      %3040 = vrot.lane.b32.xlu0 %v2631, 64
      %v3041 = vpop.permute.xlu0 %3040
      %3042 = vrot.lane.b32.xlu0 %v2632, 64
      %v3043 = vpop.permute.xlu0 %3042
      %3044 = vrot.lane.b32.xlu0 %v2633, 64
      %v3045 = vpop.permute.xlu0 %3044
      %3046 = vrot.lane.b32.xlu0 %v2634, 64
      %v3047 = vpop.permute.xlu0 %3046
      %3048 = vrot.lane.b32.xlu0 %v2635, 64
      %v3049 = vpop.permute.xlu0 %3048
      %3050 = vrot.lane.b32.xlu0 %v2636, 64
      %v3051 = vpop.permute.xlu0 %3050
      %3052 = vrot.lane.b32.xlu0 %v2637, 64
      %v3053 = vpop.permute.xlu0 %3052
      %3118 = vrot.lane.b32.xlu0 %v2638, 96
      %v3119 = vpop.permute.xlu0 %3118
      %3120 = vrot.lane.b32.xlu0 %v2639, 96
      %v3121 = vpop.permute.xlu0 %3120
      %3122 = vrot.lane.b32.xlu0 %v2640, 96
      %v3123 = vpop.permute.xlu0 %3122
      %3124 = vrot.lane.b32.xlu0 %v2641, 96
      %v3125 = vpop.permute.xlu0 %3124
      %3126 = vrot.lane.b32.xlu0 %v2642, 96
      %v3127 = vpop.permute.xlu0 %3126
      %3128 = vrot.lane.b32.xlu0 %v2643, 96
      %v3129 = vpop.permute.xlu0 %3128
      %3130 = vrot.lane.b32.xlu0 %v2644, 96
      %v3131 = vpop.permute.xlu0 %3130
      %3132 = vrot.lane.b32.xlu0 %v2645, 96
      %v3133 = vpop.permute.xlu0 %3132
      %3134 = vrot.lane.b32.xlu0 %v2646, 96
      %v3135 = vpop.permute.xlu0 %3134
      %3136 = vrot.lane.b32.xlu0 %v2647, 96
      %v3137 = vpop.permute.xlu0 %3136
      %3138 = vrot.lane.b32.xlu0 %v2648, 96
      %v3139 = vpop.permute.xlu0 %3138
      %3140 = vrot.lane.b32.xlu0 %v2649, 96
      %v3141 = vpop.permute.xlu0 %3140
      %3142 = vrot.lane.b32.xlu0 %v2650, 96
      %v3143 = vpop.permute.xlu0 %3142
      %3144 = vrot.lane.b32.xlu0 %v2651, 96
      %v3145 = vpop.permute.xlu0 %3144
      %3146 = vrot.lane.b32.xlu0 %v2652, 96
      %v3147 = vpop.permute.xlu0 %3146
      %3148 = vrot.lane.b32.xlu0 %v2653, 96
      %v3149 = vpop.permute.xlu0 %3148
      %3150 = vrot.lane.b32.xlu0 %v2654, 96
      %v3151 = vpop.permute.xlu0 %3150
      %3152 = vrot.lane.b32.xlu0 %v2655, 96
      %v3153 = vpop.permute.xlu0 %3152
      %3154 = vrot.lane.b32.xlu0 %v2656, 96
      %v3155 = vpop.permute.xlu0 %3154
      %3156 = vrot.lane.b32.xlu0 %v2657, 96
      %v3157 = vpop.permute.xlu0 %3156
      %3158 = vrot.lane.b32.xlu0 %v2658, 96
      %v3159 = vpop.permute.xlu0 %3158
      %3160 = vrot.lane.b32.xlu0 %v2659, 96
      %v3161 = vpop.permute.xlu0 %3160
      %3162 = vrot.lane.b32.xlu0 %v2660, 96
      %v3163 = vpop.permute.xlu0 %3162
      %3164 = vrot.lane.b32.xlu0 %v2661, 96
      %v3165 = vpop.permute.xlu0 %3164
      %3166 = vrot.lane.b32.xlu0 %v2662, 96
      %v3167 = vpop.permute.xlu0 %3166
      %3168 = vrot.lane.b32.xlu0 %v2663, 96
      %v3169 = vpop.permute.xlu0 %3168
      %3170 = vrot.lane.b32.xlu0 %v2664, 96
      %v3171 = vpop.permute.xlu0 %3170
      %3172 = vrot.lane.b32.xlu0 %v2665, 96
      %v3173 = vpop.permute.xlu0 %3172
      %3174 = vrot.lane.b32.xlu0 %v2666, 96
      %v3175 = vpop.permute.xlu0 %3174
      %3176 = vrot.lane.b32.xlu0 %v2667, 96
      %v3177 = vpop.permute.xlu0 %3176
      %3178 = vrot.lane.b32.xlu0 %v2668, 96
      %v3179 = vpop.permute.xlu0 %3178
      %3180 = vrot.lane.b32.xlu0 %v2669, 96
      %v3181 = vpop.permute.xlu0 %3180
      %3246 = vrot.lane.b32.xlu0 %v2702, 32
      %v3247 = vpop.permute.xlu0 %3246
      %3248 = vrot.lane.b32.xlu0 %v2703, 32
      %v3249 = vpop.permute.xlu0 %3248
      %3250 = vrot.lane.b32.xlu0 %v2704, 32
      %v3251 = vpop.permute.xlu0 %3250
      %3252 = vrot.lane.b32.xlu0 %v2705, 32
      %v3253 = vpop.permute.xlu0 %3252
      %3254 = vrot.lane.b32.xlu0 %v2706, 32
      %v3255 = vpop.permute.xlu0 %3254
      %3256 = vrot.lane.b32.xlu0 %v2707, 32
      %v3257 = vpop.permute.xlu0 %3256
      %3258 = vrot.lane.b32.xlu0 %v2708, 32
      %v3259 = vpop.permute.xlu0 %3258
      %3260 = vrot.lane.b32.xlu0 %v2709, 32
      %v3261 = vpop.permute.xlu0 %3260
      %3262 = vrot.lane.b32.xlu0 %v2710, 32
      %v3263 = vpop.permute.xlu0 %3262
      %3264 = vrot.lane.b32.xlu0 %v2711, 32
      %v3265 = vpop.permute.xlu0 %3264
      %3266 = vrot.lane.b32.xlu0 %v2712, 32
      %v3267 = vpop.permute.xlu0 %3266
      %3268 = vrot.lane.b32.xlu0 %v2713, 32
      %v3269 = vpop.permute.xlu0 %3268
      %3270 = vrot.lane.b32.xlu0 %v2714, 32
      %v3271 = vpop.permute.xlu0 %3270
      %3272 = vrot.lane.b32.xlu0 %v2715, 32
      %v3273 = vpop.permute.xlu0 %3272
      %3274 = vrot.lane.b32.xlu0 %v2716, 32
      %v3275 = vpop.permute.xlu0 %3274
      %3276 = vrot.lane.b32.xlu0 %v2717, 32
      %v3277 = vpop.permute.xlu0 %3276
      %3278 = vrot.lane.b32.xlu0 %v2718, 32
      %v3279 = vpop.permute.xlu0 %3278
      %3280 = vrot.lane.b32.xlu0 %v2719, 32
      %v3281 = vpop.permute.xlu0 %3280
      %3282 = vrot.lane.b32.xlu0 %v2720, 32
      %v3283 = vpop.permute.xlu0 %3282
      %3284 = vrot.lane.b32.xlu0 %v2721, 32
      %v3285 = vpop.permute.xlu0 %3284
      %3286 = vrot.lane.b32.xlu0 %v2722, 32
      %v3287 = vpop.permute.xlu0 %3286
      %3288 = vrot.lane.b32.xlu0 %v2723, 32
      %v3289 = vpop.permute.xlu0 %3288
      %3290 = vrot.lane.b32.xlu0 %v2724, 32
      %v3291 = vpop.permute.xlu0 %3290
      %3292 = vrot.lane.b32.xlu0 %v2725, 32
      %v3293 = vpop.permute.xlu0 %3292
      %3294 = vrot.lane.b32.xlu0 %v2726, 32
      %v3295 = vpop.permute.xlu0 %3294
      %3296 = vrot.lane.b32.xlu0 %v2727, 32
      %v3297 = vpop.permute.xlu0 %3296
      %3298 = vrot.lane.b32.xlu0 %v2728, 32
      %v3299 = vpop.permute.xlu0 %3298
      %3300 = vrot.lane.b32.xlu0 %v2729, 32
      %v3301 = vpop.permute.xlu0 %3300
      %3302 = vrot.lane.b32.xlu0 %v2730, 32
      %v3303 = vpop.permute.xlu0 %3302
      %3304 = vrot.lane.b32.xlu0 %v2731, 32
      %v3305 = vpop.permute.xlu0 %3304
      %3306 = vrot.lane.b32.xlu0 %v2732, 32
      %v3307 = vpop.permute.xlu0 %3306
      %3308 = vrot.lane.b32.xlu0 %v2733, 32
      %v3309 = vpop.permute.xlu0 %3308
      %3374 = vrot.lane.b32.xlu0 %v2734, 64
      %v3375 = vpop.permute.xlu0 %3374
      %3376 = vrot.lane.b32.xlu0 %v2735, 64
      %v3377 = vpop.permute.xlu0 %3376
      %3378 = vrot.lane.b32.xlu0 %v2736, 64
      %v3379 = vpop.permute.xlu0 %3378
      %3380 = vrot.lane.b32.xlu0 %v2737, 64
      %v3381 = vpop.permute.xlu0 %3380
      %3382 = vrot.lane.b32.xlu0 %v2738, 64
      %v3383 = vpop.permute.xlu0 %3382
      %3384 = vrot.lane.b32.xlu0 %v2739, 64
      %v3385 = vpop.permute.xlu0 %3384
      %3386 = vrot.lane.b32.xlu0 %v2740, 64
      %v3387 = vpop.permute.xlu0 %3386
      %3388 = vrot.lane.b32.xlu0 %v2741, 64
      %v3389 = vpop.permute.xlu0 %3388
      %3390 = vrot.lane.b32.xlu0 %v2742, 64
      %v3391 = vpop.permute.xlu0 %3390
      %3392 = vrot.lane.b32.xlu0 %v2743, 64
      %v3393 = vpop.permute.xlu0 %3392
      %3394 = vrot.lane.b32.xlu0 %v2744, 64
      %v3395 = vpop.permute.xlu0 %3394
      %3396 = vrot.lane.b32.xlu0 %v2745, 64
      %v3397 = vpop.permute.xlu0 %3396
      %3398 = vrot.lane.b32.xlu0 %v2746, 64
      %v3399 = vpop.permute.xlu0 %3398
      %3400 = vrot.lane.b32.xlu0 %v2747, 64
      %v3401 = vpop.permute.xlu0 %3400
      %3402 = vrot.lane.b32.xlu0 %v2748, 64
      %v3403 = vpop.permute.xlu0 %3402
      %3404 = vrot.lane.b32.xlu0 %v2749, 64
      %v3405 = vpop.permute.xlu0 %3404
      %3406 = vrot.lane.b32.xlu0 %v2750, 64
      %v3407 = vpop.permute.xlu0 %3406
      %3408 = vrot.lane.b32.xlu0 %v2751, 64
      %v3409 = vpop.permute.xlu0 %3408
      %3410 = vrot.lane.b32.xlu0 %v2752, 64
      %v3411 = vpop.permute.xlu0 %3410
      %3412 = vrot.lane.b32.xlu0 %v2753, 64
      %v3413 = vpop.permute.xlu0 %3412
      %3414 = vrot.lane.b32.xlu0 %v2754, 64
      %v3415 = vpop.permute.xlu0 %3414
      %3416 = vrot.lane.b32.xlu0 %v2755, 64
      %v3417 = vpop.permute.xlu0 %3416
      %3418 = vrot.lane.b32.xlu0 %v2756, 64
      %v3419 = vpop.permute.xlu0 %3418
      %3420 = vrot.lane.b32.xlu0 %v2757, 64
      %v3421 = vpop.permute.xlu0 %3420
      %3422 = vrot.lane.b32.xlu0 %v2758, 64
      %v3423 = vpop.permute.xlu0 %3422
      %3424 = vrot.lane.b32.xlu0 %v2759, 64
      %v3425 = vpop.permute.xlu0 %3424
      %3426 = vrot.lane.b32.xlu0 %v2760, 64
      %v3427 = vpop.permute.xlu0 %3426
      %3428 = vrot.lane.b32.xlu0 %v2761, 64
      %v3429 = vpop.permute.xlu0 %3428
      %3430 = vrot.lane.b32.xlu0 %v2762, 64
      %v3431 = vpop.permute.xlu0 %3430
      %3432 = vrot.lane.b32.xlu0 %v2763, 64
      %v3433 = vpop.permute.xlu0 %3432
      %3434 = vrot.lane.b32.xlu0 %v2764, 64
      %v3435 = vpop.permute.xlu0 %3434
      %3436 = vrot.lane.b32.xlu0 %v2765, 64
      %v3437 = vpop.permute.xlu0 %3436
      %3502 = vrot.lane.b32.xlu0 %v2766, 96
      %v3503 = vpop.permute.xlu0 %3502
      %3504 = vrot.lane.b32.xlu0 %v2767, 96
      %v3505 = vpop.permute.xlu0 %3504
      %3506 = vrot.lane.b32.xlu0 %v2768, 96
      %v3507 = vpop.permute.xlu0 %3506
      %3508 = vrot.lane.b32.xlu0 %v2769, 96
      %v3509 = vpop.permute.xlu0 %3508
      %3510 = vrot.lane.b32.xlu0 %v2770, 96
      %v3511 = vpop.permute.xlu0 %3510
      %3512 = vrot.lane.b32.xlu0 %v2771, 96
      %v3513 = vpop.permute.xlu0 %3512
      %3514 = vrot.lane.b32.xlu0 %v2772, 96
      %v3515 = vpop.permute.xlu0 %3514
      %3516 = vrot.lane.b32.xlu0 %v2773, 96
      %v3517 = vpop.permute.xlu0 %3516
      %3518 = vrot.lane.b32.xlu0 %v2774, 96
      %v3519 = vpop.permute.xlu0 %3518
      %3520 = vrot.lane.b32.xlu0 %v2775, 96
      %v3521 = vpop.permute.xlu0 %3520
      %3522 = vrot.lane.b32.xlu0 %v2776, 96
      %v3523 = vpop.permute.xlu0 %3522
      %3524 = vrot.lane.b32.xlu0 %v2777, 96
      %v3525 = vpop.permute.xlu0 %3524
      %3526 = vrot.lane.b32.xlu0 %v2778, 96
      %v3527 = vpop.permute.xlu0 %3526
      %3528 = vrot.lane.b32.xlu0 %v2779, 96
      %v3529 = vpop.permute.xlu0 %3528
      %3530 = vrot.lane.b32.xlu0 %v2780, 96
      %v3531 = vpop.permute.xlu0 %3530
      %3532 = vrot.lane.b32.xlu0 %v2781, 96
      %v3533 = vpop.permute.xlu0 %3532
      %3534 = vrot.lane.b32.xlu0 %v2782, 96
      %v3535 = vpop.permute.xlu0 %3534
      %3536 = vrot.lane.b32.xlu0 %v2783, 96
      %v3537 = vpop.permute.xlu0 %3536
      %3538 = vrot.lane.b32.xlu0 %v2784, 96
      %v3539 = vpop.permute.xlu0 %3538
      %3540 = vrot.lane.b32.xlu0 %v2785, 96
      %v3541 = vpop.permute.xlu0 %3540
      %3542 = vrot.lane.b32.xlu0 %v2786, 96
      %v3543 = vpop.permute.xlu0 %3542
      %3544 = vrot.lane.b32.xlu0 %v2787, 96
      %v3545 = vpop.permute.xlu0 %3544
      %3546 = vrot.lane.b32.xlu0 %v2788, 96
      %v3547 = vpop.permute.xlu0 %3546
      %3548 = vrot.lane.b32.xlu0 %v2789, 96
      %v3549 = vpop.permute.xlu0 %3548
      %3550 = vrot.lane.b32.xlu0 %v2790, 96
      %v3551 = vpop.permute.xlu0 %3550
      %3552 = vrot.lane.b32.xlu0 %v2791, 96
      %v3553 = vpop.permute.xlu0 %3552
      %3554 = vrot.lane.b32.xlu0 %v2792, 96
      %v3555 = vpop.permute.xlu0 %3554
      %3556 = vrot.lane.b32.xlu0 %v2793, 96
      %v3557 = vpop.permute.xlu0 %3556
      %3558 = vrot.lane.b32.xlu0 %v2794, 96
      %v3559 = vpop.permute.xlu0 %3558
      %3560 = vrot.lane.b32.xlu0 %v2795, 96
      %v3561 = vpop.permute.xlu0 %3560
      %3562 = vrot.lane.b32.xlu0 %v2796, 96
      %v3563 = vpop.permute.xlu0 %3562
      %3564 = vrot.lane.b32.xlu0 %v2797, 96
      %v3565 = vpop.permute.xlu0 %3564
      %v3598 = vsel %vm380, %v2542, %v2863
      %v3599 = vsel %vm380, %v2543, %v2865
      %v3600 = vsel %vm380, %v2544, %v2867
      %v3601 = vsel %vm380, %v2545, %v2869
      %v3602 = vsel %vm380, %v2546, %v2871
      %v3603 = vsel %vm380, %v2547, %v2873
      %v3604 = vsel %vm380, %v2548, %v2875
      %v3605 = vsel %vm380, %v2549, %v2877
      %v3606 = vsel %vm380, %v2550, %v2879
      %v3607 = vsel %vm380, %v2551, %v2881
      %v3608 = vsel %vm380, %v2552, %v2883
      %v3609 = vsel %vm380, %v2553, %v2885
      %v3610 = vsel %vm380, %v2554, %v2887
      %v3611 = vsel %vm380, %v2555, %v2889
      %v3612 = vsel %vm380, %v2556, %v2891
      %v3613 = vsel %vm380, %v2557, %v2893
      %v3614 = vsel %vm380, %v2558, %v2895
      %v3615 = vsel %vm380, %v2559, %v2897
      %v3616 = vsel %vm380, %v2560, %v2899
      %v3617 = vsel %vm380, %v2561, %v2901
      %v3618 = vsel %vm380, %v2562, %v2903
      %v3619 = vsel %vm380, %v2563, %v2905
      %v3620 = vsel %vm380, %v2564, %v2907
      %v3621 = vsel %vm380, %v2565, %v2909
      %v3622 = vsel %vm380, %v2566, %v2911
      %v3623 = vsel %vm380, %v2567, %v2913
      %v3624 = vsel %vm380, %v2568, %v2915
      %v3625 = vsel %vm380, %v2569, %v2917
      %v3626 = vsel %vm380, %v2570, %v2919
      %v3627 = vsel %vm380, %v2571, %v2921
      %v3628 = vsel %vm380, %v2572, %v2923
      %v3629 = vsel %vm380, %v2573, %v2925
      %v3630 = vsel %vm1841, %v3598, %v2991
      %v3631 = vsel %vm1841, %v3599, %v2993
      %v3632 = vsel %vm1841, %v3600, %v2995
      %v3633 = vsel %vm1841, %v3601, %v2997
      %v3634 = vsel %vm1841, %v3602, %v2999
      %v3635 = vsel %vm1841, %v3603, %v3001
      %v3636 = vsel %vm1841, %v3604, %v3003
      %v3637 = vsel %vm1841, %v3605, %v3005
      %v3638 = vsel %vm1841, %v3606, %v3007
      %v3639 = vsel %vm1841, %v3607, %v3009
      %v3640 = vsel %vm1841, %v3608, %v3011
      %v3641 = vsel %vm1841, %v3609, %v3013
      %v3642 = vsel %vm1841, %v3610, %v3015
      %v3643 = vsel %vm1841, %v3611, %v3017
      %v3644 = vsel %vm1841, %v3612, %v3019
      %v3645 = vsel %vm1841, %v3613, %v3021
      %v3646 = vsel %vm1841, %v3614, %v3023
      %v3647 = vsel %vm1841, %v3615, %v3025
      %v3648 = vsel %vm1841, %v3616, %v3027
      %v3649 = vsel %vm1841, %v3617, %v3029
      %v3650 = vsel %vm1841, %v3618, %v3031
      %v3651 = vsel %vm1841, %v3619, %v3033
      %v3652 = vsel %vm1841, %v3620, %v3035
      %v3653 = vsel %vm1841, %v3621, %v3037
      %v3654 = vsel %vm1841, %v3622, %v3039
      %v3655 = vsel %vm1841, %v3623, %v3041
      %v3656 = vsel %vm1841, %v3624, %v3043
      %v3657 = vsel %vm1841, %v3625, %v3045
      %v3658 = vsel %vm1841, %v3626, %v3047
      %v3659 = vsel %vm1841, %v3627, %v3049
      %v3660 = vsel %vm1841, %v3628, %v3051
      %v3661 = vsel %vm1841, %v3629, %v3053
      %v3662 = vsel %vm1874, %v3630, %v3119
      %v3663 = vsel %vm1874, %v3631, %v3121
      %v3664 = vsel %vm1874, %v3632, %v3123
      %v3665 = vsel %vm1874, %v3633, %v3125
      %v3666 = vsel %vm1874, %v3634, %v3127
      %v3667 = vsel %vm1874, %v3635, %v3129
      %v3668 = vsel %vm1874, %v3636, %v3131
      %v3669 = vsel %vm1874, %v3637, %v3133
      %v3670 = vsel %vm1874, %v3638, %v3135
      %v3671 = vsel %vm1874, %v3639, %v3137
      %v3672 = vsel %vm1874, %v3640, %v3139
      %v3673 = vsel %vm1874, %v3641, %v3141
      %v3674 = vsel %vm1874, %v3642, %v3143
      %v3675 = vsel %vm1874, %v3643, %v3145
      %v3676 = vsel %vm1874, %v3644, %v3147
      %v3677 = vsel %vm1874, %v3645, %v3149
      %v3678 = vsel %vm1874, %v3646, %v3151
      %v3679 = vsel %vm1874, %v3647, %v3153
      %v3680 = vsel %vm1874, %v3648, %v3155
      %v3681 = vsel %vm1874, %v3649, %v3157
      %v3682 = vsel %vm1874, %v3650, %v3159
      %v3683 = vsel %vm1874, %v3651, %v3161
      %v3684 = vsel %vm1874, %v3652, %v3163
      %v3685 = vsel %vm1874, %v3653, %v3165
      %v3686 = vsel %vm1874, %v3654, %v3167
      %v3687 = vsel %vm1874, %v3655, %v3169
      %v3688 = vsel %vm1874, %v3656, %v3171
      %v3689 = vsel %vm1874, %v3657, %v3173
      %v3690 = vsel %vm1874, %v3658, %v3175
      %v3691 = vsel %vm1874, %v3659, %v3177
      %v3692 = vsel %vm1874, %v3660, %v3179
      %v3693 = vsel %vm1874, %v3661, %v3181
      %v3694 = vsel %vm380, %v2670, %v3247
      %v3695 = vsel %vm380, %v2671, %v3249
      %v3696 = vsel %vm380, %v2672, %v3251
      %v3697 = vsel %vm380, %v2673, %v3253
      %v3698 = vsel %vm380, %v2674, %v3255
      %v3699 = vsel %vm380, %v2675, %v3257
      %v3700 = vsel %vm380, %v2676, %v3259
      %v3701 = vsel %vm380, %v2677, %v3261
      %v3702 = vsel %vm380, %v2678, %v3263
      %v3703 = vsel %vm380, %v2679, %v3265
      %v3704 = vsel %vm380, %v2680, %v3267
      %v3705 = vsel %vm380, %v2681, %v3269
      %v3706 = vsel %vm380, %v2682, %v3271
      %v3707 = vsel %vm380, %v2683, %v3273
      %v3708 = vsel %vm380, %v2684, %v3275
      %v3709 = vsel %vm380, %v2685, %v3277
      %v3710 = vsel %vm380, %v2686, %v3279
      %v3711 = vsel %vm380, %v2687, %v3281
      %v3712 = vsel %vm380, %v2688, %v3283
      %v3713 = vsel %vm380, %v2689, %v3285
      %v3714 = vsel %vm380, %v2690, %v3287
      %v3715 = vsel %vm380, %v2691, %v3289
      %v3716 = vsel %vm380, %v2692, %v3291
      %v3717 = vsel %vm380, %v2693, %v3293
      %v3718 = vsel %vm380, %v2694, %v3295
      %v3719 = vsel %vm380, %v2695, %v3297
      %v3720 = vsel %vm380, %v2696, %v3299
      %v3721 = vsel %vm380, %v2697, %v3301
      %v3722 = vsel %vm380, %v2698, %v3303
      %v3723 = vsel %vm380, %v2699, %v3305
      %v3724 = vsel %vm380, %v2700, %v3307
      %v3725 = vsel %vm380, %v2701, %v3309
      %v3726 = vsel %vm1841, %v3694, %v3375
      %v3727 = vsel %vm1841, %v3695, %v3377
      %v3728 = vsel %vm1841, %v3696, %v3379
      %v3729 = vsel %vm1841, %v3697, %v3381
      %v3730 = vsel %vm1841, %v3698, %v3383
      %v3731 = vsel %vm1841, %v3699, %v3385
      %v3732 = vsel %vm1841, %v3700, %v3387
      %v3733 = vsel %vm1841, %v3701, %v3389
      %v3734 = vsel %vm1841, %v3702, %v3391
      %v3735 = vsel %vm1841, %v3703, %v3393
      %v3736 = vsel %vm1841, %v3704, %v3395
      %v3737 = vsel %vm1841, %v3705, %v3397
      %v3738 = vsel %vm1841, %v3706, %v3399
      %v3739 = vsel %vm1841, %v3707, %v3401
      %v3740 = vsel %vm1841, %v3708, %v3403
      %v3741 = vsel %vm1841, %v3709, %v3405
      %v3742 = vsel %vm1841, %v3710, %v3407
      %v3743 = vsel %vm1841, %v3711, %v3409
      %v3744 = vsel %vm1841, %v3712, %v3411
      %v3745 = vsel %vm1841, %v3713, %v3413
      %v3746 = vsel %vm1841, %v3714, %v3415
      %v3747 = vsel %vm1841, %v3715, %v3417
      %v3748 = vsel %vm1841, %v3716, %v3419
      %v3749 = vsel %vm1841, %v3717, %v3421
      %v3750 = vsel %vm1841, %v3718, %v3423
      %v3751 = vsel %vm1841, %v3719, %v3425
      %v3752 = vsel %vm1841, %v3720, %v3427
      %v3753 = vsel %vm1841, %v3721, %v3429
      %v3754 = vsel %vm1841, %v3722, %v3431
      %v3755 = vsel %vm1841, %v3723, %v3433
      %v3756 = vsel %vm1841, %v3724, %v3435
      %v3757 = vsel %vm1841, %v3725, %v3437
      %v3758 = vsel %vm1874, %v3726, %v3503
      %v3759 = vsel %vm1874, %v3727, %v3505
      %v3760 = vsel %vm1874, %v3728, %v3507
      %v3761 = vsel %vm1874, %v3729, %v3509
      %v3762 = vsel %vm1874, %v3730, %v3511
      %v3763 = vsel %vm1874, %v3731, %v3513
      %v3764 = vsel %vm1874, %v3732, %v3515
      %v3765 = vsel %vm1874, %v3733, %v3517
      %v3766 = vsel %vm1874, %v3734, %v3519
      %v3767 = vsel %vm1874, %v3735, %v3521
      %v3768 = vsel %vm1874, %v3736, %v3523
      %v3769 = vsel %vm1874, %v3737, %v3525
      %v3770 = vsel %vm1874, %v3738, %v3527
      %v3771 = vsel %vm1874, %v3739, %v3529
      %v3772 = vsel %vm1874, %v3740, %v3531
      %v3773 = vsel %vm1874, %v3741, %v3533
      %v3774 = vsel %vm1874, %v3742, %v3535
      %v3775 = vsel %vm1874, %v3743, %v3537
      %v3776 = vsel %vm1874, %v3744, %v3539
      %v3777 = vsel %vm1874, %v3745, %v3541
      %v3778 = vsel %vm1874, %v3746, %v3543
      %v3779 = vsel %vm1874, %v3747, %v3545
      %v3780 = vsel %vm1874, %v3748, %v3547
      %v3781 = vsel %vm1874, %v3749, %v3549
      %v3782 = vsel %vm1874, %v3750, %v3551
      %v3783 = vsel %vm1874, %v3751, %v3553
      %v3784 = vsel %vm1874, %v3752, %v3555
      %v3785 = vsel %vm1874, %v3753, %v3557
      %v3786 = vsel %vm1874, %v3754, %v3559
      %v3787 = vsel %vm1874, %v3755, %v3561
      %v3788 = vsel %vm1874, %v3756, %v3563
      %v3789 = vsel %vm1874, %v3757, %v3565
      %v3790 = vld [vmem:[%s6] sm:$0xff]
      %v3791 = vld [vmem:[%s6 + $0x8] sm:$0xff]
      %v3792 = vld [vmem:[%s6 + $0x10] sm:$0xff]
      %v3793 = vld [vmem:[%s6 + $0x18] sm:$0xff]
      %v3794 = vld [vmem:[%s6 + $0x20] sm:$0xff]
      %v3795 = vld [vmem:[%s6 + $0x28] sm:$0xff]
      %v3796 = vld [vmem:[%s6 + $0x30] sm:$0xff]
      %v3797 = vld [vmem:[%s6 + $0x38] sm:$0xff]
      %v3798 = vld [vmem:[%s6 + $0x40] sm:$0xff]
      %v3799 = vld [vmem:[%s6 + $0x48] sm:$0xff]
      %v3800 = vld [vmem:[%s6 + $0x50] sm:$0xff]
      %v3801 = vld [vmem:[%s6 + $0x58] sm:$0xff]
      %v3802 = vld [vmem:[%s6 + $0x60] sm:$0xff]
      %v3803 = vld [vmem:[%s6 + $0x68] sm:$0xff]
      %v3804 = vld [vmem:[%s6 + $0x70] sm:$0xff]
      %v3805 = vld [vmem:[%s6 + $0x78] sm:$0xff]
      %v3806 = vld [vmem:[%s6 + $0x80] sm:$0xff]
      %v3807 = vld [vmem:[%s6 + $0x88] sm:$0xff]
      %v3808 = vld [vmem:[%s6 + $0x90] sm:$0xff]
      %v3809 = vld [vmem:[%s6 + $0x98] sm:$0xff]
      %v3810 = vld [vmem:[%s6 + $0xa0] sm:$0xff]
      %v3811 = vld [vmem:[%s6 + $0xa8] sm:$0xff]
      %v3812 = vld [vmem:[%s6 + $0xb0] sm:$0xff]
      %v3813 = vld [vmem:[%s6 + $0xb8] sm:$0xff]
      %v3814 = vld [vmem:[%s6 + $0xc0] sm:$0xff]
      %v3815 = vld [vmem:[%s6 + $0xc8] sm:$0xff]
      %v3816 = vld [vmem:[%s6 + $0xd0] sm:$0xff]
      %v3817 = vld [vmem:[%s6 + $0xd8] sm:$0xff]
      %v3818 = vld [vmem:[%s6 + $0xe0] sm:$0xff]
      %v3819 = vld [vmem:[%s6 + $0xe8] sm:$0xff]
      %v3820 = vld [vmem:[%s6 + $0xf0] sm:$0xff]
      %v3821 = vld [vmem:[%s6 + $0xf8] sm:$0xff]
      %v3822 = vld [vmem:[%s6 + $0x100] sm:$0xff]
      %v3823 = vld [vmem:[%s6 + $0x108] sm:$0xff]
      %v3824 = vld [vmem:[%s6 + $0x110] sm:$0xff]
      %v3825 = vld [vmem:[%s6 + $0x118] sm:$0xff]
      %v3826 = vld [vmem:[%s7] sm:$0x1]
      %v3828 = vperm.slane %v3826, 0
      %v3831 = vsel %vm380, %v2798, 0
      %v3834 = vsel %vm380, %v2799, 0
      %v3837 = vsel %vm380, %v2800, 0
      %v3840 = vsel %vm380, %v2801, 0
      %v3843 = vsel %vm380, %v2802, 0
      %v3846 = vsel %vm380, %v2803, 0
      %v3849 = vsel %vm380, %v2804, 0
      %v3852 = vsel %vm380, %v2805, 0
      %v3855 = vsel %vm380, %v2806, 0
      %v3858 = vsel %vm380, %v2807, 0
      %v3861 = vsel %vm380, %v2808, 0
      %v3864 = vsel %vm380, %v2809, 0
      %v3867 = vsel %vm380, %v2810, 0
      %v3870 = vsel %vm380, %v2811, 0
      %v3873 = vsel %vm380, %v2812, 0
      %v3876 = vsel %vm380, %v2813, 0
      %v3879 = vsel %vm380, %v2814, 0
      %v3882 = vsel %vm380, %v2815, 0
      %v3885 = vsel %vm380, %v2816, 0
      %v3888 = vsel %vm380, %v2817, 0
      %v3891 = vsel %vm380, %v2818, 0
      %v3894 = vsel %vm380, %v2819, 0
      %v3897 = vsel %vm380, %v2820, 0
      %v3900 = vsel %vm380, %v2821, 0
      %v3903 = vsel %vm380, %v2822, 0
      %v3906 = vsel %vm380, %v2823, 0
      %v3909 = vsel %vm380, %v2824, 0
      %v3912 = vsel %vm380, %v2825, 0
      %v3915 = vsel %vm380, %v2826, 0
      %v3918 = vsel %vm380, %v2827, 0
      %v3921 = vsel %vm380, %v2828, 0
      %v3924 = vsel %vm380, %v2829, 0
      %3926 = vmatpush.msra.mxu0 %v3805
      %3927 = vmatpush.msra.mxu0 %v3804
      %3928 = vmatpush.msra.mxu0 %v3803
      %3929 = vmatpush.msra.mxu0 %v3802
      %3930 = vmatpush.msra.mxu0 %v3801
      %3931 = vmatpush.msra.mxu0 %v3800
      %3932 = vmatpush.msra.mxu0 %v3799
      %3933 = vmatpush.msra.mxu0 %v3798
      %3934 = vmatpush.msra.mxu0 %v3797
      %3935 = vmatpush.msra.mxu0 %v3796
      %3936 = vmatpush.msra.mxu0 %v3795
      %3937 = vmatpush.msra.mxu0 %v3794
      %3938 = vmatpush.msra.mxu0 %v3793
      %3939 = vmatpush.msra.mxu0 %v3792
      %3940 = vmatpush.msra.mxu0 %v3791
      %3941 = vmatpush.msra.mxu0 %v3790
      %3942 = vmatmul.f32.gmra.mxu0 %v3662
      %v3943 = vpop.f32.mrf.mxu0
      %v3944 = vadd.f32 %v3828, %v3943
      %3945 = vmatmul.f32.gmra.mxu0 %v3663
      %v3946 = vpop.f32.mrf.mxu0
      %v3947 = vadd.f32 %v3828, %v3946
      %3948 = vmatmul.f32.gmra.mxu0 %v3664
      %v3949 = vpop.f32.mrf.mxu0
      %v3950 = vadd.f32 %v3828, %v3949
      %3951 = vmatmul.f32.gmra.mxu0 %v3665
      %v3952 = vpop.f32.mrf.mxu0
      %v3953 = vadd.f32 %v3828, %v3952
      %3954 = vmatmul.f32.gmra.mxu0 %v3666
      %v3955 = vpop.f32.mrf.mxu0
      %v3956 = vadd.f32 %v3828, %v3955
      %3957 = vmatmul.f32.gmra.mxu0 %v3667
      %v3958 = vpop.f32.mrf.mxu0
      %v3959 = vadd.f32 %v3828, %v3958
      %3960 = vmatmul.f32.gmra.mxu0 %v3668
      %v3961 = vpop.f32.mrf.mxu0
      %v3962 = vadd.f32 %v3828, %v3961
      %3963 = vmatmul.f32.gmra.mxu0 %v3669
      %v3964 = vpop.f32.mrf.mxu0
      %v3965 = vadd.f32 %v3828, %v3964
      %3966 = vmatmul.f32.gmra.mxu0 %v3670
      %v3967 = vpop.f32.mrf.mxu0
      %v3968 = vadd.f32 %v3828, %v3967
      %3969 = vmatmul.f32.gmra.mxu0 %v3671
      %v3970 = vpop.f32.mrf.mxu0
      %v3971 = vadd.f32 %v3828, %v3970
      %3972 = vmatmul.f32.gmra.mxu0 %v3672
      %v3973 = vpop.f32.mrf.mxu0
      %v3974 = vadd.f32 %v3828, %v3973
      %3975 = vmatmul.f32.gmra.mxu0 %v3673
      %v3976 = vpop.f32.mrf.mxu0
      %v3977 = vadd.f32 %v3828, %v3976
      %3978 = vmatmul.f32.gmra.mxu0 %v3674
      %v3979 = vpop.f32.mrf.mxu0
      %v3980 = vadd.f32 %v3828, %v3979
      %3981 = vmatmul.f32.gmra.mxu0 %v3675
      %v3982 = vpop.f32.mrf.mxu0
      %v3983 = vadd.f32 %v3828, %v3982
      %3984 = vmatmul.f32.gmra.mxu0 %v3676
      %v3985 = vpop.f32.mrf.mxu0
      %v3986 = vadd.f32 %v3828, %v3985
      %3987 = vmatmul.f32.gmra.mxu0 %v3677
      %v3988 = vpop.f32.mrf.mxu0
      %v3989 = vadd.f32 %v3828, %v3988
      %3990 = vmatmul.f32.gmra.mxu0 %v3678
      %v3991 = vpop.f32.mrf.mxu0
      %v3992 = vadd.f32 %v3828, %v3991
      %3993 = vmatmul.f32.gmra.mxu0 %v3679
      %v3994 = vpop.f32.mrf.mxu0
      %v3995 = vadd.f32 %v3828, %v3994
      %3996 = vmatmul.f32.gmra.mxu0 %v3680
      %v3997 = vpop.f32.mrf.mxu0
      %v3998 = vadd.f32 %v3828, %v3997
      %3999 = vmatmul.f32.gmra.mxu0 %v3681
      %v4000 = vpop.f32.mrf.mxu0
      %v4001 = vadd.f32 %v3828, %v4000
      %4002 = vmatmul.f32.gmra.mxu0 %v3682
      %v4003 = vpop.f32.mrf.mxu0
      %v4004 = vadd.f32 %v3828, %v4003
      %4005 = vmatmul.f32.gmra.mxu0 %v3683
      %v4006 = vpop.f32.mrf.mxu0
      %v4007 = vadd.f32 %v3828, %v4006
      %4008 = vmatmul.f32.gmra.mxu0 %v3684
      %v4009 = vpop.f32.mrf.mxu0
      %v4010 = vadd.f32 %v3828, %v4009
      %4011 = vmatmul.f32.gmra.mxu0 %v3685
      %v4012 = vpop.f32.mrf.mxu0
      %v4013 = vadd.f32 %v3828, %v4012
      %4014 = vmatmul.f32.gmra.mxu0 %v3686
      %v4015 = vpop.f32.mrf.mxu0
      %v4016 = vadd.f32 %v3828, %v4015
      %4017 = vmatmul.f32.gmra.mxu0 %v3687
      %v4018 = vpop.f32.mrf.mxu0
      %v4019 = vadd.f32 %v3828, %v4018
      %4020 = vmatmul.f32.gmra.mxu0 %v3688
      %v4021 = vpop.f32.mrf.mxu0
      %v4022 = vadd.f32 %v3828, %v4021
      %4023 = vmatmul.f32.gmra.mxu0 %v3689
      %v4024 = vpop.f32.mrf.mxu0
      %v4025 = vadd.f32 %v3828, %v4024
      %4026 = vmatmul.f32.gmra.mxu0 %v3690
      %v4027 = vpop.f32.mrf.mxu0
      %v4028 = vadd.f32 %v3828, %v4027
      %4029 = vmatmul.f32.gmra.mxu0 %v3691
      %v4030 = vpop.f32.mrf.mxu0
      %v4031 = vadd.f32 %v3828, %v4030
      %4032 = vmatmul.f32.gmra.mxu0 %v3692
      %v4033 = vpop.f32.mrf.mxu0
      %v4034 = vadd.f32 %v3828, %v4033
      %4035 = vmatmul.f32.gmra.mxu0 %v3693
      %v4036 = vpop.f32.mrf.mxu0
      %v4037 = vadd.f32 %v3828, %v4036
      %4038 = vdwg.mxu0
      %4039 = vmatpush.msra.mxu0 %v3821
      %4040 = vmatpush.msra.mxu0 %v3820
      %4041 = vmatpush.msra.mxu0 %v3819
      %4042 = vmatpush.msra.mxu0 %v3818
      %4043 = vmatpush.msra.mxu0 %v3817
      %4044 = vmatpush.msra.mxu0 %v3816
      %4045 = vmatpush.msra.mxu0 %v3815
      %4046 = vmatpush.msra.mxu0 %v3814
      %4047 = vmatpush.msra.mxu0 %v3813
      %4048 = vmatpush.msra.mxu0 %v3812
      %4049 = vmatpush.msra.mxu0 %v3811
      %4050 = vmatpush.msra.mxu0 %v3810
      %4051 = vmatpush.msra.mxu0 %v3809
      %4052 = vmatpush.msra.mxu0 %v3808
      %4053 = vmatpush.msra.mxu0 %v3807
      %4054 = vmatpush.msra.mxu0 %v3806
      %4055 = vmatmul.f32.gmra.mxu0 %v3758
      %v4056 = vpop.f32.mrf.mxu0
      %v4057 = vadd.f32 %v3944, %v4056
      %4058 = vmatmul.f32.gmra.mxu0 %v3759
      %v4059 = vpop.f32.mrf.mxu0
      %v4060 = vadd.f32 %v3947, %v4059
      %4061 = vmatmul.f32.gmra.mxu0 %v3760
      %v4062 = vpop.f32.mrf.mxu0
      %v4063 = vadd.f32 %v3950, %v4062
      %4064 = vmatmul.f32.gmra.mxu0 %v3761
      %v4065 = vpop.f32.mrf.mxu0
      %v4066 = vadd.f32 %v3953, %v4065
      %4067 = vmatmul.f32.gmra.mxu0 %v3762
      %v4068 = vpop.f32.mrf.mxu0
      %v4069 = vadd.f32 %v3956, %v4068
      %4070 = vmatmul.f32.gmra.mxu0 %v3763
      %v4071 = vpop.f32.mrf.mxu0
      %v4072 = vadd.f32 %v3959, %v4071
      %4073 = vmatmul.f32.gmra.mxu0 %v3764
      %v4074 = vpop.f32.mrf.mxu0
      %v4075 = vadd.f32 %v3962, %v4074
      %4076 = vmatmul.f32.gmra.mxu0 %v3765
      %v4077 = vpop.f32.mrf.mxu0
      %v4078 = vadd.f32 %v3965, %v4077
      %4079 = vmatmul.f32.gmra.mxu0 %v3766
      %v4080 = vpop.f32.mrf.mxu0
      %v4081 = vadd.f32 %v3968, %v4080
      %4082 = vmatmul.f32.gmra.mxu0 %v3767
      %v4083 = vpop.f32.mrf.mxu0
      %v4084 = vadd.f32 %v3971, %v4083
      %4085 = vmatmul.f32.gmra.mxu0 %v3768
      %v4086 = vpop.f32.mrf.mxu0
      %v4087 = vadd.f32 %v3974, %v4086
      %4088 = vmatmul.f32.gmra.mxu0 %v3769
      %v4089 = vpop.f32.mrf.mxu0
      %v4090 = vadd.f32 %v3977, %v4089
      %4091 = vmatmul.f32.gmra.mxu0 %v3770
      %v4092 = vpop.f32.mrf.mxu0
      %v4093 = vadd.f32 %v3980, %v4092
      %4094 = vmatmul.f32.gmra.mxu0 %v3771
      %v4095 = vpop.f32.mrf.mxu0
      %v4096 = vadd.f32 %v3983, %v4095
      %4097 = vmatmul.f32.gmra.mxu0 %v3772
      %v4098 = vpop.f32.mrf.mxu0
      %v4099 = vadd.f32 %v3986, %v4098
      %4100 = vmatmul.f32.gmra.mxu0 %v3773
      %v4101 = vpop.f32.mrf.mxu0
      %v4102 = vadd.f32 %v3989, %v4101
      %4103 = vmatmul.f32.gmra.mxu0 %v3774
      %v4104 = vpop.f32.mrf.mxu0
      %v4105 = vadd.f32 %v3992, %v4104
      %4106 = vmatmul.f32.gmra.mxu0 %v3775
      %v4107 = vpop.f32.mrf.mxu0
      %v4108 = vadd.f32 %v3995, %v4107
      %4109 = vmatmul.f32.gmra.mxu0 %v3776
      %v4110 = vpop.f32.mrf.mxu0
      %v4111 = vadd.f32 %v3998, %v4110
      %4112 = vmatmul.f32.gmra.mxu0 %v3777
      %v4113 = vpop.f32.mrf.mxu0
      %v4114 = vadd.f32 %v4001, %v4113
      %4115 = vmatmul.f32.gmra.mxu0 %v3778
      %v4116 = vpop.f32.mrf.mxu0
      %v4117 = vadd.f32 %v4004, %v4116
      %4118 = vmatmul.f32.gmra.mxu0 %v3779
      %v4119 = vpop.f32.mrf.mxu0
      %v4120 = vadd.f32 %v4007, %v4119
      %4121 = vmatmul.f32.gmra.mxu0 %v3780
      %v4122 = vpop.f32.mrf.mxu0
      %v4123 = vadd.f32 %v4010, %v4122
      %4124 = vmatmul.f32.gmra.mxu0 %v3781
      %v4125 = vpop.f32.mrf.mxu0
      %v4126 = vadd.f32 %v4013, %v4125
      %4127 = vmatmul.f32.gmra.mxu0 %v3782
      %v4128 = vpop.f32.mrf.mxu0
      %v4129 = vadd.f32 %v4016, %v4128
      %4130 = vmatmul.f32.gmra.mxu0 %v3783
      %v4131 = vpop.f32.mrf.mxu0
      %v4132 = vadd.f32 %v4019, %v4131
      %4133 = vmatmul.f32.gmra.mxu0 %v3784
      %v4134 = vpop.f32.mrf.mxu0
      %v4135 = vadd.f32 %v4022, %v4134
      %4136 = vmatmul.f32.gmra.mxu0 %v3785
      %v4137 = vpop.f32.mrf.mxu0
      %v4138 = vadd.f32 %v4025, %v4137
      %4139 = vmatmul.f32.gmra.mxu0 %v3786
      %v4140 = vpop.f32.mrf.mxu0
      %v4141 = vadd.f32 %v4028, %v4140
      %4142 = vmatmul.f32.gmra.mxu0 %v3787
      %v4143 = vpop.f32.mrf.mxu0
      %v4144 = vadd.f32 %v4031, %v4143
      %4145 = vmatmul.f32.gmra.mxu0 %v3788
      %v4146 = vpop.f32.mrf.mxu0
      %v4147 = vadd.f32 %v4034, %v4146
      %4148 = vmatmul.f32.gmra.mxu0 %v3789
      %v4149 = vpop.f32.mrf.mxu0
      %v4150 = vadd.f32 %v4037, %v4149
      %4151 = vdwg.mxu0
      %4152 = vmatpush.msra.mxu0 0.0
      %4153 = vmatpush.msra.mxu0 0.0
      %4154 = vmatpush.msra.mxu0 0.0
      %4155 = vmatpush.msra.mxu0 0.0
      %4156 = vmatpush.msra.mxu0 0.0
      %4157 = vmatpush.msra.mxu0 0.0
      %4158 = vmatpush.msra.mxu0 0.0
      %4159 = vmatpush.msra.mxu0 0.0
      %4160 = vmatpush.msra.mxu0 0.0
      %4161 = vmatpush.msra.mxu0 0.0
      %4162 = vmatpush.msra.mxu0 0.0
      %4163 = vmatpush.msra.mxu0 0.0
      %4164 = vmatpush.msra.mxu0 %v3825
      %4165 = vmatpush.msra.mxu0 %v3824
      %4166 = vmatpush.msra.mxu0 %v3823
      %4167 = vmatpush.msra.mxu0 %v3822
      %4168 = vmatmul.f32.gmra.mxu0 %v3831
      %v4169 = vpop.f32.mrf.mxu0
      %v4170 = vadd.f32 %v4057, %v4169
      %4171 = vmatmul.f32.gmra.mxu0 %v3834
      %v4172 = vpop.f32.mrf.mxu0
      %v4173 = vadd.f32 %v4060, %v4172
      %4174 = vmatmul.f32.gmra.mxu0 %v3837
      %v4175 = vpop.f32.mrf.mxu0
      %v4176 = vadd.f32 %v4063, %v4175
      %4177 = vmatmul.f32.gmra.mxu0 %v3840
      %v4178 = vpop.f32.mrf.mxu0
      %v4179 = vadd.f32 %v4066, %v4178
      %4180 = vmatmul.f32.gmra.mxu0 %v3843
      %v4181 = vpop.f32.mrf.mxu0
      %v4182 = vadd.f32 %v4069, %v4181
      %4183 = vmatmul.f32.gmra.mxu0 %v3846
      %v4184 = vpop.f32.mrf.mxu0
      %v4185 = vadd.f32 %v4072, %v4184
      %4186 = vmatmul.f32.gmra.mxu0 %v3849
      %v4187 = vpop.f32.mrf.mxu0
      %v4188 = vadd.f32 %v4075, %v4187
      %4189 = vmatmul.f32.gmra.mxu0 %v3852
      %v4190 = vpop.f32.mrf.mxu0
      %v4191 = vadd.f32 %v4078, %v4190
      %4192 = vmatmul.f32.gmra.mxu0 %v3855
      %v4193 = vpop.f32.mrf.mxu0
      %v4194 = vadd.f32 %v4081, %v4193
      %4195 = vmatmul.f32.gmra.mxu0 %v3858
      %v4196 = vpop.f32.mrf.mxu0
      %v4197 = vadd.f32 %v4084, %v4196
      %4198 = vmatmul.f32.gmra.mxu0 %v3861
      %v4199 = vpop.f32.mrf.mxu0
      %v4200 = vadd.f32 %v4087, %v4199
      %4201 = vmatmul.f32.gmra.mxu0 %v3864
      %v4202 = vpop.f32.mrf.mxu0
      %v4203 = vadd.f32 %v4090, %v4202
      %4204 = vmatmul.f32.gmra.mxu0 %v3867
      %v4205 = vpop.f32.mrf.mxu0
      %v4206 = vadd.f32 %v4093, %v4205
      %4207 = vmatmul.f32.gmra.mxu0 %v3870
      %v4208 = vpop.f32.mrf.mxu0
      %v4209 = vadd.f32 %v4096, %v4208
      %4210 = vmatmul.f32.gmra.mxu0 %v3873
      %v4211 = vpop.f32.mrf.mxu0
      %v4212 = vadd.f32 %v4099, %v4211
      %4213 = vmatmul.f32.gmra.mxu0 %v3876
      %v4214 = vpop.f32.mrf.mxu0
      %v4215 = vadd.f32 %v4102, %v4214
      %4216 = vmatmul.f32.gmra.mxu0 %v3879
      %v4217 = vpop.f32.mrf.mxu0
      %v4218 = vadd.f32 %v4105, %v4217
      %4219 = vmatmul.f32.gmra.mxu0 %v3882
      %v4220 = vpop.f32.mrf.mxu0
      %v4221 = vadd.f32 %v4108, %v4220
      %4222 = vmatmul.f32.gmra.mxu0 %v3885
      %v4223 = vpop.f32.mrf.mxu0
      %v4224 = vadd.f32 %v4111, %v4223
      %4225 = vmatmul.f32.gmra.mxu0 %v3888
      %v4226 = vpop.f32.mrf.mxu0
      %v4227 = vadd.f32 %v4114, %v4226
      %4228 = vmatmul.f32.gmra.mxu0 %v3891
      %v4229 = vpop.f32.mrf.mxu0
      %v4230 = vadd.f32 %v4117, %v4229
      %4231 = vmatmul.f32.gmra.mxu0 %v3894
      %v4232 = vpop.f32.mrf.mxu0
      %v4233 = vadd.f32 %v4120, %v4232
      %4234 = vmatmul.f32.gmra.mxu0 %v3897
      %v4235 = vpop.f32.mrf.mxu0
      %v4236 = vadd.f32 %v4123, %v4235
      %4237 = vmatmul.f32.gmra.mxu0 %v3900
      %v4238 = vpop.f32.mrf.mxu0
      %v4239 = vadd.f32 %v4126, %v4238
      %4240 = vmatmul.f32.gmra.mxu0 %v3903
      %v4241 = vpop.f32.mrf.mxu0
      %v4242 = vadd.f32 %v4129, %v4241
      %4243 = vmatmul.f32.gmra.mxu0 %v3906
      %v4244 = vpop.f32.mrf.mxu0
      %v4245 = vadd.f32 %v4132, %v4244
      %4246 = vmatmul.f32.gmra.mxu0 %v3909
      %v4247 = vpop.f32.mrf.mxu0
      %v4248 = vadd.f32 %v4135, %v4247
      %4249 = vmatmul.f32.gmra.mxu0 %v3912
      %v4250 = vpop.f32.mrf.mxu0
      %v4251 = vadd.f32 %v4138, %v4250
      %4252 = vmatmul.f32.gmra.mxu0 %v3915
      %v4253 = vpop.f32.mrf.mxu0
      %v4254 = vadd.f32 %v4141, %v4253
      %4255 = vmatmul.f32.gmra.mxu0 %v3918
      %v4256 = vpop.f32.mrf.mxu0
      %v4257 = vadd.f32 %v4144, %v4256
      %4258 = vmatmul.f32.gmra.mxu0 %v3921
      %v4259 = vpop.f32.mrf.mxu0
      %v4260 = vadd.f32 %v4147, %v4259
      %4261 = vmatmul.f32.gmra.mxu0 %v3924
      %v4262 = vpop.f32.mrf.mxu0
      %v4263 = vadd.f32 %v4150, %v4262
      %4264 = vdwg.mxu0
      %v4265 = vadd.f32 %v4170, %v687
      %v4266 = vadd.f32 %v4173, %v688
      %v4267 = vadd.f32 %v4176, %v689
      %v4268 = vadd.f32 %v4179, %v690
      %v4269 = vadd.f32 %v4182, %v691
      %v4270 = vadd.f32 %v4185, %v692
      %v4271 = vadd.f32 %v4188, %v693
      %v4272 = vadd.f32 %v4191, %v694
      %v4273 = vadd.f32 %v4194, %v695
      %v4274 = vadd.f32 %v4197, %v696
      %v4275 = vadd.f32 %v4200, %v697
      %v4276 = vadd.f32 %v4203, %v698
      %v4277 = vadd.f32 %v4206, %v699
      %v4278 = vadd.f32 %v4209, %v700
      %v4279 = vadd.f32 %v4212, %v701
      %v4280 = vadd.f32 %v4215, %v702
      %v4281 = vadd.f32 %v4218, %v703
      %v4282 = vadd.f32 %v4221, %v704
      %v4283 = vadd.f32 %v4224, %v705
      %v4284 = vadd.f32 %v4227, %v706
      %v4285 = vadd.f32 %v4230, %v707
      %v4286 = vadd.f32 %v4233, %v708
      %v4287 = vadd.f32 %v4236, %v709
      %v4288 = vadd.f32 %v4239, %v710
      %v4289 = vadd.f32 %v4242, %v711
      %v4290 = vadd.f32 %v4245, %v712
      %v4291 = vadd.f32 %v4248, %v713
      %v4292 = vadd.f32 %v4251, %v714
      %v4293 = vadd.f32 %v4254, %v715
      %v4294 = vadd.f32 %v4257, %v716
      %v4295 = vadd.f32 %v4260, %v717
      %v4296 = vadd.f32 %v4263, %v718
      %v4297 = vmax.f32 %v4265, 0.0
      %v4298 = vmax.f32 %v4266, 0.0
      %v4299 = vmax.f32 %v4267, 0.0
      %v4300 = vmax.f32 %v4268, 0.0
      %v4301 = vmax.f32 %v4269, 0.0
      %v4302 = vmax.f32 %v4270, 0.0
      %v4303 = vmax.f32 %v4271, 0.0
      %v4304 = vmax.f32 %v4272, 0.0
      %v4305 = vmax.f32 %v4273, 0.0
      %v4306 = vmax.f32 %v4274, 0.0
      %v4307 = vmax.f32 %v4275, 0.0
      %v4308 = vmax.f32 %v4276, 0.0
      %v4309 = vmax.f32 %v4277, 0.0
      %v4310 = vmax.f32 %v4278, 0.0
      %v4311 = vmax.f32 %v4279, 0.0
      %v4312 = vmax.f32 %v4280, 0.0
      %v4313 = vmax.f32 %v4281, 0.0
      %v4314 = vmax.f32 %v4282, 0.0
      %v4315 = vmax.f32 %v4283, 0.0
      %v4316 = vmax.f32 %v4284, 0.0
      %v4317 = vmax.f32 %v4285, 0.0
      %v4318 = vmax.f32 %v4286, 0.0
      %v4319 = vmax.f32 %v4287, 0.0
      %v4320 = vmax.f32 %v4288, 0.0
      %v4321 = vmax.f32 %v4289, 0.0
      %v4322 = vmax.f32 %v4290, 0.0
      %v4323 = vmax.f32 %v4291, 0.0
      %v4324 = vmax.f32 %v4292, 0.0
      %v4325 = vmax.f32 %v4293, 0.0
      %v4326 = vmax.f32 %v4294, 0.0
      %v4327 = vmax.f32 %v4295, 0.0
      %v4328 = vmax.f32 %v4296, 0.0
      %v4329 = vld [vmem:[%s8] sm:$0xf]
      %v4330 = vld [vmem:[%s9] sm:$0xf]
      %4332 = vset.pattern.permute.xlu0 0
      %4333 = vperm.xlu0 %4332, %v4330
      %v4334 = vpop.permute.xlu0 %4333
      %v4337 = vsel %vm380, %v4329, 0
      %v4340 = vsel %vm380, %v4297, 0
      %v4343 = vsel %vm380, %v4298, 0
      %v4346 = vsel %vm380, %v4299, 0
      %v4349 = vsel %vm380, %v4300, 0
      %v4352 = vsel %vm380, %v4301, 0
      %v4355 = vsel %vm380, %v4302, 0
      %v4358 = vsel %vm380, %v4303, 0
      %v4361 = vsel %vm380, %v4304, 0
      %v4364 = vsel %vm380, %v4305, 0
      %v4367 = vsel %vm380, %v4306, 0
      %v4370 = vsel %vm380, %v4307, 0
      %v4373 = vsel %vm380, %v4308, 0
      %v4376 = vsel %vm380, %v4309, 0
      %v4379 = vsel %vm380, %v4310, 0
      %v4382 = vsel %vm380, %v4311, 0
      %v4385 = vsel %vm380, %v4312, 0
      %v4388 = vsel %vm380, %v4313, 0
      %v4391 = vsel %vm380, %v4314, 0
      %v4394 = vsel %vm380, %v4315, 0
      %v4397 = vsel %vm380, %v4316, 0
      %v4400 = vsel %vm380, %v4317, 0
      %v4403 = vsel %vm380, %v4318, 0
      %v4406 = vsel %vm380, %v4319, 0
      %v4409 = vsel %vm380, %v4320, 0
      %v4412 = vsel %vm380, %v4321, 0
      %v4415 = vsel %vm380, %v4322, 0
      %v4418 = vsel %vm380, %v4323, 0
      %v4421 = vsel %vm380, %v4324, 0
      %v4424 = vsel %vm380, %v4325, 0
      %v4427 = vsel %vm380, %v4326, 0
      %v4430 = vsel %vm380, %v4327, 0
      %v4433 = vsel %vm380, %v4328, 0
      %4435 = vmatpush.xpose.msra.mxu0 %v4385
      %4436 = vmatpush.xpose.msra.mxu0 %v4382
      %4437 = vmatpush.xpose.msra.mxu0 %v4379
      %4438 = vmatpush.xpose.msra.mxu0 %v4376
      %4439 = vmatpush.xpose.msra.mxu0 %v4373
      %4440 = vmatpush.xpose.msra.mxu0 %v4370
      %4441 = vmatpush.xpose.msra.mxu0 %v4367
      %4442 = vmatpush.xpose.msra.mxu0 %v4364
      %4443 = vmatpush.xpose.msra.mxu0 %v4361
      %4444 = vmatpush.xpose.msra.mxu0 %v4358
      %4445 = vmatpush.xpose.msra.mxu0 %v4355
      %4446 = vmatpush.xpose.msra.mxu0 %v4352
      %4447 = vmatpush.xpose.msra.mxu0 %v4349
      %4448 = vmatpush.xpose.msra.mxu0 %v4346
      %4449 = vmatpush.xpose.msra.mxu0 %v4343
      %4450 = vmatpush.xpose.msra.mxu0 %v4340
      %4451 = vmatmul.f32.gmra.mxu0 %v4337
      %v4452 = vpop.f32.mrf.mxu0
      %v4453 = vadd.f32 %v4334, %v4452
      %4454 = vdwg.mxu0
      %4455 = vmatpush.xpose.msra.mxu0 %v4433
      %4456 = vmatpush.xpose.msra.mxu0 %v4430
      %4457 = vmatpush.xpose.msra.mxu0 %v4427
      %4458 = vmatpush.xpose.msra.mxu0 %v4424
      %4459 = vmatpush.xpose.msra.mxu0 %v4421
      %4460 = vmatpush.xpose.msra.mxu0 %v4418
      %4461 = vmatpush.xpose.msra.mxu0 %v4415
      %4462 = vmatpush.xpose.msra.mxu0 %v4412
      %4463 = vmatpush.xpose.msra.mxu0 %v4409
      %4464 = vmatpush.xpose.msra.mxu0 %v4406
      %4465 = vmatpush.xpose.msra.mxu0 %v4403
      %4466 = vmatpush.xpose.msra.mxu0 %v4400
      %4467 = vmatpush.xpose.msra.mxu0 %v4397
      %4468 = vmatpush.xpose.msra.mxu0 %v4394
      %4469 = vmatpush.xpose.msra.mxu0 %v4391
      %4470 = vmatpush.xpose.msra.mxu0 %v4388
      %4471 = vmatmul.f32.gmra.mxu0 %v4337
      %v4472 = vpop.f32.mrf.mxu0
      %v4473 = vadd.f32 %v4334, %v4472
      %4474 = vdwg.mxu0
      %v4475 = vld [vmem:[%s374] sm:$0xff]
      %4477 = vst [vmem:[#allocation1] ss:$2 sm:$0xff] %v4475
      %v4478 = vld.sshfl [vmem:[#allocation1] sm:$0xff pattern:$0x75316420]
      %v4479 = vld.sshfl [vmem:[#allocation1 + $0x8] sm:$0xff pattern:$0x75316420]
      %v4482 = vadd.f32 %v4453, %v4478
      %v4483 = vadd.f32 %v4473, %v4479
      %v4486 = vrot.slane %v4483, 4
      %v4487 = vsel %vm570, %v4482, %v4486
      %4489 = vst [vmem:[%s379] sm:$0xff] %v4487
      %p4490 = scmp.lt.s32.totalorder %s21, 1
      %s4491 = scalar_select %p4490, %s21, 1
      %s4492 = smul.addr %s4491, 2
      %s4493 = smul.addr %s4492, 4
      %s4494 = scalar_lea.vmem %s10, %s4493
      // Predicated region
      $region61: #{crop_type_final.1} parent=59 // pred_check
        %p4495 = pneg %p259
      $region62: #{crop_type_final.1} parent=59 // pred_check_branch
        %4497 = sbr.rel (%p4495) target = $region64
      $region63: #{crop_type_final.1} parent=59 // pred_region
        _
      $region64: #{crop_type_final.1} parent=59 // pred_fallthru
        _
    $region60: #{crop_type_final.1} parent=5 // pred_fallthru
      _
    %p4498 = scmp.le.s32.totalorder 2, %s16
    // Predicated region
    $region65: #{crop_type_final.1} parent=5 // pred_check
      %p4499 = pneg %p4498
    $region66: #{crop_type_final.1} parent=5 // pred_check_branch
      %4501 = sbr.rel (%p4499) target = $region68
    $region67: #{crop_type_final.1} parent=5 // pred_region
      %s4502 = ssub.s32 %s16, 2
      // Predicated region
      $region69: #{crop_type_final.1} parent=67 // pred_check
        %p4503 = pneg %p265
      $region70: #{crop_type_final.1} parent=67 // pred_check_branch
        %4505 = sbr.rel (%p4503) target = $region72
      $region71: #{crop_type_final.1} parent=67 // pred_region
        %p4506 = scmp.lt.s32.totalorder %s22, 1
        %s4507 = scalar_select %p4506, %s22, 1
        %s4508 = smul.addr %s4507, 2
        %s4509 = smul.addr %s4508, 4
        %s4510 = scalar_lea.vmem %s10, %s4509
      $region72: #{crop_type_final.1} parent=67 // pred_fallthru
        _
    $region68: #{crop_type_final.1} parent=5 // pred_fallthru
      _
  $region6: #{crop_type_final.1} parent=0 // loop_footer
    %s20 = sadd.s32 1, %s16
  $region7: #{crop_type_final.1} parent=0 // loop_footer_branch
    %15 = sbr.rel target = $region3
  $region8: #{crop_type_final.1} parent=0 // loop_exit
    _

</llo_original>
